<compile_context>
chip_gen: v7x
topology: tpu7x:2x2x1
jax: 0.10.0
libtpu: 0.0.40
codegen_flags: <defaults>
</compile_context>

<pallas_src>
import jax
import jax.numpy as jnp
from jax.experimental import pallas as pl
from jax.experimental.pallas import tpu as pltpu

FEAT_DIM = 768    # fixed by the module (reshape(-1, 768))
N_HID = 1024      # HGNN(..., n_hid=1024)
N_CLASS = 128     # output_dim (lane-friendly)


# ---------------------------------------------------------------------------
# Fused kernel: adjacency + 2nd-argmax + pseudo-feature gather + 2x HGNN_conv
# ---------------------------------------------------------------------------
def _fused_kernel(x_ref, w1_ref, b1_ref, w2_ref, b2_ref, out_ref, pseudo_ref):
    x = x_ref[...]                                              # (Fn, D) f32
    fn = x.shape[0]

    # --- adjacency over image nodes (== adj[:Fn,:Fn] of the full cdist) -----
    gram = jax.lax.dot_general(                                 # (Fn, Fn) f32 MXU
        x, x, (((1,), (1,)), ((), ())),
        preferred_element_type=jnp.float32)
    row_i = jax.lax.broadcasted_iota(jnp.int32, (fn, fn), 0)
    col_i = jax.lax.broadcasted_iota(jnp.int32, (fn, fn), 1)
    diag = jnp.where(row_i == col_i, gram, 0.0)                 # ||x_i||^2 on diag
    sq_col = jnp.sum(diag, axis=1, keepdims=True)               # (Fn, 1)
    sq_row = jnp.sum(diag, axis=0, keepdims=True)               # (1, Fn) (no transpose)
    d2 = jnp.maximum(sq_col + sq_row - 2.0 * gram, 0.0)
    dist = jnp.sqrt(d2)                                         # torch.cdist(p=2)
    g = 1.0 / (1.0 + dist)                                      # score_map == G (exact)

    # --- per-row index of 2nd-largest adj == 2nd-smallest dist --------------
    m1 = jnp.min(dist, axis=1, keepdims=True)                   # == 0 (diagonal)
    idx1 = jnp.min(jnp.where(dist == m1, col_i, fn), axis=1, keepdims=True)
    masked = jnp.where(col_i == idx1, jnp.inf, dist)
    m2 = jnp.min(masked, axis=1, keepdims=True)
    idx2 = jnp.min(jnp.where(masked == m2, col_i, fn), axis=1, keepdims=True)  # (Fn,1)

    # --- pseudo_features = x[idx2]  (one-hot matmul on the MXU) -------------
    one_hot = (col_i == idx2).astype(jnp.float32)               # (Fn, Fn)
    pseudo_ref[...] = jnp.dot(one_hot, x, preferred_element_type=jnp.float32)

    # --- HGNN: out = G @ (relu(G @ (X@W1 + b1)) @ W2 + b2) ------------------
    xb = x.astype(jnp.bfloat16)
    xw1 = jnp.dot(xb, w1_ref[...], preferred_element_type=jnp.float32) + b1_ref[...]
    h1 = jnp.maximum(jnp.dot(g, xw1, preferred_element_type=jnp.float32), 0.0)
    # TODO(synk): F.dropout(p=0.2) between HGNN layers omitted (stochastic; inference semantics)
    xw2 = jnp.dot(h1.astype(jnp.bfloat16), w2_ref[...],
                  preferred_element_type=jnp.float32) + b2_ref[...]
    out_ref[...] = jnp.dot(g, xw2, preferred_element_type=jnp.float32)


def fused_forward(x, w1_bf16, b1, w2_bf16, b2):
    fn, d = x.shape
    n_hid = w1_bf16.shape[1]
    n_class = w2_bf16.shape[1]

    flops = (2 * fn * fn * d          # gram
             + 2 * fn * fn * d        # one-hot gather matmul
             + 2 * fn * d * n_hid     # X @ W1
             + 2 * fn * fn * n_hid    # G @ (.)
             + 2 * fn * n_hid * n_class   # h1 @ W2
             + 2 * fn * fn * n_class)     # G @ (.)
    bytes_accessed = (4 * fn * d + 2 * d * n_hid + 4 * n_hid
                      + 2 * n_hid * n_class + 4 * n_class
                      + 4 * fn * n_class + 4 * fn * d)

    return pl.pallas_call(
        _fused_kernel,
        out_shape=(jax.ShapeDtypeStruct((fn, n_class), jnp.float32),
                   jax.ShapeDtypeStruct((fn, d), jnp.float32)),
        grid=(1,),
        in_specs=[
            pl.BlockSpec((fn, d), lambda i: (0, 0)),
            pl.BlockSpec((d, n_hid), lambda i: (0, 0)),
            pl.BlockSpec((1, n_hid), lambda i: (0, 0)),
            pl.BlockSpec((n_hid, n_class), lambda i: (0, 0)),
            pl.BlockSpec((1, n_class), lambda i: (0, 0)),
        ],
        out_specs=(pl.BlockSpec((fn, n_class), lambda i: (0, 0)),
                   pl.BlockSpec((fn, d), lambda i: (0, 0))),
        compiler_params=pltpu.CompilerParams(
            dimension_semantics=("arbitrary",)),
        cost_estimate=pl.CostEstimate(flops=flops,
                                      transcendentals=2 * fn * fn,
                                      bytes_accessed=bytes_accessed),
    )(x, w1_bf16, b1, w2_bf16, b2)


# ---------------------------------------------------------------------------
# Parameter init (mirrors HGNN_conv.reset_parameters: U(-1/sqrt(out), 1/sqrt(out)))
# ---------------------------------------------------------------------------
def init_hgnn_params(key, in_ch, n_hid, n_class):
    k1, k2, k3, k4 = jax.random.split(key, 4)
    s1 = 1.0 / float(n_hid) ** 0.5
    s2 = 1.0 / float(n_class) ** 0.5
    return {
        "W1": jax.random.uniform(k1, (in_ch, n_hid), jnp.float32, -s1, s1),
        "b1": jax.random.uniform(k2, (1, n_hid), jnp.float32, -s1, s1),
        "W2": jax.random.uniform(k3, (n_hid, n_class), jnp.float32, -s2, s2),
        "b2": jax.random.uniform(k4, (1, n_class), jnp.float32, -s2, s2),
    }


# ---------------------------------------------------------------------------
# Full forward (adj_type='dist' path, as in the PyTorch default)
# ---------------------------------------------------------------------------
def hyper_domain_fusion_forward(image_feature, bank, params):
    feature_number = image_feature.shape[1]                      # torch: shape[1]
    img_flat = image_feature.reshape(-1, FEAT_DIM)
    # nodes = concat(img_flat, bank_flat); only nodes[:Fn] ever affects the
    # outputs in the 'dist' path (score_map slice + idx2 < Fn), so the bank
    # rows are never touched — identical semantics, no dead compute.
    del bank
    x = img_flat[:feature_number]                                # (Fn, 768)

    out, pseudo_features = fused_forward(
        x,
        params["W1"].astype(jnp.bfloat16), params["b1"],
        params["W2"].astype(jnp.bfloat16), params["b2"])
    return out, pseudo_features


# ---------------------------------------------------------------------------
# Pure-JAX reference (same bf16 weight casts) for a correctness sanity check
# ---------------------------------------------------------------------------
def _reference(x, w1_bf16, b1, w2_bf16, b2):
    diff = x[:, None, :] - x[None, :, :]
    dist = jnp.sqrt(jnp.maximum(jnp.sum(diff * diff, axis=-1), 0.0))
    adj = 1.0 / (1.0 + dist)
    idx2 = jnp.argsort(-adj, axis=1)[:, 1]
    pseudo = x[idx2]
    g = adj
    xw1 = jnp.dot(x.astype(jnp.bfloat16), w1_bf16,
                  preferred_element_type=jnp.float32) + b1
    h1 = jnp.maximum(g @ xw1, 0.0)
    xw2 = jnp.dot(h1.astype(jnp.bfloat16), w2_bf16,
                  preferred_element_type=jnp.float32) + b2
    return g @ xw2, pseudo


if __name__ == "__main__":
    key = jax.random.PRNGKey(0)
    k_img, k_bank, k_par = jax.random.split(key, 3)

    # Small shapes consistent with the module: feature dim fixed at 768.
    image_feature = jax.random.normal(k_img, (1, 16, FEAT_DIM), jnp.float32)
    bank = jax.random.normal(k_bank, (16, FEAT_DIM), jnp.float32)
    params = init_hgnn_params(k_par, FEAT_DIM, N_HID, N_CLASS)

    out, pseudo = hyper_domain_fusion_forward(image_feature, bank, params)
    jax.block_until_ready((out, pseudo))

    fn = image_feature.shape[1]
    assert out.shape == (fn, N_CLASS)
    assert pseudo.shape == (fn, FEAT_DIM)

    # Sanity check against a pure-JAX reference (tolerances account for the
    # gram-expansion distance path and bf16 MXU operands on both sides).
    x_ref = image_feature.reshape(-1, FEAT_DIM)[:fn]
    ref_out, ref_pseudo = _reference(
        x_ref, params["W1"].astype(jnp.bfloat16), params["b1"],
        params["W2"].astype(jnp.bfloat16), params["b2"])
    assert bool(jnp.all(jnp.isfinite(out)))
    # A wrong gathered row would differ by O(1); 1e-2 tolerance only absorbs
    # matmul rounding, not index errors.
    assert bool(jnp.allclose(pseudo, ref_pseudo, rtol=1e-2, atol=1e-2))
    assert bool(jnp.allclose(out, ref_out, rtol=5e-2, atol=5e-2))

    print("KERNEL_OK")
</pallas_src>

<mosaic_0001>
module attributes {stable_mosaic.version = 11 : i64} {
  func.func @_fused_kernel(%arg0: i32, %arg1: memref<16x768xf32, #tpu.memory_space<vmem>>, %arg2: memref<768x1024xbf16, #tpu.memory_space<vmem>>, %arg3: memref<1x1024xf32, #tpu.memory_space<vmem>>, %arg4: memref<1024x128xbf16, #tpu.memory_space<vmem>>, %arg5: memref<1x128xf32, #tpu.memory_space<vmem>>, %arg6: memref<16x128xf32, #tpu.memory_space<vmem>>, %arg7: memref<16x768xf32, #tpu.memory_space<vmem>>) attributes {dimension_semantics = [#tpu.dimension_semantics<arbitrary>], iteration_bounds = array<i64: 1>, scalar_prefetch = 0 : i64, scratch_operands = 0 : i64, tpu.core_type = #tpu.core_type<tc>, window_params = [{pipeline_mode = #tpu.pipeline_mode<synchronous>, transform_indices = @transform_0, window_bounds = array<i64: 16, 768>}, {pipeline_mode = #tpu.pipeline_mode<synchronous>, transform_indices = @transform_1, window_bounds = array<i64: 768, 1024>}, {pipeline_mode = #tpu.pipeline_mode<synchronous>, transform_indices = @transform_2, window_bounds = array<i64: 1, 1024>}, {pipeline_mode = #tpu.pipeline_mode<synchronous>, transform_indices = @transform_3, window_bounds = array<i64: 1024, 128>}, {pipeline_mode = #tpu.pipeline_mode<synchronous>, transform_indices = @transform_4, window_bounds = array<i64: 1, 128>}, {pipeline_mode = #tpu.pipeline_mode<synchronous>, transform_indices = @transform_5, window_bounds = array<i64: 16, 128>}, {pipeline_mode = #tpu.pipeline_mode<synchronous>, transform_indices = @transform_6, window_bounds = array<i64: 16, 768>}]} {
    %c0 = arith.constant 0 : index
    %c0_0 = arith.constant 0 : index
    %0 = vector.load %arg1[%c0, %c0_0] : memref<16x768xf32, #tpu.memory_space<vmem>>, vector<16x768xf32>
    %cst = arith.constant dense<0.000000e+00> : vector<16x16xf32>
    %1 = tpu.matmul %0, %0, %cst {dimension_numbers = #tpu.dot_dimension_numbers<[1], [1], [0], [0], [0, 0, 1, 0], [], []>} : vector<16x768xf32>, vector<16x768xf32>, vector<16x16xf32> -> vector<16x16xf32>
    %2 = tpu.iota {dimensions = array<i32: 0>} : vector<16x16xi32>
    %3 = tpu.iota {dimensions = array<i32: 1>} : vector<16x16xi32>
    %4 = arith.cmpi eq, %2, %3 : vector<16x16xi32>
    %cst_1 = arith.constant 0.000000e+00 : f32
    %5 = vector.broadcast %cst_1 : f32 to vector<16x16xf32>
    %6 = arith.select %4, %1, %5 : vector<16x16xi1>, vector<16x16xf32>
    %cst_2 = arith.constant dense<0.000000e+00> : vector<16xf32>
    %7 = vector.multi_reduction <add>, %6, %cst_2 [1] : vector<16x16xf32> to vector<16xf32>
    %8 = vector.shape_cast %7 : vector<16xf32> to vector<16x1xf32>
    %cst_3 = arith.constant dense<0.000000e+00> : vector<16xf32>
    %9 = vector.multi_reduction <add>, %6, %cst_3 [0] : vector<16x16xf32> to vector<16xf32>
    %10 = vector.shape_cast %9 : vector<16xf32> to vector<1x16xf32>
    %11 = vector.broadcast %8 : vector<16x1xf32> to vector<16x16xf32>
    %12 = vector.broadcast %10 : vector<1x16xf32> to vector<16x16xf32>
    %13 = arith.addf %11, %12 : vector<16x16xf32>
    %cst_4 = arith.constant 2.000000e+00 : f32
    %14 = vector.broadcast %cst_4 : f32 to vector<16x16xf32>
    %15 = arith.mulf %14, %1 : vector<16x16xf32>
    %16 = arith.subf %13, %15 : vector<16x16xf32>
    %cst_5 = arith.constant 0.000000e+00 : f32
    %17 = vector.broadcast %cst_5 : f32 to vector<16x16xf32>
    %18 = arith.maximumf %16, %17 : vector<16x16xf32>
    %19 = math.sqrt %18 : vector<16x16xf32>
    %cst_6 = arith.constant 1.000000e+00 : f32
    %20 = vector.broadcast %cst_6 : f32 to vector<16x16xf32>
    %21 = arith.addf %20, %19 : vector<16x16xf32>
    %cst_7 = arith.constant 1.000000e+00 : f32
    %22 = vector.broadcast %cst_7 : f32 to vector<16x16xf32>
    %23 = arith.divf %22, %21 : vector<16x16xf32>
    %cst_8 = arith.constant dense<0x7F800000> : vector<16xf32>
    %24 = vector.multi_reduction <minimumf>, %19, %cst_8 [1] : vector<16x16xf32> to vector<16xf32>
    %25 = vector.shape_cast %24 : vector<16xf32> to vector<16x1xf32>
    %26 = vector.broadcast %25 : vector<16x1xf32> to vector<16x16xf32>
    %27 = arith.cmpf oeq, %19, %26 : vector<16x16xf32>
    %c16_i32 = arith.constant 16 : i32
    %28 = vector.broadcast %c16_i32 : i32 to vector<16x16xi32>
    %29 = arith.select %27, %3, %28 : vector<16x16xi1>, vector<16x16xi32>
    %cst_9 = arith.constant dense<2147483647> : vector<16xi32>
    %30 = vector.multi_reduction <minsi>, %29, %cst_9 [1] : vector<16x16xi32> to vector<16xi32>
    %31 = vector.shape_cast %30 : vector<16xi32> to vector<16x1xi32>
    %32 = vector.broadcast %31 : vector<16x1xi32> to vector<16x16xi32>
    %33 = arith.cmpi eq, %3, %32 : vector<16x16xi32>
    %cst_10 = arith.constant 0x7F800000 : f32
    %34 = vector.broadcast %cst_10 : f32 to vector<16x16xf32>
    %35 = arith.select %33, %34, %19 : vector<16x16xi1>, vector<16x16xf32>
    %cst_11 = arith.constant dense<0x7F800000> : vector<16xf32>
    %36 = vector.multi_reduction <minimumf>, %35, %cst_11 [1] : vector<16x16xf32> to vector<16xf32>
    %37 = vector.shape_cast %36 : vector<16xf32> to vector<16x1xf32>
    %38 = vector.broadcast %37 : vector<16x1xf32> to vector<16x16xf32>
    %39 = arith.cmpf oeq, %35, %38 : vector<16x16xf32>
    %c16_i32_12 = arith.constant 16 : i32
    %40 = vector.broadcast %c16_i32_12 : i32 to vector<16x16xi32>
    %41 = arith.select %39, %3, %40 : vector<16x16xi1>, vector<16x16xi32>
    %cst_13 = arith.constant dense<2147483647> : vector<16xi32>
    %42 = vector.multi_reduction <minsi>, %41, %cst_13 [1] : vector<16x16xi32> to vector<16xi32>
    %43 = vector.shape_cast %42 : vector<16xi32> to vector<16x1xi32>
    %44 = vector.broadcast %43 : vector<16x1xi32> to vector<16x16xi32>
    %45 = arith.cmpi eq, %3, %44 : vector<16x16xi32>
    %46 = arith.extui %45 : vector<16x16xi1> to vector<16x16xi32>
    %47 = arith.sitofp %46 : vector<16x16xi32> to vector<16x16xf32>
    %cst_14 = arith.constant dense<0.000000e+00> : vector<16x768xf32>
    %48 = tpu.matmul %47, %0, %cst_14 {dimension_numbers = #tpu.dot_dimension_numbers<[1], [0], [0], [1], [0, 0, 1, 1], [], []>} : vector<16x16xf32>, vector<16x768xf32>, vector<16x768xf32> -> vector<16x768xf32>
    %c0_15 = arith.constant 0 : index
    %c0_16 = arith.constant 0 : index
    %49 = vector.load %arg7[%c0_15, %c0_16] : memref<16x768xf32, #tpu.memory_space<vmem>>, vector<16x768xf32>
    tpu.vector_store %arg7[%c0_15, %c0_16], %48 {strides = array<i32>} : memref<16x768xf32, #tpu.memory_space<vmem>>, vector<16x768xf32>,
    %50 = arith.truncf %0 : vector<16x768xf32> to vector<16x768xbf16>
    %c0_17 = arith.constant 0 : index
    %c0_18 = arith.constant 0 : index
    %51 = vector.load %arg2[%c0_17, %c0_18] : memref<768x1024xbf16, #tpu.memory_space<vmem>>, vector<768x1024xbf16>
    %cst_19 = arith.constant dense<0.000000e+00> : vector<16x1024xf32>
    %52 = tpu.matmul %50, %51, %cst_19 {dimension_numbers = #tpu.dot_dimension_numbers<[1], [0], [0], [1], [0, 0, 1, 1], [], []>} : vector<16x768xbf16>, vector<768x1024xbf16>, vector<16x1024xf32> -> vector<16x1024xf32>
    %c0_20 = arith.constant 0 : index
    %c0_21 = arith.constant 0 : index
    %53 = vector.load %arg3[%c0_20, %c0_21] : memref<1x1024xf32, #tpu.memory_space<vmem>>, vector<1x1024xf32>
    %54 = vector.broadcast %53 : vector<1x1024xf32> to vector<16x1024xf32>
    %55 = arith.addf %52, %54 : vector<16x1024xf32>
    %cst_22 = arith.constant dense<0.000000e+00> : vector<16x1024xf32>
    %56 = tpu.matmul %23, %55, %cst_22 {dimension_numbers = #tpu.dot_dimension_numbers<[1], [0], [0], [1], [0, 0, 1, 1], [], []>} : vector<16x16xf32>, vector<16x1024xf32>, vector<16x1024xf32> -> vector<16x1024xf32>
    %cst_23 = arith.constant 0.000000e+00 : f32
    %57 = vector.broadcast %cst_23 : f32 to vector<16x1024xf32>
    %58 = arith.maximumf %56, %57 : vector<16x1024xf32>
    %59 = arith.truncf %58 : vector<16x1024xf32> to vector<16x1024xbf16>
    %c0_24 = arith.constant 0 : index
    %c0_25 = arith.constant 0 : index
    %60 = vector.load %arg4[%c0_24, %c0_25] : memref<1024x128xbf16, #tpu.memory_space<vmem>>, vector<1024x128xbf16>
    %cst_26 = arith.constant dense<0.000000e+00> : vector<16x128xf32>
    %61 = tpu.matmul %59, %60, %cst_26 {dimension_numbers = #tpu.dot_dimension_numbers<[1], [0], [0], [1], [0, 0, 1, 1], [], []>} : vector<16x1024xbf16>, vector<1024x128xbf16>, vector<16x128xf32> -> vector<16x128xf32>
    %c0_27 = arith.constant 0 : index
    %c0_28 = arith.constant 0 : index
    %62 = vector.load %arg5[%c0_27, %c0_28] : memref<1x128xf32, #tpu.memory_space<vmem>>, vector<1x128xf32>
    %63 = vector.broadcast %62 : vector<1x128xf32> to vector<16x128xf32>
    %64 = arith.addf %61, %63 : vector<16x128xf32>
    %cst_29 = arith.constant dense<0.000000e+00> : vector<16x128xf32>
    %65 = tpu.matmul %23, %64, %cst_29 {dimension_numbers = #tpu.dot_dimension_numbers<[1], [0], [0], [1], [0, 0, 1, 1], [], []>} : vector<16x16xf32>, vector<16x128xf32>, vector<16x128xf32> -> vector<16x128xf32>
    %c0_30 = arith.constant 0 : index
    %c0_31 = arith.constant 0 : index
    %66 = vector.load %arg6[%c0_30, %c0_31] : memref<16x128xf32, #tpu.memory_space<vmem>>, vector<16x128xf32>
    tpu.vector_store %arg6[%c0_30, %c0_31], %65 {strides = array<i32>} : memref<16x128xf32, #tpu.memory_space<vmem>>, vector<16x128xf32>,
    return
  }
  func.func @transform_0(%arg0: i32) -> (i32, i32) {
    %c0_i32 = arith.constant 0 : i32
    %c0_i32_0 = arith.constant 0 : i32
    %c0_i32_1 = arith.constant 0 : i32
    return %c0_i32, %c0_i32_0 : i32, i32
  }
  func.func @transform_1(%arg0: i32) -> (i32, i32) {
    %c0_i32 = arith.constant 0 : i32
    %c0_i32_0 = arith.constant 0 : i32
    %c0_i32_1 = arith.constant 0 : i32
    return %c0_i32, %c0_i32_0 : i32, i32
  }
  func.func @transform_2(%arg0: i32) -> (i32, i32) {
    %c0_i32 = arith.constant 0 : i32
    %c0_i32_0 = arith.constant 0 : i32
    %c0_i32_1 = arith.constant 0 : i32
    return %c0_i32, %c0_i32_0 : i32, i32
  }
  func.func @transform_3(%arg0: i32) -> (i32, i32) {
    %c0_i32 = arith.constant 0 : i32
    %c0_i32_0 = arith.constant 0 : i32
    %c0_i32_1 = arith.constant 0 : i32
    return %c0_i32, %c0_i32_0 : i32, i32
  }
  func.func @transform_4(%arg0: i32) -> (i32, i32) {
    %c0_i32 = arith.constant 0 : i32
    %c0_i32_0 = arith.constant 0 : i32
    %c0_i32_1 = arith.constant 0 : i32
    return %c0_i32, %c0_i32_0 : i32, i32
  }
  func.func @transform_5(%arg0: i32) -> (i32, i32) {
    %c0_i32 = arith.constant 0 : i32
    %c0_i32_0 = arith.constant 0 : i32
    %c0_i32_1 = arith.constant 0 : i32
    return %c0_i32, %c0_i32_0 : i32, i32
  }
  func.func @transform_6(%arg0: i32) -> (i32, i32) {
    %c0_i32 = arith.constant 0 : i32
    %c0_i32_0 = arith.constant 0 : i32
    %c0_i32_1 = arith.constant 0 : i32
    return %c0_i32, %c0_i32_0 : i32, i32
  }
}

</mosaic_0001>

<llo_original>
// kernel: tpu_custom_call.1
$region0: #{tpu_custom_call.1}
  #allocation0 [shape = 'u32[]', space=smem, size = 0x4, offset = 0x4, fixed_abs, tag = 'smem constant byte address 0x4 - core index']
  #allocation1 [shape = 'u32[144,128]{1,0:T(1,128)}', space=vmem, size = 0x12000, scoped, tag = 'internal scratch']
  %s0 = inlined_call_operand.hbm [shape: f32[16,768], index: 0, kind: input, shape index: {}]
  %s1 = inlined_call_operand.hbm [shape: bf16[768,1024], index: 1, kind: input, shape index: {}]
  %s2 = inlined_call_operand.hbm [shape: f32[1,1024], index: 2, kind: input, shape index: {}]
  %s3 = inlined_call_operand.hbm [shape: bf16[1024,128], index: 3, kind: input, shape index: {}]
  %s4 = inlined_call_operand.hbm [shape: f32[1,128], index: 4, kind: input, shape index: {}]
  %s5 = inlined_call_operand.hbm [shape: f32[16,128], index: 5, kind: output, shape index: {0}]
  %s6 = inlined_call_operand.hbm [shape: f32[16,768], index: 6, kind: output, shape index: {1}]
  %7 = xla_tuple %s5, %s6
  %s8 = sld [smem:[#allocation0]]
  $region58: #{tpu_custom_call.1} parent=0
    _
  %s10 = ssub.s32 1, %s8
  %s11 = scalar_select 0, %s10, %s8
  $region1: #{tpu_custom_call.1} parent=0
    #allocation2 [shape = 'u8[49152]{0}', space=vmem, size = 0xc000, scoped, tag = 'input window, operand 0, single buffered']
    #allocation3 [shape = 's32[1]{0}', space=sflag, size = 0x4, scoped, tag = 'scoped memory for tpu_custom_call.1']
    #allocation4 [shape = 's32[1]{0}', space=sflag, size = 0x4, scoped, tag = 'scoped memory for tpu_custom_call.1']
    #allocation5 [shape = 'u8[1572864]{0}', space=vmem, size = 0x180000, scoped, tag = 'input window, operand 1, single buffered']
    #allocation6 [shape = 's32[1]{0}', space=sflag, size = 0x4, scoped, tag = 'scoped memory for tpu_custom_call.1']
    #allocation7 [shape = 'u8[4096]{0}', space=vmem, size = 0x1000, scoped, tag = 'input window, operand 2, single buffered']
    #allocation8 [shape = 'u8[262144]{0}', space=vmem, size = 0x40000, scoped, tag = 'input window, operand 3, single buffered']
    #allocation9 [shape = 's32[1]{0}', space=sflag, size = 0x4, scoped, tag = 'scoped memory for tpu_custom_call.1']
    #allocation10 [shape = 'u8[512]{0}', space=vmem, size = 0x400, scoped, tag = 'input window, operand 4, single buffered']
    #allocation11 [shape = 'u8[8192]{0}', space=vmem, size = 0x2000, scoped, tag = 'output window, operand 0, single buffered']
    #allocation12 [shape = 'u8[49152]{0}', space=vmem, size = 0xc000, scoped, tag = 'output window, operand 1, single buffered']
    #allocation13 [shape = 's32[1]{0}', space=sflag, size = 0x4, scoped, tag = 'scoped memory for tpu_custom_call.1']
    %12 = vsyncpa [#allocation3], 0
    %13 = vsyncpa [#allocation6], 0
    %14 = vsyncpa [#allocation9], 0
    %15 = vsyncpa [#allocation4], 0
    %16 = vsyncpa [#allocation13], 0
    // Predicated region
    $region2: #{tpu_custom_call.1} parent=1 // pred_check
      _
    $region3: #{tpu_custom_call.1} parent=1 // pred_check_branch
      %18 = sbr.rel (0) target = $region5
    $region4: #{tpu_custom_call.1} parent=1 // pred_region
      %s20 = ssub.s32 1536, 1536
      %21 = vsyncadd [#allocation3], %s20
      %s22 = sshll.u32 [#allocation2], 4
      %s23 = int_to_ptr.vmem [resolvable:$true] %s22
      %28 = dma.hbm_to_vmem [thread:$0]  %s0, 1536, %s23, [#allocation3], 768, 768, 48
    $region5: #{tpu_custom_call.1} parent=1 // pred_fallthru
      _
    // Predicated region
    $region6: #{tpu_custom_call.1} parent=1 // pred_check
      _
    $region7: #{tpu_custom_call.1} parent=1 // pred_check_branch
      %30 = sbr.rel (0) target = $region9
    $region8: #{tpu_custom_call.1} parent=1 // pred_region
      %s32 = ssub.s32 49152, 49152
      %33 = vsyncadd [#allocation6], %s32
      %s34 = sshll.u32 [#allocation5], 4
      %s35 = int_to_ptr.vmem [resolvable:$true] %s34
      %40 = dma.hbm_to_vmem [thread:$0]  %s1, 49152, %s35, [#allocation6], 512, 512, 32
    $region9: #{tpu_custom_call.1} parent=1 // pred_fallthru
      _
    // Predicated region
    $region10: #{tpu_custom_call.1} parent=1 // pred_check
      _
    $region11: #{tpu_custom_call.1} parent=1 // pred_check_branch
      %42 = sbr.rel (0) target = $region13
    $region12: #{tpu_custom_call.1} parent=1 // pred_region
      %s44 = ssub.s32 128, 128
      %45 = vsyncadd [#allocation6], %s44
      %s47 = sshll.u32 [#allocation7], 4
      %s48 = int_to_ptr.vmem [resolvable:$true] %s47
      %50 = dma.hbm_to_vmem [thread:$0]  %s2, 128, %s48, [#allocation6]
    $region13: #{tpu_custom_call.1} parent=1 // pred_fallthru
      _
    // Predicated region
    $region14: #{tpu_custom_call.1} parent=1 // pred_check
      _
    $region15: #{tpu_custom_call.1} parent=1 // pred_check_branch
      %52 = sbr.rel (0) target = $region17
    $region16: #{tpu_custom_call.1} parent=1 // pred_region
      %s54 = ssub.s32 8192, 8192
      %55 = vsyncadd [#allocation9], %s54
      %s56 = sshll.u32 [#allocation8], 4
      %s57 = int_to_ptr.vmem [resolvable:$true] %s56
      %62 = dma.hbm_to_vmem [thread:$0]  %s3, 8192, %s57, [#allocation9], 64, 64, 4
    $region17: #{tpu_custom_call.1} parent=1 // pred_fallthru
      _
    // Predicated region
    $region18: #{tpu_custom_call.1} parent=1 // pred_check
      _
    $region19: #{tpu_custom_call.1} parent=1 // pred_check_branch
      %64 = sbr.rel (0) target = $region21
    $region20: #{tpu_custom_call.1} parent=1 // pred_region
      %s66 = ssub.s32 16, 16
      %67 = vsyncadd [#allocation9], %s66
      %s69 = sshll.u32 [#allocation10], 4
      %s70 = int_to_ptr.vmem [resolvable:$true] %s69
      %72 = dma.hbm_to_vmem [thread:$0]  %s4, 16, %s70, [#allocation9]
    $region21: #{tpu_custom_call.1} parent=1 // pred_fallthru
      _
    // Predicated region
    $region22: #{tpu_custom_call.1} parent=1 // pred_check
      _
    $region23: #{tpu_custom_call.1} parent=1 // pred_check_branch
      %74 = sbr.rel (0) target = $region25
    $region24: #{tpu_custom_call.1} parent=1 // pred_region
      %75 = dma.done [#allocation3], 1536
    $region25: #{tpu_custom_call.1} parent=1 // pred_fallthru
      _
    // Predicated region
    $region26: #{tpu_custom_call.1} parent=1 // pred_check
      _
    $region27: #{tpu_custom_call.1} parent=1 // pred_check_branch
      %77 = sbr.rel (0) target = $region29
    $region28: #{tpu_custom_call.1} parent=1 // pred_region
      %78 = dma.done [#allocation6], 49152
    $region29: #{tpu_custom_call.1} parent=1 // pred_fallthru
      _
    // Predicated region
    $region30: #{tpu_custom_call.1} parent=1 // pred_check
      _
    $region31: #{tpu_custom_call.1} parent=1 // pred_check_branch
      %80 = sbr.rel (0) target = $region33
    $region32: #{tpu_custom_call.1} parent=1 // pred_region
      %81 = dma.done [#allocation6], 128
    $region33: #{tpu_custom_call.1} parent=1 // pred_fallthru
      _
    // Predicated region
    $region34: #{tpu_custom_call.1} parent=1 // pred_check
      _
    $region35: #{tpu_custom_call.1} parent=1 // pred_check_branch
      %83 = sbr.rel (0) target = $region37
    $region36: #{tpu_custom_call.1} parent=1 // pred_region
      %84 = dma.done [#allocation9], 8192
    $region37: #{tpu_custom_call.1} parent=1 // pred_fallthru
      _
    // Predicated region
    $region38: #{tpu_custom_call.1} parent=1 // pred_check
      _
    $region39: #{tpu_custom_call.1} parent=1 // pred_check_branch
      %86 = sbr.rel (0) target = $region41
    $region40: #{tpu_custom_call.1} parent=1 // pred_region
      %87 = dma.done [#allocation9], 16
    $region41: #{tpu_custom_call.1} parent=1 // pred_fallthru
      _
    %v89 = vld [vmem:[#allocation2] sm:$0xff]
    %v90 = vld [vmem:[#allocation2 + $0x8] sm:$0xff]
    %v91 = vld [vmem:[#allocation2 + $0x10] sm:$0xff]
    %v92 = vld [vmem:[#allocation2 + $0x18] sm:$0xff]
    %v93 = vld [vmem:[#allocation2 + $0x20] sm:$0xff]
    %v94 = vld [vmem:[#allocation2 + $0x28] sm:$0xff]
    %v95 = vld [vmem:[#allocation2 + $0x30] sm:$0xff]
    %v96 = vld [vmem:[#allocation2 + $0x38] sm:$0xff]
    %v97 = vld [vmem:[#allocation2 + $0x40] sm:$0xff]
    %v98 = vld [vmem:[#allocation2 + $0x48] sm:$0xff]
    %v99 = vld [vmem:[#allocation2 + $0x50] sm:$0xff]
    %v100 = vld [vmem:[#allocation2 + $0x58] sm:$0xff]
    %101 = vmatprep.subr.mxu0 %v90
    %102 = vmatpush1.xpose.msra.mxu0 %v89
    %103 = vmatprep.subr.mxu0 %v96
    %104 = vmatpush1.xpose.msra.mxu0 %v95
    %105 = vmatprep.subr.mxu0 0.0
    %106 = vmatpush1.xpose.msra.mxu0 0.0
    %107 = vmatprep.subr.mxu0 0.0
    %108 = vmatpush1.xpose.msra.mxu0 0.0
    %109 = vmatprep.subr.mxu0 0.0
    %110 = vmatpush1.xpose.msra.mxu0 0.0
    %111 = vmatprep.subr.mxu0 0.0
    %112 = vmatpush1.xpose.msra.mxu0 0.0
    %113 = vmatprep.subr.mxu0 0.0
    %114 = vmatpush1.xpose.msra.mxu0 0.0
    %115 = vmatprep.subr.mxu0 0.0
    %116 = vmatpush1.xpose.msra.mxu0 0.0
    %117 = vmatprep.subr.mxu0 0.0
    %118 = vmatpush1.xpose.msra.mxu0 0.0
    %119 = vmatprep.subr.mxu0 0.0
    %120 = vmatpush1.xpose.msra.mxu0 0.0
    %121 = vmatprep.subr.mxu0 0.0
    %122 = vmatpush1.xpose.msra.mxu0 0.0
    %123 = vmatprep.subr.mxu0 0.0
    %124 = vmatpush1.xpose.msra.mxu0 0.0
    %125 = vmatprep.subr.mxu0 0.0
    %126 = vmatpush1.xpose.msra.mxu0 0.0
    %127 = vmatprep.subr.mxu0 0.0
    %128 = vmatpush1.xpose.msra.mxu0 0.0
    %129 = vmatprep.subr.mxu0 0.0
    %130 = vmatpush1.xpose.msra.mxu0 0.0
    %131 = vmatprep.subr.mxu0 0.0
    %132 = vmatpush1.xpose.msra.mxu0 0.0
    %133 = vmatprep.subr.mxu0 0.0
    %134 = vmatpush1.xpose.msra.mxu0 0.0
    %135 = vmatprep.subr.mxu0 0.0
    %136 = vmatpush1.xpose.msra.mxu0 0.0
    %137 = vmatprep.subr.mxu0 0.0
    %138 = vmatpush1.xpose.msra.mxu0 0.0
    %139 = vmatprep.subr.mxu0 0.0
    %140 = vmatpush1.xpose.msra.mxu0 0.0
    %141 = vmatprep.subr.mxu0 0.0
    %142 = vmatpush1.xpose.msra.mxu0 0.0
    %143 = vmatprep.subr.mxu0 0.0
    %144 = vmatpush1.xpose.msra.mxu0 0.0
    %145 = vmatprep.subr.mxu0 0.0
    %146 = vmatpush1.xpose.msra.mxu0 0.0
    %147 = vmatprep.subr.mxu0 0.0
    %148 = vmatpush1.xpose.msra.mxu0 0.0
    %149 = vmatprep.subr.mxu0 0.0
    %150 = vmatpush1.xpose.msra.mxu0 0.0
    %151 = vmatprep.subr.mxu0 0.0
    %152 = vmatpush1.xpose.msra.mxu0 0.0
    %153 = vmatprep.subr.mxu0 0.0
    %154 = vmatpush1.xpose.msra.mxu0 0.0
    %155 = vmatprep.subr.mxu0 0.0
    %156 = vmatpush1.xpose.msra.mxu0 0.0
    %157 = vmatprep.subr.mxu0 0.0
    %158 = vmatpush1.xpose.msra.mxu0 0.0
    %159 = vmatprep.subr.mxu0 0.0
    %160 = vmatpush1.xpose.msra.mxu0 0.0
    %161 = vmatprep.subr.mxu0 0.0
    %162 = vmatpush1.xpose.msra.mxu0 0.0
    %163 = vmatprep.subr.mxu0 0.0
    %164 = vmatpush1.xpose.msra.mxu0 0.0
    %165 = vmatprep.mubr.f32.mxu0 %v90
    %166 = vmatmul.mubr.f32.gmra.mrb[0].mxu0 %v89
    %v167 = vpop.f32.mrb[0].mxu0
    %v168 = vadd.f32 0.0, %v167
    %v169 = vpop.f32.mrb[0].mxu0
    %170 = vmatprep.mubr.f32.mxu0 %v96
    %171 = vmatmul.mubr.f32.gmra.mrb[0].mxu0 %v95
    %v172 = vpop.f32.mrb[0].mxu0
    %v173 = vadd.f32 0.0, %v172
    %v174 = vpop.f32.mrb[0].mxu0
    %175 = vdwg.mxu0
    %176 = vmatprep.subr.mxu0 %v92
    %177 = vmatpush1.xpose.msra.mxu0 %v91
    %178 = vmatprep.subr.mxu0 %v98
    %179 = vmatpush1.xpose.msra.mxu0 %v97
    %180 = vmatprep.subr.mxu0 0.0
    %181 = vmatpush1.xpose.msra.mxu0 0.0
    %182 = vmatprep.subr.mxu0 0.0
    %183 = vmatpush1.xpose.msra.mxu0 0.0
    %184 = vmatprep.subr.mxu0 0.0
    %185 = vmatpush1.xpose.msra.mxu0 0.0
    %186 = vmatprep.subr.mxu0 0.0
    %187 = vmatpush1.xpose.msra.mxu0 0.0
    %188 = vmatprep.subr.mxu0 0.0
    %189 = vmatpush1.xpose.msra.mxu0 0.0
    %190 = vmatprep.subr.mxu0 0.0
    %191 = vmatpush1.xpose.msra.mxu0 0.0
    %192 = vmatprep.subr.mxu0 0.0
    %193 = vmatpush1.xpose.msra.mxu0 0.0
    %194 = vmatprep.subr.mxu0 0.0
    %195 = vmatpush1.xpose.msra.mxu0 0.0
    %196 = vmatprep.subr.mxu0 0.0
    %197 = vmatpush1.xpose.msra.mxu0 0.0
    %198 = vmatprep.subr.mxu0 0.0
    %199 = vmatpush1.xpose.msra.mxu0 0.0
    %200 = vmatprep.subr.mxu0 0.0
    %201 = vmatpush1.xpose.msra.mxu0 0.0
    %202 = vmatprep.subr.mxu0 0.0
    %203 = vmatpush1.xpose.msra.mxu0 0.0
    %204 = vmatprep.subr.mxu0 0.0
    %205 = vmatpush1.xpose.msra.mxu0 0.0
    %206 = vmatprep.subr.mxu0 0.0
    %207 = vmatpush1.xpose.msra.mxu0 0.0
    %208 = vmatprep.subr.mxu0 0.0
    %209 = vmatpush1.xpose.msra.mxu0 0.0
    %210 = vmatprep.subr.mxu0 0.0
    %211 = vmatpush1.xpose.msra.mxu0 0.0
    %212 = vmatprep.subr.mxu0 0.0
    %213 = vmatpush1.xpose.msra.mxu0 0.0
    %214 = vmatprep.subr.mxu0 0.0
    %215 = vmatpush1.xpose.msra.mxu0 0.0
    %216 = vmatprep.subr.mxu0 0.0
    %217 = vmatpush1.xpose.msra.mxu0 0.0
    %218 = vmatprep.subr.mxu0 0.0
    %219 = vmatpush1.xpose.msra.mxu0 0.0
    %220 = vmatprep.subr.mxu0 0.0
    %221 = vmatpush1.xpose.msra.mxu0 0.0
    %222 = vmatprep.subr.mxu0 0.0
    %223 = vmatpush1.xpose.msra.mxu0 0.0
    %224 = vmatprep.subr.mxu0 0.0
    %225 = vmatpush1.xpose.msra.mxu0 0.0
    %226 = vmatprep.subr.mxu0 0.0
    %227 = vmatpush1.xpose.msra.mxu0 0.0
    %228 = vmatprep.subr.mxu0 0.0
    %229 = vmatpush1.xpose.msra.mxu0 0.0
    %230 = vmatprep.subr.mxu0 0.0
    %231 = vmatpush1.xpose.msra.mxu0 0.0
    %232 = vmatprep.subr.mxu0 0.0
    %233 = vmatpush1.xpose.msra.mxu0 0.0
    %234 = vmatprep.subr.mxu0 0.0
    %235 = vmatpush1.xpose.msra.mxu0 0.0
    %236 = vmatprep.subr.mxu0 0.0
    %237 = vmatpush1.xpose.msra.mxu0 0.0
    %238 = vmatprep.subr.mxu0 0.0
    %239 = vmatpush1.xpose.msra.mxu0 0.0
    %240 = vmatprep.mubr.f32.mxu0 %v92
    %241 = vmatmul.mubr.f32.gmra.mrb[0].mxu0 %v91
    %v242 = vpop.f32.mrb[0].mxu0
    %v243 = vadd.f32 %v168, %v242
    %v244 = vpop.f32.mrb[0].mxu0
    %245 = vmatprep.mubr.f32.mxu0 %v98
    %246 = vmatmul.mubr.f32.gmra.mrb[0].mxu0 %v97
    %v247 = vpop.f32.mrb[0].mxu0
    %v248 = vadd.f32 %v173, %v247
    %v249 = vpop.f32.mrb[0].mxu0
    %250 = vdwg.mxu0
    %251 = vmatprep.subr.mxu0 %v94
    %252 = vmatpush1.xpose.msra.mxu0 %v93
    %253 = vmatprep.subr.mxu0 %v100
    %254 = vmatpush1.xpose.msra.mxu0 %v99
    %255 = vmatprep.subr.mxu0 0.0
    %256 = vmatpush1.xpose.msra.mxu0 0.0
    %257 = vmatprep.subr.mxu0 0.0
    %258 = vmatpush1.xpose.msra.mxu0 0.0
    %259 = vmatprep.subr.mxu0 0.0
    %260 = vmatpush1.xpose.msra.mxu0 0.0
    %261 = vmatprep.subr.mxu0 0.0
    %262 = vmatpush1.xpose.msra.mxu0 0.0
    %263 = vmatprep.subr.mxu0 0.0
    %264 = vmatpush1.xpose.msra.mxu0 0.0
    %265 = vmatprep.subr.mxu0 0.0
    %266 = vmatpush1.xpose.msra.mxu0 0.0
    %267 = vmatprep.subr.mxu0 0.0
    %268 = vmatpush1.xpose.msra.mxu0 0.0
    %269 = vmatprep.subr.mxu0 0.0
    %270 = vmatpush1.xpose.msra.mxu0 0.0
    %271 = vmatprep.subr.mxu0 0.0
    %272 = vmatpush1.xpose.msra.mxu0 0.0
    %273 = vmatprep.subr.mxu0 0.0
    %274 = vmatpush1.xpose.msra.mxu0 0.0
    %275 = vmatprep.subr.mxu0 0.0
    %276 = vmatpush1.xpose.msra.mxu0 0.0
    %277 = vmatprep.subr.mxu0 0.0
    %278 = vmatpush1.xpose.msra.mxu0 0.0
    %279 = vmatprep.subr.mxu0 0.0
    %280 = vmatpush1.xpose.msra.mxu0 0.0
    %281 = vmatprep.subr.mxu0 0.0
    %282 = vmatpush1.xpose.msra.mxu0 0.0
    %283 = vmatprep.subr.mxu0 0.0
    %284 = vmatpush1.xpose.msra.mxu0 0.0
    %285 = vmatprep.subr.mxu0 0.0
    %286 = vmatpush1.xpose.msra.mxu0 0.0
    %287 = vmatprep.subr.mxu0 0.0
    %288 = vmatpush1.xpose.msra.mxu0 0.0
    %289 = vmatprep.subr.mxu0 0.0
    %290 = vmatpush1.xpose.msra.mxu0 0.0
    %291 = vmatprep.subr.mxu0 0.0
    %292 = vmatpush1.xpose.msra.mxu0 0.0
    %293 = vmatprep.subr.mxu0 0.0
    %294 = vmatpush1.xpose.msra.mxu0 0.0
    %295 = vmatprep.subr.mxu0 0.0
    %296 = vmatpush1.xpose.msra.mxu0 0.0
    %297 = vmatprep.subr.mxu0 0.0
    %298 = vmatpush1.xpose.msra.mxu0 0.0
    %299 = vmatprep.subr.mxu0 0.0
    %300 = vmatpush1.xpose.msra.mxu0 0.0
    %301 = vmatprep.subr.mxu0 0.0
    %302 = vmatpush1.xpose.msra.mxu0 0.0
    %303 = vmatprep.subr.mxu0 0.0
    %304 = vmatpush1.xpose.msra.mxu0 0.0
    %305 = vmatprep.subr.mxu0 0.0
    %306 = vmatpush1.xpose.msra.mxu0 0.0
    %307 = vmatprep.subr.mxu0 0.0
    %308 = vmatpush1.xpose.msra.mxu0 0.0
    %309 = vmatprep.subr.mxu0 0.0
    %310 = vmatpush1.xpose.msra.mxu0 0.0
    %311 = vmatprep.subr.mxu0 0.0
    %312 = vmatpush1.xpose.msra.mxu0 0.0
    %313 = vmatprep.subr.mxu0 0.0
    %314 = vmatpush1.xpose.msra.mxu0 0.0
    %315 = vmatprep.mubr.f32.mxu0 %v94
    %316 = vmatmul.mubr.f32.gmra.mrb[0].mxu0 %v93
    %v317 = vpop.f32.mrb[0].mxu0
    %v318 = vadd.f32 %v243, %v317
    %v319 = vpop.f32.mrb[0].mxu0
    %320 = vmatprep.mubr.f32.mxu0 %v100
    %321 = vmatmul.mubr.f32.gmra.mrb[0].mxu0 %v99
    %v322 = vpop.f32.mrb[0].mxu0
    %v323 = vadd.f32 %v248, %v322
    %v324 = vpop.f32.mrb[0].mxu0
    %325 = vdwg.mxu0
    %v326 = vlaneseq
    %v327 = vshrl.u32 %v326, 7
    %v328 = vadd.s32 %v327, 8
    %v329 = vlaneseq
    %v330 = vand.u32 %v329, 127
    %vm331 = vcmp.eq.s32.totalorder %v327, %v330
    %vm332 = vcmp.eq.s32.totalorder %v328, %v330
    %v333 = vsel %vm331, %v318, 0.0
    %v334 = vsel %vm332, %v323, 0.0
    %vm335 = vcmask 130048
    %v336 = vsel %vm335, %v333, 0.0
    %337 = vadd.xlane.f32.xlu0 %v336
    %v338 = vpop.xlane.xlu0 %337
    %v339 = vsel %vm335, %v334, 0.0
    %340 = vadd.xlane.f32.xlu0 %v339
    %v341 = vpop.xlane.xlu0 %340
    %v342 = vadd.f32 %v336, %v339
    %v343 = vrot.slane %v342, 4
    %v344 = vadd.f32 %v342, %v343
    %v345 = vrot.slane %v344, 2
    %v346 = vadd.f32 %v344, %v345
    %v347 = vrot.slane %v346, 1
    %v348 = vadd.f32 %v346, %v347
    %v349 = vadd.f32 %v338, %v348
    %v350 = vadd.f32 %v341, %v348
    %v351 = vmul.f32 %v318, 2.0
    %v352 = vmul.f32 %v323, 2.0
    %v353 = vsub.f32 %v349, %v351
    %v354 = vsub.f32 %v350, %v352
    %v355 = vmax.f32 %v353, 0.0
    %v356 = vmax.f32 %v354, 0.0
    %v357 = vrsqrt.pop %v355
    %v358 = vmul.f32 %v355, %v357
    %vm359 = vcmp.eq.f32.partialorder %v355, inf
    %v360 = vsel %vm359, %v355, %v358
    %vm361 = vcmp.eq.f32.partialorder %v355, 0.0
    %v362 = vand.u32 %v355, 2147483648
    %v363 = vsel %vm361, %v362, %v360
    %v364 = vrsqrt.pop %v356
    %v365 = vmul.f32 %v356, %v364
    %vm366 = vcmp.eq.f32.partialorder %v356, inf
    %v367 = vsel %vm366, %v356, %v365
    %vm368 = vcmp.eq.f32.partialorder %v356, 0.0
    %v369 = vand.u32 %v356, 2147483648
    %v370 = vsel %vm368, %v369, %v367
    %v371 = vadd.f32 %v363, 1.0
    %v372 = vadd.f32 %v370, 1.0
    %v373 = vrcp.pop %v371
    %v374 = vmul.f32 1.0, %v373
    %v375 = vrcp.pop %v372
    %v376 = vmul.f32 1.0, %v375
    %v377 = vsel %vm335, %v363, inf
    %378 = vmin.xlane.f32.xlu0 %v377
    %v379 = vpop.xlane.xlu0 %378
    %v380 = vsel %vm335, %v370, inf
    %381 = vmin.xlane.f32.xlu0 %v380
    %v382 = vpop.xlane.xlu0 %381
    %vm383 = vcmp.eq.f32.partialorder %v363, %v379
    %vm384 = vcmp.eq.f32.partialorder %v370, %v382
    %v385 = vsel %vm383, %v330, 16
    %v386 = vsel %vm384, %v330, 16
    %v387 = vsel %vm335, %v385, 2147483647
    %v388 = vand.u32 %v387, 65535
    %v389 = vshra.s32 %v387, 16
    %v390 = vcvt.s32.f32 %v388
    %v391 = vcvt.s32.f32 %v389
    %392 = vmin.xlane.f32.xlu0 %v391
    %v393 = vpop.xlane.xlu0 %392
    %vm394 = vcmp.eq.f32.partialorder %v391, %v393
    %v395 = vsel %vm394, %v390, inf
    %396 = vmin.xlane.f32.xlu0 %v395
    %v397 = vpop.xlane.xlu0 %396
    %v398 = vcvt.f32.s32 %v397
    %v399 = vcvt.f32.s32 %v393
    %v400 = vshll.u32 %v399, 16
    %v401 = vadd.s32 %v400, %v398
    %v402 = vsel %vm335, %v386, 2147483647
    %v403 = vand.u32 %v402, 65535
    %v404 = vshra.s32 %v402, 16
    %v405 = vcvt.s32.f32 %v403
    %v406 = vcvt.s32.f32 %v404
    %407 = vmin.xlane.f32.xlu0 %v406
    %v408 = vpop.xlane.xlu0 %407
    %vm409 = vcmp.eq.f32.partialorder %v406, %v408
    %v410 = vsel %vm409, %v405, inf
    %411 = vmin.xlane.f32.xlu0 %v410
    %v412 = vpop.xlane.xlu0 %411
    %v413 = vcvt.f32.s32 %v412
    %v414 = vcvt.f32.s32 %v408
    %v415 = vshll.u32 %v414, 16
    %v416 = vadd.s32 %v415, %v413
    %vm417 = vcmp.eq.s32.totalorder %v330, %v401
    %vm418 = vcmp.eq.s32.totalorder %v330, %v416
    %v419 = vsel %vm417, inf, %v363
    %v420 = vsel %vm418, inf, %v370
    %v421 = vsel %vm335, %v419, inf
    %422 = vmin.xlane.f32.xlu0 %v421
    %v423 = vpop.xlane.xlu0 %422
    %v424 = vsel %vm335, %v420, inf
    %425 = vmin.xlane.f32.xlu0 %v424
    %v426 = vpop.xlane.xlu0 %425
    %vm427 = vcmp.eq.f32.partialorder %v419, %v423
    %vm428 = vcmp.eq.f32.partialorder %v420, %v426
    %v429 = vsel %vm427, %v330, 16
    %v430 = vsel %vm428, %v330, 16
    %v431 = vsel %vm335, %v429, 2147483647
    %v432 = vand.u32 %v431, 65535
    %v433 = vshra.s32 %v431, 16
    %v434 = vcvt.s32.f32 %v432
    %v435 = vcvt.s32.f32 %v433
    %436 = vmin.xlane.f32.xlu0 %v435
    %v437 = vpop.xlane.xlu0 %436
    %vm438 = vcmp.eq.f32.partialorder %v435, %v437
    %v439 = vsel %vm438, %v434, inf
    %440 = vmin.xlane.f32.xlu0 %v439
    %v441 = vpop.xlane.xlu0 %440
    %v442 = vcvt.f32.s32 %v441
    %v443 = vcvt.f32.s32 %v437
    %v444 = vshll.u32 %v443, 16
    %v445 = vadd.s32 %v444, %v442
    %v446 = vsel %vm335, %v430, 2147483647
    %v447 = vand.u32 %v446, 65535
    %v448 = vshra.s32 %v446, 16
    %v449 = vcvt.s32.f32 %v447
    %v450 = vcvt.s32.f32 %v448
    %451 = vmin.xlane.f32.xlu0 %v450
    %v452 = vpop.xlane.xlu0 %451
    %vm453 = vcmp.eq.f32.partialorder %v450, %v452
    %v454 = vsel %vm453, %v449, inf
    %455 = vmin.xlane.f32.xlu0 %v454
    %v456 = vpop.xlane.xlu0 %455
    %v457 = vcvt.f32.s32 %v456
    %v458 = vcvt.f32.s32 %v452
    %v459 = vshll.u32 %v458, 16
    %v460 = vadd.s32 %v459, %v457
    %vm461 = vcmp.eq.s32.totalorder %v330, %v445
    %vm462 = vcmp.eq.s32.totalorder %v330, %v460
    %v463 = vsel %vm461, 1, 0
    %v464 = vsel %vm462, 1, 0
    %v465 = vcvt.s32.f32 %v463
    %v466 = vcvt.s32.f32 %v464
    %v468 = vsel %vm335, %v465, 0
    %v471 = vsel %vm335, %v466, 0
    %473 = vmatprep.subr.mxu0 %v90
    %474 = vmatpush1.msra.mxu0 %v89
    %475 = vmatprep.subr.mxu0 %v96
    %476 = vmatpush1.msra.mxu0 %v95
    %477 = vmatprep.subr.mxu0 0.0
    %478 = vmatpush1.msra.mxu0 0.0
    %479 = vmatprep.subr.mxu0 0.0
    %480 = vmatpush1.msra.mxu0 0.0
    %481 = vmatprep.subr.mxu0 0.0
    %482 = vmatpush1.msra.mxu0 0.0
    %483 = vmatprep.subr.mxu0 0.0
    %484 = vmatpush1.msra.mxu0 0.0
    %485 = vmatprep.subr.mxu0 0.0
    %486 = vmatpush1.msra.mxu0 0.0
    %487 = vmatprep.subr.mxu0 0.0
    %488 = vmatpush1.msra.mxu0 0.0
    %489 = vmatprep.subr.mxu0 0.0
    %490 = vmatpush1.msra.mxu0 0.0
    %491 = vmatprep.subr.mxu0 0.0
    %492 = vmatpush1.msra.mxu0 0.0
    %493 = vmatprep.subr.mxu0 0.0
    %494 = vmatpush1.msra.mxu0 0.0
    %495 = vmatprep.subr.mxu0 0.0
    %496 = vmatpush1.msra.mxu0 0.0
    %497 = vmatprep.subr.mxu0 0.0
    %498 = vmatpush1.msra.mxu0 0.0
    %499 = vmatprep.subr.mxu0 0.0
    %500 = vmatpush1.msra.mxu0 0.0
    %501 = vmatprep.subr.mxu0 0.0
    %502 = vmatpush1.msra.mxu0 0.0
    %503 = vmatprep.subr.mxu0 0.0
    %504 = vmatpush1.msra.mxu0 0.0
    %505 = vmatprep.subr.mxu0 0.0
    %506 = vmatpush1.msra.mxu0 0.0
    %507 = vmatprep.subr.mxu0 0.0
    %508 = vmatpush1.msra.mxu0 0.0
    %509 = vmatprep.subr.mxu0 0.0
    %510 = vmatpush1.msra.mxu0 0.0
    %511 = vmatprep.subr.mxu0 0.0
    %512 = vmatpush1.msra.mxu0 0.0
    %513 = vmatprep.subr.mxu0 0.0
    %514 = vmatpush1.msra.mxu0 0.0
    %515 = vmatprep.subr.mxu0 0.0
    %516 = vmatpush1.msra.mxu0 0.0
    %517 = vmatprep.subr.mxu0 0.0
    %518 = vmatpush1.msra.mxu0 0.0
    %519 = vmatprep.subr.mxu0 0.0
    %520 = vmatpush1.msra.mxu0 0.0
    %521 = vmatprep.subr.mxu0 0.0
    %522 = vmatpush1.msra.mxu0 0.0
    %523 = vmatprep.subr.mxu0 0.0
    %524 = vmatpush1.msra.mxu0 0.0
    %525 = vmatprep.subr.mxu0 0.0
    %526 = vmatpush1.msra.mxu0 0.0
    %527 = vmatprep.subr.mxu0 0.0
    %528 = vmatpush1.msra.mxu0 0.0
    %529 = vmatprep.subr.mxu0 0.0
    %530 = vmatpush1.msra.mxu0 0.0
    %531 = vmatprep.subr.mxu0 0.0
    %532 = vmatpush1.msra.mxu0 0.0
    %533 = vmatprep.subr.mxu0 0.0
    %534 = vmatpush1.msra.mxu0 0.0
    %535 = vmatprep.subr.mxu0 0.0
    %536 = vmatpush1.msra.mxu0 0.0
    %537 = vmatprep.mubr.f32.mxu0 0.0
    %538 = vmatmul.mubr.f32.gmra.mrb[0].mxu0 %v468
    %v539 = vpop.f32.mrb[0].mxu0
    %v540 = vadd.f32 0.0, %v539
    %v541 = vpop.f32.mrb[0].mxu0
    %v542 = vadd.f32 0.0, %v541
    %543 = vmatprep.mubr.f32.mxu0 0.0
    %544 = vmatmul.mubr.f32.gmra.mrb[0].mxu0 %v471
    %v545 = vpop.f32.mrb[0].mxu0
    %v546 = vadd.f32 0.0, %v545
    %v547 = vpop.f32.mrb[0].mxu0
    %v548 = vadd.f32 0.0, %v547
    %549 = vdwg.mxu0
    %550 = vmatprep.subr.mxu0 %v92
    %551 = vmatpush1.msra.mxu0 %v91
    %552 = vmatprep.subr.mxu0 %v98
    %553 = vmatpush1.msra.mxu0 %v97
    %554 = vmatprep.subr.mxu0 0.0
    %555 = vmatpush1.msra.mxu0 0.0
    %556 = vmatprep.subr.mxu0 0.0
    %557 = vmatpush1.msra.mxu0 0.0
    %558 = vmatprep.subr.mxu0 0.0
    %559 = vmatpush1.msra.mxu0 0.0
    %560 = vmatprep.subr.mxu0 0.0
    %561 = vmatpush1.msra.mxu0 0.0
    %562 = vmatprep.subr.mxu0 0.0
    %563 = vmatpush1.msra.mxu0 0.0
    %564 = vmatprep.subr.mxu0 0.0
    %565 = vmatpush1.msra.mxu0 0.0
    %566 = vmatprep.subr.mxu0 0.0
    %567 = vmatpush1.msra.mxu0 0.0
    %568 = vmatprep.subr.mxu0 0.0
    %569 = vmatpush1.msra.mxu0 0.0
    %570 = vmatprep.subr.mxu0 0.0
    %571 = vmatpush1.msra.mxu0 0.0
    %572 = vmatprep.subr.mxu0 0.0
    %573 = vmatpush1.msra.mxu0 0.0
    %574 = vmatprep.subr.mxu0 0.0
    %575 = vmatpush1.msra.mxu0 0.0
    %576 = vmatprep.subr.mxu0 0.0
    %577 = vmatpush1.msra.mxu0 0.0
    %578 = vmatprep.subr.mxu0 0.0
    %579 = vmatpush1.msra.mxu0 0.0
    %580 = vmatprep.subr.mxu0 0.0
    %581 = vmatpush1.msra.mxu0 0.0
    %582 = vmatprep.subr.mxu0 0.0
    %583 = vmatpush1.msra.mxu0 0.0
    %584 = vmatprep.subr.mxu0 0.0
    %585 = vmatpush1.msra.mxu0 0.0
    %586 = vmatprep.subr.mxu0 0.0
    %587 = vmatpush1.msra.mxu0 0.0
    %588 = vmatprep.subr.mxu0 0.0
    %589 = vmatpush1.msra.mxu0 0.0
    %590 = vmatprep.subr.mxu0 0.0
    %591 = vmatpush1.msra.mxu0 0.0
    %592 = vmatprep.subr.mxu0 0.0
    %593 = vmatpush1.msra.mxu0 0.0
    %594 = vmatprep.subr.mxu0 0.0
    %595 = vmatpush1.msra.mxu0 0.0
    %596 = vmatprep.subr.mxu0 0.0
    %597 = vmatpush1.msra.mxu0 0.0
    %598 = vmatprep.subr.mxu0 0.0
    %599 = vmatpush1.msra.mxu0 0.0
    %600 = vmatprep.subr.mxu0 0.0
    %601 = vmatpush1.msra.mxu0 0.0
    %602 = vmatprep.subr.mxu0 0.0
    %603 = vmatpush1.msra.mxu0 0.0
    %604 = vmatprep.subr.mxu0 0.0
    %605 = vmatpush1.msra.mxu0 0.0
    %606 = vmatprep.subr.mxu0 0.0
    %607 = vmatpush1.msra.mxu0 0.0
    %608 = vmatprep.subr.mxu0 0.0
    %609 = vmatpush1.msra.mxu0 0.0
    %610 = vmatprep.subr.mxu0 0.0
    %611 = vmatpush1.msra.mxu0 0.0
    %612 = vmatprep.subr.mxu0 0.0
    %613 = vmatpush1.msra.mxu0 0.0
    %614 = vmatprep.mubr.f32.mxu0 0.0
    %615 = vmatmul.mubr.f32.gmra.mrb[0].mxu0 %v468
    %v616 = vpop.f32.mrb[0].mxu0
    %v617 = vadd.f32 0.0, %v616
    %v618 = vpop.f32.mrb[0].mxu0
    %v619 = vadd.f32 0.0, %v618
    %620 = vmatprep.mubr.f32.mxu0 0.0
    %621 = vmatmul.mubr.f32.gmra.mrb[0].mxu0 %v471
    %v622 = vpop.f32.mrb[0].mxu0
    %v623 = vadd.f32 0.0, %v622
    %v624 = vpop.f32.mrb[0].mxu0
    %v625 = vadd.f32 0.0, %v624
    %626 = vdwg.mxu0
    %627 = vmatprep.subr.mxu0 %v94
    %628 = vmatpush1.msra.mxu0 %v93
    %629 = vmatprep.subr.mxu0 %v100
    %630 = vmatpush1.msra.mxu0 %v99
    %631 = vmatprep.subr.mxu0 0.0
    %632 = vmatpush1.msra.mxu0 0.0
    %633 = vmatprep.subr.mxu0 0.0
    %634 = vmatpush1.msra.mxu0 0.0
    %635 = vmatprep.subr.mxu0 0.0
    %636 = vmatpush1.msra.mxu0 0.0
    %637 = vmatprep.subr.mxu0 0.0
    %638 = vmatpush1.msra.mxu0 0.0
    %639 = vmatprep.subr.mxu0 0.0
    %640 = vmatpush1.msra.mxu0 0.0
    %641 = vmatprep.subr.mxu0 0.0
    %642 = vmatpush1.msra.mxu0 0.0
    %643 = vmatprep.subr.mxu0 0.0
    %644 = vmatpush1.msra.mxu0 0.0
    %645 = vmatprep.subr.mxu0 0.0
    %646 = vmatpush1.msra.mxu0 0.0
    %647 = vmatprep.subr.mxu0 0.0
    %648 = vmatpush1.msra.mxu0 0.0
    %649 = vmatprep.subr.mxu0 0.0
    %650 = vmatpush1.msra.mxu0 0.0
    %651 = vmatprep.subr.mxu0 0.0
    %652 = vmatpush1.msra.mxu0 0.0
    %653 = vmatprep.subr.mxu0 0.0
    %654 = vmatpush1.msra.mxu0 0.0
    %655 = vmatprep.subr.mxu0 0.0
    %656 = vmatpush1.msra.mxu0 0.0
    %657 = vmatprep.subr.mxu0 0.0
    %658 = vmatpush1.msra.mxu0 0.0
    %659 = vmatprep.subr.mxu0 0.0
    %660 = vmatpush1.msra.mxu0 0.0
    %661 = vmatprep.subr.mxu0 0.0
    %662 = vmatpush1.msra.mxu0 0.0
    %663 = vmatprep.subr.mxu0 0.0
    %664 = vmatpush1.msra.mxu0 0.0
    %665 = vmatprep.subr.mxu0 0.0
    %666 = vmatpush1.msra.mxu0 0.0
    %667 = vmatprep.subr.mxu0 0.0
    %668 = vmatpush1.msra.mxu0 0.0
    %669 = vmatprep.subr.mxu0 0.0
    %670 = vmatpush1.msra.mxu0 0.0
    %671 = vmatprep.subr.mxu0 0.0
    %672 = vmatpush1.msra.mxu0 0.0
    %673 = vmatprep.subr.mxu0 0.0
    %674 = vmatpush1.msra.mxu0 0.0
    %675 = vmatprep.subr.mxu0 0.0
    %676 = vmatpush1.msra.mxu0 0.0
    %677 = vmatprep.subr.mxu0 0.0
    %678 = vmatpush1.msra.mxu0 0.0
    %679 = vmatprep.subr.mxu0 0.0
    %680 = vmatpush1.msra.mxu0 0.0
    %681 = vmatprep.subr.mxu0 0.0
    %682 = vmatpush1.msra.mxu0 0.0
    %683 = vmatprep.subr.mxu0 0.0
    %684 = vmatpush1.msra.mxu0 0.0
    %685 = vmatprep.subr.mxu0 0.0
    %686 = vmatpush1.msra.mxu0 0.0
    %687 = vmatprep.subr.mxu0 0.0
    %688 = vmatpush1.msra.mxu0 0.0
    %689 = vmatprep.subr.mxu0 0.0
    %690 = vmatpush1.msra.mxu0 0.0
    %691 = vmatprep.mubr.f32.mxu0 0.0
    %692 = vmatmul.mubr.f32.gmra.mrb[0].mxu0 %v468
    %v693 = vpop.f32.mrb[0].mxu0
    %v694 = vadd.f32 0.0, %v693
    %v695 = vpop.f32.mrb[0].mxu0
    %v696 = vadd.f32 0.0, %v695
    %697 = vmatprep.mubr.f32.mxu0 0.0
    %698 = vmatmul.mubr.f32.gmra.mrb[0].mxu0 %v471
    %v699 = vpop.f32.mrb[0].mxu0
    %v700 = vadd.f32 0.0, %v699
    %v701 = vpop.f32.mrb[0].mxu0
    %v702 = vadd.f32 0.0, %v701
    %703 = vdwg.mxu0
    %704 = vst [vmem:[#allocation12] sm:$0xff] %v540
    %705 = vst [vmem:[#allocation12 + $0x8] sm:$0xff] %v542
    %706 = vst [vmem:[#allocation12 + $0x10] sm:$0xff] %v617
    %707 = vst [vmem:[#allocation12 + $0x18] sm:$0xff] %v619
    %708 = vst [vmem:[#allocation12 + $0x20] sm:$0xff] %v694
    %709 = vst [vmem:[#allocation12 + $0x28] sm:$0xff] %v696
    %710 = vst [vmem:[#allocation12 + $0x30] sm:$0xff] %v546
    %711 = vst [vmem:[#allocation12 + $0x38] sm:$0xff] %v548
    %712 = vst [vmem:[#allocation12 + $0x40] sm:$0xff] %v623
    %713 = vst [vmem:[#allocation12 + $0x48] sm:$0xff] %v625
    %714 = vst [vmem:[#allocation12 + $0x50] sm:$0xff] %v700
    %715 = vst [vmem:[#allocation12 + $0x58] sm:$0xff] %v702
    %v716 = vpack.c.bf16 %v95, %v89
    %v717 = vpack.c.bf16 %v96, %v90
    %v718 = vpack.c.bf16 %v97, %v91
    %v719 = vpack.c.bf16 %v98, %v92
    %v720 = vpack.c.bf16 %v99, %v93
    %v721 = vpack.c.bf16 %v100, %v94
    %v722 = vld [vmem:[#allocation5] sm:$0xff]
    %v723 = vld [vmem:[#allocation5 + $0x8] sm:$0xff]
    %v724 = vld [vmem:[#allocation5 + $0x10] sm:$0xff]
    %v725 = vld [vmem:[#allocation5 + $0x18] sm:$0xff]
    %v726 = vld [vmem:[#allocation5 + $0x20] sm:$0xff]
    %v727 = vld [vmem:[#allocation5 + $0x28] sm:$0xff]
    %v728 = vld [vmem:[#allocation5 + $0x30] sm:$0xff]
    %v729 = vld [vmem:[#allocation5 + $0x38] sm:$0xff]
    %v730 = vld [vmem:[#allocation5 + $0x40] sm:$0xff]
    %v731 = vld [vmem:[#allocation5 + $0x48] sm:$0xff]
    %v732 = vld [vmem:[#allocation5 + $0x50] sm:$0xff]
    %v733 = vld [vmem:[#allocation5 + $0x58] sm:$0xff]
    %v734 = vld [vmem:[#allocation5 + $0x60] sm:$0xff]
    %v735 = vld [vmem:[#allocation5 + $0x68] sm:$0xff]
    %v736 = vld [vmem:[#allocation5 + $0x70] sm:$0xff]
    %v737 = vld [vmem:[#allocation5 + $0x78] sm:$0xff]
    %v738 = vld [vmem:[#allocation5 + $0x80] sm:$0xff]
    %v739 = vld [vmem:[#allocation5 + $0x88] sm:$0xff]
    %v740 = vld [vmem:[#allocation5 + $0x90] sm:$0xff]
    %v741 = vld [vmem:[#allocation5 + $0x98] sm:$0xff]
    %v742 = vld [vmem:[#allocation5 + $0xa0] sm:$0xff]
    %v743 = vld [vmem:[#allocation5 + $0xa8] sm:$0xff]
    %v744 = vld [vmem:[#allocation5 + $0xb0] sm:$0xff]
    %v745 = vld [vmem:[#allocation5 + $0xb8] sm:$0xff]
    %v746 = vld [vmem:[#allocation5 + $0xc0] sm:$0xff]
    %v747 = vld [vmem:[#allocation5 + $0xc8] sm:$0xff]
    %v748 = vld [vmem:[#allocation5 + $0xd0] sm:$0xff]
    %v749 = vld [vmem:[#allocation5 + $0xd8] sm:$0xff]
    %v750 = vld [vmem:[#allocation5 + $0xe0] sm:$0xff]
    %v751 = vld [vmem:[#allocation5 + $0xe8] sm:$0xff]
    %v752 = vld [vmem:[#allocation5 + $0xf0] sm:$0xff]
    %v753 = vld [vmem:[#allocation5 + $0xf8] sm:$0xff]
    %v754 = vld [vmem:[#allocation5 + $0x100] sm:$0xff]
    %v755 = vld [vmem:[#allocation5 + $0x108] sm:$0xff]
    %v756 = vld [vmem:[#allocation5 + $0x110] sm:$0xff]
    %v757 = vld [vmem:[#allocation5 + $0x118] sm:$0xff]
    %v758 = vld [vmem:[#allocation5 + $0x120] sm:$0xff]
    %v759 = vld [vmem:[#allocation5 + $0x128] sm:$0xff]
    %v760 = vld [vmem:[#allocation5 + $0x130] sm:$0xff]
    %v761 = vld [vmem:[#allocation5 + $0x138] sm:$0xff]
    %v762 = vld [vmem:[#allocation5 + $0x140] sm:$0xff]
    %v763 = vld [vmem:[#allocation5 + $0x148] sm:$0xff]
    %v764 = vld [vmem:[#allocation5 + $0x150] sm:$0xff]
    %v765 = vld [vmem:[#allocation5 + $0x158] sm:$0xff]
    %v766 = vld [vmem:[#allocation5 + $0x160] sm:$0xff]
    %v767 = vld [vmem:[#allocation5 + $0x168] sm:$0xff]
    %v768 = vld [vmem:[#allocation5 + $0x170] sm:$0xff]
    %v769 = vld [vmem:[#allocation5 + $0x178] sm:$0xff]
    %v770 = vld [vmem:[#allocation5 + $0x180] sm:$0xff]
    %v771 = vld [vmem:[#allocation5 + $0x188] sm:$0xff]
    %v772 = vld [vmem:[#allocation5 + $0x190] sm:$0xff]
    %v773 = vld [vmem:[#allocation5 + $0x198] sm:$0xff]
    %v774 = vld [vmem:[#allocation5 + $0x1a0] sm:$0xff]
    %v775 = vld [vmem:[#allocation5 + $0x1a8] sm:$0xff]
    %v776 = vld [vmem:[#allocation5 + $0x1b0] sm:$0xff]
    %v777 = vld [vmem:[#allocation5 + $0x1b8] sm:$0xff]
    %v778 = vld [vmem:[#allocation5 + $0x1c0] sm:$0xff]
    %v779 = vld [vmem:[#allocation5 + $0x1c8] sm:$0xff]
    %v780 = vld [vmem:[#allocation5 + $0x1d0] sm:$0xff]
    %v781 = vld [vmem:[#allocation5 + $0x1d8] sm:$0xff]
    %v782 = vld [vmem:[#allocation5 + $0x1e0] sm:$0xff]
    %v783 = vld [vmem:[#allocation5 + $0x1e8] sm:$0xff]
    %v784 = vld [vmem:[#allocation5 + $0x1f0] sm:$0xff]
    %v785 = vld [vmem:[#allocation5 + $0x1f8] sm:$0xff]
    %v786 = vld [vmem:[#allocation5 + $0x200] sm:$0xff]
    %v787 = vld [vmem:[#allocation5 + $0x208] sm:$0xff]
    %v788 = vld [vmem:[#allocation5 + $0x210] sm:$0xff]
    %v789 = vld [vmem:[#allocation5 + $0x218] sm:$0xff]
    %v790 = vld [vmem:[#allocation5 + $0x220] sm:$0xff]
    %v791 = vld [vmem:[#allocation5 + $0x228] sm:$0xff]
    %v792 = vld [vmem:[#allocation5 + $0x230] sm:$0xff]
    %v793 = vld [vmem:[#allocation5 + $0x238] sm:$0xff]
    %v794 = vld [vmem:[#allocation5 + $0x240] sm:$0xff]
    %v795 = vld [vmem:[#allocation5 + $0x248] sm:$0xff]
    %v796 = vld [vmem:[#allocation5 + $0x250] sm:$0xff]
    %v797 = vld [vmem:[#allocation5 + $0x258] sm:$0xff]
    %v798 = vld [vmem:[#allocation5 + $0x260] sm:$0xff]
    %v799 = vld [vmem:[#allocation5 + $0x268] sm:$0xff]
    %v800 = vld [vmem:[#allocation5 + $0x270] sm:$0xff]
    %v801 = vld [vmem:[#allocation5 + $0x278] sm:$0xff]
    %v802 = vld [vmem:[#allocation5 + $0x280] sm:$0xff]
    %v803 = vld [vmem:[#allocation5 + $0x288] sm:$0xff]
    %v804 = vld [vmem:[#allocation5 + $0x290] sm:$0xff]
    %v805 = vld [vmem:[#allocation5 + $0x298] sm:$0xff]
    %v806 = vld [vmem:[#allocation5 + $0x2a0] sm:$0xff]
    %v807 = vld [vmem:[#allocation5 + $0x2a8] sm:$0xff]
    %v808 = vld [vmem:[#allocation5 + $0x2b0] sm:$0xff]
    %v809 = vld [vmem:[#allocation5 + $0x2b8] sm:$0xff]
    %v810 = vld [vmem:[#allocation5 + $0x2c0] sm:$0xff]
    %v811 = vld [vmem:[#allocation5 + $0x2c8] sm:$0xff]
    %v812 = vld [vmem:[#allocation5 + $0x2d0] sm:$0xff]
    %v813 = vld [vmem:[#allocation5 + $0x2d8] sm:$0xff]
    %v814 = vld [vmem:[#allocation5 + $0x2e0] sm:$0xff]
    %v815 = vld [vmem:[#allocation5 + $0x2e8] sm:$0xff]
    %v816 = vld [vmem:[#allocation5 + $0x2f0] sm:$0xff]
    %v817 = vld [vmem:[#allocation5 + $0x2f8] sm:$0xff]
    %v818 = vld [vmem:[#allocation5 + $0x300] sm:$0xff]
    %v819 = vld [vmem:[#allocation5 + $0x308] sm:$0xff]
    %v820 = vld [vmem:[#allocation5 + $0x310] sm:$0xff]
    %v821 = vld [vmem:[#allocation5 + $0x318] sm:$0xff]
    %v822 = vld [vmem:[#allocation5 + $0x320] sm:$0xff]
    %v823 = vld [vmem:[#allocation5 + $0x328] sm:$0xff]
    %v824 = vld [vmem:[#allocation5 + $0x330] sm:$0xff]
    %v825 = vld [vmem:[#allocation5 + $0x338] sm:$0xff]
    %v826 = vld [vmem:[#allocation5 + $0x340] sm:$0xff]
    %v827 = vld [vmem:[#allocation5 + $0x348] sm:$0xff]
    %v828 = vld [vmem:[#allocation5 + $0x350] sm:$0xff]
    %v829 = vld [vmem:[#allocation5 + $0x358] sm:$0xff]
    %v830 = vld [vmem:[#allocation5 + $0x360] sm:$0xff]
    %v831 = vld [vmem:[#allocation5 + $0x368] sm:$0xff]
    %v832 = vld [vmem:[#allocation5 + $0x370] sm:$0xff]
    %v833 = vld [vmem:[#allocation5 + $0x378] sm:$0xff]
    %v834 = vld [vmem:[#allocation5 + $0x380] sm:$0xff]
    %v835 = vld [vmem:[#allocation5 + $0x388] sm:$0xff]
    %v836 = vld [vmem:[#allocation5 + $0x390] sm:$0xff]
    %v837 = vld [vmem:[#allocation5 + $0x398] sm:$0xff]
    %v838 = vld [vmem:[#allocation5 + $0x3a0] sm:$0xff]
    %v839 = vld [vmem:[#allocation5 + $0x3a8] sm:$0xff]
    %v840 = vld [vmem:[#allocation5 + $0x3b0] sm:$0xff]
    %v841 = vld [vmem:[#allocation5 + $0x3b8] sm:$0xff]
    %v842 = vld [vmem:[#allocation5 + $0x3c0] sm:$0xff]
    %v843 = vld [vmem:[#allocation5 + $0x3c8] sm:$0xff]
    %v844 = vld [vmem:[#allocation5 + $0x3d0] sm:$0xff]
    %v845 = vld [vmem:[#allocation5 + $0x3d8] sm:$0xff]
    %v846 = vld [vmem:[#allocation5 + $0x3e0] sm:$0xff]
    %v847 = vld [vmem:[#allocation5 + $0x3e8] sm:$0xff]
    %v848 = vld [vmem:[#allocation5 + $0x3f0] sm:$0xff]
    %v849 = vld [vmem:[#allocation5 + $0x3f8] sm:$0xff]
    %v850 = vld [vmem:[#allocation5 + $0x400] sm:$0xff]
    %v851 = vld [vmem:[#allocation5 + $0x408] sm:$0xff]
    %v852 = vld [vmem:[#allocation5 + $0x410] sm:$0xff]
    %v853 = vld [vmem:[#allocation5 + $0x418] sm:$0xff]
    %v854 = vld [vmem:[#allocation5 + $0x420] sm:$0xff]
    %v855 = vld [vmem:[#allocation5 + $0x428] sm:$0xff]
    %v856 = vld [vmem:[#allocation5 + $0x430] sm:$0xff]
    %v857 = vld [vmem:[#allocation5 + $0x438] sm:$0xff]
    %v858 = vld [vmem:[#allocation5 + $0x440] sm:$0xff]
    %v859 = vld [vmem:[#allocation5 + $0x448] sm:$0xff]
    %v860 = vld [vmem:[#allocation5 + $0x450] sm:$0xff]
    %v861 = vld [vmem:[#allocation5 + $0x458] sm:$0xff]
    %v862 = vld [vmem:[#allocation5 + $0x460] sm:$0xff]
    %v863 = vld [vmem:[#allocation5 + $0x468] sm:$0xff]
    %v864 = vld [vmem:[#allocation5 + $0x470] sm:$0xff]
    %v865 = vld [vmem:[#allocation5 + $0x478] sm:$0xff]
    %v866 = vld [vmem:[#allocation5 + $0x480] sm:$0xff]
    %v867 = vld [vmem:[#allocation5 + $0x488] sm:$0xff]
    %v868 = vld [vmem:[#allocation5 + $0x490] sm:$0xff]
    %v869 = vld [vmem:[#allocation5 + $0x498] sm:$0xff]
    %v870 = vld [vmem:[#allocation5 + $0x4a0] sm:$0xff]
    %v871 = vld [vmem:[#allocation5 + $0x4a8] sm:$0xff]
    %v872 = vld [vmem:[#allocation5 + $0x4b0] sm:$0xff]
    %v873 = vld [vmem:[#allocation5 + $0x4b8] sm:$0xff]
    %v874 = vld [vmem:[#allocation5 + $0x4c0] sm:$0xff]
    %v875 = vld [vmem:[#allocation5 + $0x4c8] sm:$0xff]
    %v876 = vld [vmem:[#allocation5 + $0x4d0] sm:$0xff]
    %v877 = vld [vmem:[#allocation5 + $0x4d8] sm:$0xff]
    %v878 = vld [vmem:[#allocation5 + $0x4e0] sm:$0xff]
    %v879 = vld [vmem:[#allocation5 + $0x4e8] sm:$0xff]
    %v880 = vld [vmem:[#allocation5 + $0x4f0] sm:$0xff]
    %v881 = vld [vmem:[#allocation5 + $0x4f8] sm:$0xff]
    %v882 = vld [vmem:[#allocation5 + $0x500] sm:$0xff]
    %v883 = vld [vmem:[#allocation5 + $0x508] sm:$0xff]
    %v884 = vld [vmem:[#allocation5 + $0x510] sm:$0xff]
    %v885 = vld [vmem:[#allocation5 + $0x518] sm:$0xff]
    %v886 = vld [vmem:[#allocation5 + $0x520] sm:$0xff]
    %v887 = vld [vmem:[#allocation5 + $0x528] sm:$0xff]
    %v888 = vld [vmem:[#allocation5 + $0x530] sm:$0xff]
    %v889 = vld [vmem:[#allocation5 + $0x538] sm:$0xff]
    %v890 = vld [vmem:[#allocation5 + $0x540] sm:$0xff]
    %v891 = vld [vmem:[#allocation5 + $0x548] sm:$0xff]
    %v892 = vld [vmem:[#allocation5 + $0x550] sm:$0xff]
    %v893 = vld [vmem:[#allocation5 + $0x558] sm:$0xff]
    %v894 = vld [vmem:[#allocation5 + $0x560] sm:$0xff]
    %v895 = vld [vmem:[#allocation5 + $0x568] sm:$0xff]
    %v896 = vld [vmem:[#allocation5 + $0x570] sm:$0xff]
    %v897 = vld [vmem:[#allocation5 + $0x578] sm:$0xff]
    %v898 = vld [vmem:[#allocation5 + $0x580] sm:$0xff]
    %v899 = vld [vmem:[#allocation5 + $0x588] sm:$0xff]
    %v900 = vld [vmem:[#allocation5 + $0x590] sm:$0xff]
    %v901 = vld [vmem:[#allocation5 + $0x598] sm:$0xff]
    %v902 = vld [vmem:[#allocation5 + $0x5a0] sm:$0xff]
    %v903 = vld [vmem:[#allocation5 + $0x5a8] sm:$0xff]
    %v904 = vld [vmem:[#allocation5 + $0x5b0] sm:$0xff]
    %v905 = vld [vmem:[#allocation5 + $0x5b8] sm:$0xff]
    %v906 = vld [vmem:[#allocation5 + $0x5c0] sm:$0xff]
    %v907 = vld [vmem:[#allocation5 + $0x5c8] sm:$0xff]
    %v908 = vld [vmem:[#allocation5 + $0x5d0] sm:$0xff]
    %v909 = vld [vmem:[#allocation5 + $0x5d8] sm:$0xff]
    %v910 = vld [vmem:[#allocation5 + $0x5e0] sm:$0xff]
    %v911 = vld [vmem:[#allocation5 + $0x5e8] sm:$0xff]
    %v912 = vld [vmem:[#allocation5 + $0x5f0] sm:$0xff]
    %v913 = vld [vmem:[#allocation5 + $0x5f8] sm:$0xff]
    %v914 = vld [vmem:[#allocation5 + $0x600] sm:$0xff]
    %v915 = vld [vmem:[#allocation5 + $0x608] sm:$0xff]
    %v916 = vld [vmem:[#allocation5 + $0x610] sm:$0xff]
    %v917 = vld [vmem:[#allocation5 + $0x618] sm:$0xff]
    %v918 = vld [vmem:[#allocation5 + $0x620] sm:$0xff]
    %v919 = vld [vmem:[#allocation5 + $0x628] sm:$0xff]
    %v920 = vld [vmem:[#allocation5 + $0x630] sm:$0xff]
    %v921 = vld [vmem:[#allocation5 + $0x638] sm:$0xff]
    %v922 = vld [vmem:[#allocation5 + $0x640] sm:$0xff]
    %v923 = vld [vmem:[#allocation5 + $0x648] sm:$0xff]
    %v924 = vld [vmem:[#allocation5 + $0x650] sm:$0xff]
    %v925 = vld [vmem:[#allocation5 + $0x658] sm:$0xff]
    %v926 = vld [vmem:[#allocation5 + $0x660] sm:$0xff]
    %v927 = vld [vmem:[#allocation5 + $0x668] sm:$0xff]
    %v928 = vld [vmem:[#allocation5 + $0x670] sm:$0xff]
    %v929 = vld [vmem:[#allocation5 + $0x678] sm:$0xff]
    %v930 = vld [vmem:[#allocation5 + $0x680] sm:$0xff]
    %v931 = vld [vmem:[#allocation5 + $0x688] sm:$0xff]
    %v932 = vld [vmem:[#allocation5 + $0x690] sm:$0xff]
    %v933 = vld [vmem:[#allocation5 + $0x698] sm:$0xff]
    %v934 = vld [vmem:[#allocation5 + $0x6a0] sm:$0xff]
    %v935 = vld [vmem:[#allocation5 + $0x6a8] sm:$0xff]
    %v936 = vld [vmem:[#allocation5 + $0x6b0] sm:$0xff]
    %v937 = vld [vmem:[#allocation5 + $0x6b8] sm:$0xff]
    %v938 = vld [vmem:[#allocation5 + $0x6c0] sm:$0xff]
    %v939 = vld [vmem:[#allocation5 + $0x6c8] sm:$0xff]
    %v940 = vld [vmem:[#allocation5 + $0x6d0] sm:$0xff]
    %v941 = vld [vmem:[#allocation5 + $0x6d8] sm:$0xff]
    %v942 = vld [vmem:[#allocation5 + $0x6e0] sm:$0xff]
    %v943 = vld [vmem:[#allocation5 + $0x6e8] sm:$0xff]
    %v944 = vld [vmem:[#allocation5 + $0x6f0] sm:$0xff]
    %v945 = vld [vmem:[#allocation5 + $0x6f8] sm:$0xff]
    %v946 = vld [vmem:[#allocation5 + $0x700] sm:$0xff]
    %v947 = vld [vmem:[#allocation5 + $0x708] sm:$0xff]
    %v948 = vld [vmem:[#allocation5 + $0x710] sm:$0xff]
    %v949 = vld [vmem:[#allocation5 + $0x718] sm:$0xff]
    %v950 = vld [vmem:[#allocation5 + $0x720] sm:$0xff]
    %v951 = vld [vmem:[#allocation5 + $0x728] sm:$0xff]
    %v952 = vld [vmem:[#allocation5 + $0x730] sm:$0xff]
    %v953 = vld [vmem:[#allocation5 + $0x738] sm:$0xff]
    %v954 = vld [vmem:[#allocation5 + $0x740] sm:$0xff]
    %v955 = vld [vmem:[#allocation5 + $0x748] sm:$0xff]
    %v956 = vld [vmem:[#allocation5 + $0x750] sm:$0xff]
    %v957 = vld [vmem:[#allocation5 + $0x758] sm:$0xff]
    %v958 = vld [vmem:[#allocation5 + $0x760] sm:$0xff]
    %v959 = vld [vmem:[#allocation5 + $0x768] sm:$0xff]
    %v960 = vld [vmem:[#allocation5 + $0x770] sm:$0xff]
    %v961 = vld [vmem:[#allocation5 + $0x778] sm:$0xff]
    %v962 = vld [vmem:[#allocation5 + $0x780] sm:$0xff]
    %v963 = vld [vmem:[#allocation5 + $0x788] sm:$0xff]
    %v964 = vld [vmem:[#allocation5 + $0x790] sm:$0xff]
    %v965 = vld [vmem:[#allocation5 + $0x798] sm:$0xff]
    %v966 = vld [vmem:[#allocation5 + $0x7a0] sm:$0xff]
    %v967 = vld [vmem:[#allocation5 + $0x7a8] sm:$0xff]
    %v968 = vld [vmem:[#allocation5 + $0x7b0] sm:$0xff]
    %v969 = vld [vmem:[#allocation5 + $0x7b8] sm:$0xff]
    %v970 = vld [vmem:[#allocation5 + $0x7c0] sm:$0xff]
    %v971 = vld [vmem:[#allocation5 + $0x7c8] sm:$0xff]
    %v972 = vld [vmem:[#allocation5 + $0x7d0] sm:$0xff]
    %v973 = vld [vmem:[#allocation5 + $0x7d8] sm:$0xff]
    %v974 = vld [vmem:[#allocation5 + $0x7e0] sm:$0xff]
    %v975 = vld [vmem:[#allocation5 + $0x7e8] sm:$0xff]
    %v976 = vld [vmem:[#allocation5 + $0x7f0] sm:$0xff]
    %v977 = vld [vmem:[#allocation5 + $0x7f8] sm:$0xff]
    %v978 = vld [vmem:[#allocation5 + $0x800] sm:$0xff]
    %v979 = vld [vmem:[#allocation5 + $0x808] sm:$0xff]
    %v980 = vld [vmem:[#allocation5 + $0x810] sm:$0xff]
    %v981 = vld [vmem:[#allocation5 + $0x818] sm:$0xff]
    %v982 = vld [vmem:[#allocation5 + $0x820] sm:$0xff]
    %v983 = vld [vmem:[#allocation5 + $0x828] sm:$0xff]
    %v984 = vld [vmem:[#allocation5 + $0x830] sm:$0xff]
    %v985 = vld [vmem:[#allocation5 + $0x838] sm:$0xff]
    %v986 = vld [vmem:[#allocation5 + $0x840] sm:$0xff]
    %v987 = vld [vmem:[#allocation5 + $0x848] sm:$0xff]
    %v988 = vld [vmem:[#allocation5 + $0x850] sm:$0xff]
    %v989 = vld [vmem:[#allocation5 + $0x858] sm:$0xff]
    %v990 = vld [vmem:[#allocation5 + $0x860] sm:$0xff]
    %v991 = vld [vmem:[#allocation5 + $0x868] sm:$0xff]
    %v992 = vld [vmem:[#allocation5 + $0x870] sm:$0xff]
    %v993 = vld [vmem:[#allocation5 + $0x878] sm:$0xff]
    %v994 = vld [vmem:[#allocation5 + $0x880] sm:$0xff]
    %v995 = vld [vmem:[#allocation5 + $0x888] sm:$0xff]
    %v996 = vld [vmem:[#allocation5 + $0x890] sm:$0xff]
    %v997 = vld [vmem:[#allocation5 + $0x898] sm:$0xff]
    %v998 = vld [vmem:[#allocation5 + $0x8a0] sm:$0xff]
    %v999 = vld [vmem:[#allocation5 + $0x8a8] sm:$0xff]
    %v1000 = vld [vmem:[#allocation5 + $0x8b0] sm:$0xff]
    %v1001 = vld [vmem:[#allocation5 + $0x8b8] sm:$0xff]
    %v1002 = vld [vmem:[#allocation5 + $0x8c0] sm:$0xff]
    %v1003 = vld [vmem:[#allocation5 + $0x8c8] sm:$0xff]
    %v1004 = vld [vmem:[#allocation5 + $0x8d0] sm:$0xff]
    %v1005 = vld [vmem:[#allocation5 + $0x8d8] sm:$0xff]
    %v1006 = vld [vmem:[#allocation5 + $0x8e0] sm:$0xff]
    %v1007 = vld [vmem:[#allocation5 + $0x8e8] sm:$0xff]
    %v1008 = vld [vmem:[#allocation5 + $0x8f0] sm:$0xff]
    %v1009 = vld [vmem:[#allocation5 + $0x8f8] sm:$0xff]
    %v1010 = vld [vmem:[#allocation5 + $0x900] sm:$0xff]
    %v1011 = vld [vmem:[#allocation5 + $0x908] sm:$0xff]
    %v1012 = vld [vmem:[#allocation5 + $0x910] sm:$0xff]
    %v1013 = vld [vmem:[#allocation5 + $0x918] sm:$0xff]
    %v1014 = vld [vmem:[#allocation5 + $0x920] sm:$0xff]
    %v1015 = vld [vmem:[#allocation5 + $0x928] sm:$0xff]
    %v1016 = vld [vmem:[#allocation5 + $0x930] sm:$0xff]
    %v1017 = vld [vmem:[#allocation5 + $0x938] sm:$0xff]
    %v1018 = vld [vmem:[#allocation5 + $0x940] sm:$0xff]
    %v1019 = vld [vmem:[#allocation5 + $0x948] sm:$0xff]
    %v1020 = vld [vmem:[#allocation5 + $0x950] sm:$0xff]
    %v1021 = vld [vmem:[#allocation5 + $0x958] sm:$0xff]
    %v1022 = vld [vmem:[#allocation5 + $0x960] sm:$0xff]
    %v1023 = vld [vmem:[#allocation5 + $0x968] sm:$0xff]
    %v1024 = vld [vmem:[#allocation5 + $0x970] sm:$0xff]
    %v1025 = vld [vmem:[#allocation5 + $0x978] sm:$0xff]
    %v1026 = vld [vmem:[#allocation5 + $0x980] sm:$0xff]
    %v1027 = vld [vmem:[#allocation5 + $0x988] sm:$0xff]
    %v1028 = vld [vmem:[#allocation5 + $0x990] sm:$0xff]
    %v1029 = vld [vmem:[#allocation5 + $0x998] sm:$0xff]
    %v1030 = vld [vmem:[#allocation5 + $0x9a0] sm:$0xff]
    %v1031 = vld [vmem:[#allocation5 + $0x9a8] sm:$0xff]
    %v1032 = vld [vmem:[#allocation5 + $0x9b0] sm:$0xff]
    %v1033 = vld [vmem:[#allocation5 + $0x9b8] sm:$0xff]
    %v1034 = vld [vmem:[#allocation5 + $0x9c0] sm:$0xff]
    %v1035 = vld [vmem:[#allocation5 + $0x9c8] sm:$0xff]
    %v1036 = vld [vmem:[#allocation5 + $0x9d0] sm:$0xff]
    %v1037 = vld [vmem:[#allocation5 + $0x9d8] sm:$0xff]
    %v1038 = vld [vmem:[#allocation5 + $0x9e0] sm:$0xff]
    %v1039 = vld [vmem:[#allocation5 + $0x9e8] sm:$0xff]
    %v1040 = vld [vmem:[#allocation5 + $0x9f0] sm:$0xff]
    %v1041 = vld [vmem:[#allocation5 + $0x9f8] sm:$0xff]
    %v1042 = vld [vmem:[#allocation5 + $0xa00] sm:$0xff]
    %v1043 = vld [vmem:[#allocation5 + $0xa08] sm:$0xff]
    %v1044 = vld [vmem:[#allocation5 + $0xa10] sm:$0xff]
    %v1045 = vld [vmem:[#allocation5 + $0xa18] sm:$0xff]
    %v1046 = vld [vmem:[#allocation5 + $0xa20] sm:$0xff]
    %v1047 = vld [vmem:[#allocation5 + $0xa28] sm:$0xff]
    %v1048 = vld [vmem:[#allocation5 + $0xa30] sm:$0xff]
    %v1049 = vld [vmem:[#allocation5 + $0xa38] sm:$0xff]
    %v1050 = vld [vmem:[#allocation5 + $0xa40] sm:$0xff]
    %v1051 = vld [vmem:[#allocation5 + $0xa48] sm:$0xff]
    %v1052 = vld [vmem:[#allocation5 + $0xa50] sm:$0xff]
    %v1053 = vld [vmem:[#allocation5 + $0xa58] sm:$0xff]
    %v1054 = vld [vmem:[#allocation5 + $0xa60] sm:$0xff]
    %v1055 = vld [vmem:[#allocation5 + $0xa68] sm:$0xff]
    %v1056 = vld [vmem:[#allocation5 + $0xa70] sm:$0xff]
    %v1057 = vld [vmem:[#allocation5 + $0xa78] sm:$0xff]
    %v1058 = vld [vmem:[#allocation5 + $0xa80] sm:$0xff]
    %v1059 = vld [vmem:[#allocation5 + $0xa88] sm:$0xff]
    %v1060 = vld [vmem:[#allocation5 + $0xa90] sm:$0xff]
    %v1061 = vld [vmem:[#allocation5 + $0xa98] sm:$0xff]
    %v1062 = vld [vmem:[#allocation5 + $0xaa0] sm:$0xff]
    %v1063 = vld [vmem:[#allocation5 + $0xaa8] sm:$0xff]
    %v1064 = vld [vmem:[#allocation5 + $0xab0] sm:$0xff]
    %v1065 = vld [vmem:[#allocation5 + $0xab8] sm:$0xff]
    %v1066 = vld [vmem:[#allocation5 + $0xac0] sm:$0xff]
    %v1067 = vld [vmem:[#allocation5 + $0xac8] sm:$0xff]
    %v1068 = vld [vmem:[#allocation5 + $0xad0] sm:$0xff]
    %v1069 = vld [vmem:[#allocation5 + $0xad8] sm:$0xff]
    %v1070 = vld [vmem:[#allocation5 + $0xae0] sm:$0xff]
    %v1071 = vld [vmem:[#allocation5 + $0xae8] sm:$0xff]
    %v1072 = vld [vmem:[#allocation5 + $0xaf0] sm:$0xff]
    %v1073 = vld [vmem:[#allocation5 + $0xaf8] sm:$0xff]
    %v1074 = vld [vmem:[#allocation5 + $0xb00] sm:$0xff]
    %v1075 = vld [vmem:[#allocation5 + $0xb08] sm:$0xff]
    %v1076 = vld [vmem:[#allocation5 + $0xb10] sm:$0xff]
    %v1077 = vld [vmem:[#allocation5 + $0xb18] sm:$0xff]
    %v1078 = vld [vmem:[#allocation5 + $0xb20] sm:$0xff]
    %v1079 = vld [vmem:[#allocation5 + $0xb28] sm:$0xff]
    %v1080 = vld [vmem:[#allocation5 + $0xb30] sm:$0xff]
    %v1081 = vld [vmem:[#allocation5 + $0xb38] sm:$0xff]
    %v1082 = vld [vmem:[#allocation5 + $0xb40] sm:$0xff]
    %v1083 = vld [vmem:[#allocation5 + $0xb48] sm:$0xff]
    %v1084 = vld [vmem:[#allocation5 + $0xb50] sm:$0xff]
    %v1085 = vld [vmem:[#allocation5 + $0xb58] sm:$0xff]
    %v1086 = vld [vmem:[#allocation5 + $0xb60] sm:$0xff]
    %v1087 = vld [vmem:[#allocation5 + $0xb68] sm:$0xff]
    %v1088 = vld [vmem:[#allocation5 + $0xb70] sm:$0xff]
    %v1089 = vld [vmem:[#allocation5 + $0xb78] sm:$0xff]
    %v1090 = vld [vmem:[#allocation5 + $0xb80] sm:$0xff]
    %v1091 = vld [vmem:[#allocation5 + $0xb88] sm:$0xff]
    %v1092 = vld [vmem:[#allocation5 + $0xb90] sm:$0xff]
    %v1093 = vld [vmem:[#allocation5 + $0xb98] sm:$0xff]
    %v1094 = vld [vmem:[#allocation5 + $0xba0] sm:$0xff]
    %v1095 = vld [vmem:[#allocation5 + $0xba8] sm:$0xff]
    %v1096 = vld [vmem:[#allocation5 + $0xbb0] sm:$0xff]
    %v1097 = vld [vmem:[#allocation5 + $0xbb8] sm:$0xff]
    %v1098 = vld [vmem:[#allocation5 + $0xbc0] sm:$0xff]
    %v1099 = vld [vmem:[#allocation5 + $0xbc8] sm:$0xff]
    %v1100 = vld [vmem:[#allocation5 + $0xbd0] sm:$0xff]
    %v1101 = vld [vmem:[#allocation5 + $0xbd8] sm:$0xff]
    %v1102 = vld [vmem:[#allocation5 + $0xbe0] sm:$0xff]
    %v1103 = vld [vmem:[#allocation5 + $0xbe8] sm:$0xff]
    %v1104 = vld [vmem:[#allocation5 + $0xbf0] sm:$0xff]
    %v1105 = vld [vmem:[#allocation5 + $0xbf8] sm:$0xff]
    %v1106 = vld [vmem:[#allocation7] sm:$0xff]
    %v1108 = vlaneseq
    %v1109 = vshrl.u32 %v1108, 7
    %v1110 = vsub.s32 0, %v1109
    %v1111 = vrot.slane %v1106, %v1110
    %v1112 = vlaneseq
    %v1113 = vshrl.u32 %v1112, 7
    %v1114 = vsub.s32 1, %v1113
    %v1115 = vrot.slane %v1106, %v1114
    %v1116 = vlaneseq
    %v1117 = vshrl.u32 %v1116, 7
    %v1118 = vsub.s32 2, %v1117
    %v1119 = vrot.slane %v1106, %v1118
    %v1120 = vlaneseq
    %v1121 = vshrl.u32 %v1120, 7
    %v1122 = vsub.s32 3, %v1121
    %v1123 = vrot.slane %v1106, %v1122
    %v1124 = vlaneseq
    %v1125 = vshrl.u32 %v1124, 7
    %v1126 = vsub.s32 4, %v1125
    %v1127 = vrot.slane %v1106, %v1126
    %v1128 = vlaneseq
    %v1129 = vshrl.u32 %v1128, 7
    %v1130 = vsub.s32 5, %v1129
    %v1131 = vrot.slane %v1106, %v1130
    %v1132 = vlaneseq
    %v1133 = vshrl.u32 %v1132, 7
    %v1134 = vsub.s32 6, %v1133
    %v1135 = vrot.slane %v1106, %v1134
    %v1136 = vlaneseq
    %v1137 = vshrl.u32 %v1136, 7
    %v1138 = vsub.s32 7, %v1137
    %v1139 = vrot.slane %v1106, %v1138
    %v1532 = vunpack.c.l.b16 %v722
    %v1533 = vunpack.c.h.b16 %v722
    %v1534 = vunpack.c.l.b16 %v723
    %v1535 = vunpack.c.h.b16 %v723
    %v1536 = vunpack.c.l.b16 %v724
    %v1537 = vunpack.c.h.b16 %v724
    %v1538 = vunpack.c.l.b16 %v725
    %v1539 = vunpack.c.h.b16 %v725
    %v1540 = vunpack.c.l.b16 %v726
    %v1541 = vunpack.c.h.b16 %v726
    %v1542 = vunpack.c.l.b16 %v727
    %v1543 = vunpack.c.h.b16 %v727
    %v1544 = vunpack.c.l.b16 %v728
    %v1545 = vunpack.c.h.b16 %v728
    %v1546 = vunpack.c.l.b16 %v729
    %v1547 = vunpack.c.h.b16 %v729
    %v1548 = vunpack.c.l.b16 %v730
    %v1549 = vunpack.c.h.b16 %v730
    %v1550 = vunpack.c.l.b16 %v731
    %v1551 = vunpack.c.h.b16 %v731
    %v1552 = vunpack.c.l.b16 %v732
    %v1553 = vunpack.c.h.b16 %v732
    %v1554 = vunpack.c.l.b16 %v733
    %v1555 = vunpack.c.h.b16 %v733
    %v1556 = vunpack.c.l.b16 %v734
    %v1557 = vunpack.c.h.b16 %v734
    %v1558 = vunpack.c.l.b16 %v735
    %v1559 = vunpack.c.h.b16 %v735
    %v1560 = vunpack.c.l.b16 %v736
    %v1561 = vunpack.c.h.b16 %v736
    %v1562 = vunpack.c.l.b16 %v737
    %v1563 = vunpack.c.h.b16 %v737
    %v1564 = vunpack.c.l.b16 %v738
    %v1565 = vunpack.c.h.b16 %v738
    %v1566 = vunpack.c.l.b16 %v739
    %v1567 = vunpack.c.h.b16 %v739
    %v1568 = vunpack.c.l.b16 %v740
    %v1569 = vunpack.c.h.b16 %v740
    %v1570 = vunpack.c.l.b16 %v741
    %v1571 = vunpack.c.h.b16 %v741
    %v1572 = vunpack.c.l.b16 %v742
    %v1573 = vunpack.c.h.b16 %v742
    %v1574 = vunpack.c.l.b16 %v743
    %v1575 = vunpack.c.h.b16 %v743
    %v1576 = vunpack.c.l.b16 %v744
    %v1577 = vunpack.c.h.b16 %v744
    %v1578 = vunpack.c.l.b16 %v745
    %v1579 = vunpack.c.h.b16 %v745
    %v1580 = vunpack.c.l.b16 %v746
    %v1581 = vunpack.c.h.b16 %v746
    %v1582 = vunpack.c.l.b16 %v747
    %v1583 = vunpack.c.h.b16 %v747
    %v1584 = vunpack.c.l.b16 %v748
    %v1585 = vunpack.c.h.b16 %v748
    %v1586 = vunpack.c.l.b16 %v749
    %v1587 = vunpack.c.h.b16 %v749
    %v1588 = vunpack.c.l.b16 %v750
    %v1589 = vunpack.c.h.b16 %v750
    %v1590 = vunpack.c.l.b16 %v751
    %v1591 = vunpack.c.h.b16 %v751
    %v1592 = vunpack.c.l.b16 %v752
    %v1593 = vunpack.c.h.b16 %v752
    %v1594 = vunpack.c.l.b16 %v753
    %v1595 = vunpack.c.h.b16 %v753
    %v1596 = vunpack.c.l.b16 %v754
    %v1597 = vunpack.c.h.b16 %v754
    %v1598 = vunpack.c.l.b16 %v755
    %v1599 = vunpack.c.h.b16 %v755
    %v1600 = vunpack.c.l.b16 %v756
    %v1601 = vunpack.c.h.b16 %v756
    %v1602 = vunpack.c.l.b16 %v757
    %v1603 = vunpack.c.h.b16 %v757
    %v1604 = vunpack.c.l.b16 %v758
    %v1605 = vunpack.c.h.b16 %v758
    %v1606 = vunpack.c.l.b16 %v759
    %v1607 = vunpack.c.h.b16 %v759
    %v1608 = vunpack.c.l.b16 %v760
    %v1609 = vunpack.c.h.b16 %v760
    %v1610 = vunpack.c.l.b16 %v761
    %v1611 = vunpack.c.h.b16 %v761
    %v1612 = vunpack.c.l.b16 %v762
    %v1613 = vunpack.c.h.b16 %v762
    %v1614 = vunpack.c.l.b16 %v763
    %v1615 = vunpack.c.h.b16 %v763
    %v1616 = vunpack.c.l.b16 %v764
    %v1617 = vunpack.c.h.b16 %v764
    %v1618 = vunpack.c.l.b16 %v765
    %v1619 = vunpack.c.h.b16 %v765
    %v1620 = vunpack.c.l.b16 %v766
    %v1621 = vunpack.c.h.b16 %v766
    %v1622 = vunpack.c.l.b16 %v767
    %v1623 = vunpack.c.h.b16 %v767
    %v1624 = vunpack.c.l.b16 %v768
    %v1625 = vunpack.c.h.b16 %v768
    %v1626 = vunpack.c.l.b16 %v769
    %v1627 = vunpack.c.h.b16 %v769
    %v1628 = vunpack.c.l.b16 %v770
    %v1629 = vunpack.c.h.b16 %v770
    %v1630 = vunpack.c.l.b16 %v771
    %v1631 = vunpack.c.h.b16 %v771
    %v1632 = vunpack.c.l.b16 %v772
    %v1633 = vunpack.c.h.b16 %v772
    %v1634 = vunpack.c.l.b16 %v773
    %v1635 = vunpack.c.h.b16 %v773
    %v1636 = vunpack.c.l.b16 %v774
    %v1637 = vunpack.c.h.b16 %v774
    %v1638 = vunpack.c.l.b16 %v775
    %v1639 = vunpack.c.h.b16 %v775
    %v1640 = vunpack.c.l.b16 %v776
    %v1641 = vunpack.c.h.b16 %v776
    %v1642 = vunpack.c.l.b16 %v777
    %v1643 = vunpack.c.h.b16 %v777
    %v1644 = vunpack.c.l.b16 %v778
    %v1645 = vunpack.c.h.b16 %v778
    %v1646 = vunpack.c.l.b16 %v779
    %v1647 = vunpack.c.h.b16 %v779
    %v1648 = vunpack.c.l.b16 %v780
    %v1649 = vunpack.c.h.b16 %v780
    %v1650 = vunpack.c.l.b16 %v781
    %v1651 = vunpack.c.h.b16 %v781
    %v1652 = vunpack.c.l.b16 %v782
    %v1653 = vunpack.c.h.b16 %v782
    %v1654 = vunpack.c.l.b16 %v783
    %v1655 = vunpack.c.h.b16 %v783
    %v1656 = vunpack.c.l.b16 %v784
    %v1657 = vunpack.c.h.b16 %v784
    %v1658 = vunpack.c.l.b16 %v785
    %v1659 = vunpack.c.h.b16 %v785
    %v1660 = vunpack.c.l.b16 %v786
    %v1661 = vunpack.c.h.b16 %v786
    %v1662 = vunpack.c.l.b16 %v787
    %v1663 = vunpack.c.h.b16 %v787
    %v1664 = vunpack.c.l.b16 %v788
    %v1665 = vunpack.c.h.b16 %v788
    %v1666 = vunpack.c.l.b16 %v789
    %v1667 = vunpack.c.h.b16 %v789
    %v1668 = vunpack.c.l.b16 %v790
    %v1669 = vunpack.c.h.b16 %v790
    %v1670 = vunpack.c.l.b16 %v791
    %v1671 = vunpack.c.h.b16 %v791
    %v1672 = vunpack.c.l.b16 %v792
    %v1673 = vunpack.c.h.b16 %v792
    %v1674 = vunpack.c.l.b16 %v793
    %v1675 = vunpack.c.h.b16 %v793
    %v1676 = vunpack.c.l.b16 %v794
    %v1677 = vunpack.c.h.b16 %v794
    %v1678 = vunpack.c.l.b16 %v795
    %v1679 = vunpack.c.h.b16 %v795
    %v1680 = vunpack.c.l.b16 %v796
    %v1681 = vunpack.c.h.b16 %v796
    %v1682 = vunpack.c.l.b16 %v797
    %v1683 = vunpack.c.h.b16 %v797
    %v1684 = vunpack.c.l.b16 %v798
    %v1685 = vunpack.c.h.b16 %v798
    %v1686 = vunpack.c.l.b16 %v799
    %v1687 = vunpack.c.h.b16 %v799
    %v1688 = vunpack.c.l.b16 %v800
    %v1689 = vunpack.c.h.b16 %v800
    %v1690 = vunpack.c.l.b16 %v801
    %v1691 = vunpack.c.h.b16 %v801
    %v1692 = vunpack.c.l.b16 %v802
    %v1693 = vunpack.c.h.b16 %v802
    %v1694 = vunpack.c.l.b16 %v803
    %v1695 = vunpack.c.h.b16 %v803
    %v1696 = vunpack.c.l.b16 %v804
    %v1697 = vunpack.c.h.b16 %v804
    %v1698 = vunpack.c.l.b16 %v805
    %v1699 = vunpack.c.h.b16 %v805
    %v1700 = vunpack.c.l.b16 %v806
    %v1701 = vunpack.c.h.b16 %v806
    %v1702 = vunpack.c.l.b16 %v807
    %v1703 = vunpack.c.h.b16 %v807
    %v1704 = vunpack.c.l.b16 %v808
    %v1705 = vunpack.c.h.b16 %v808
    %v1706 = vunpack.c.l.b16 %v809
    %v1707 = vunpack.c.h.b16 %v809
    %v1708 = vunpack.c.l.b16 %v810
    %v1709 = vunpack.c.h.b16 %v810
    %v1710 = vunpack.c.l.b16 %v811
    %v1711 = vunpack.c.h.b16 %v811
    %v1712 = vunpack.c.l.b16 %v812
    %v1713 = vunpack.c.h.b16 %v812
    %v1714 = vunpack.c.l.b16 %v813
    %v1715 = vunpack.c.h.b16 %v813
    %v1716 = vunpack.c.l.b16 %v814
    %v1717 = vunpack.c.h.b16 %v814
    %v1718 = vunpack.c.l.b16 %v815
    %v1719 = vunpack.c.h.b16 %v815
    %v1720 = vunpack.c.l.b16 %v816
    %v1721 = vunpack.c.h.b16 %v816
    %v1722 = vunpack.c.l.b16 %v817
    %v1723 = vunpack.c.h.b16 %v817
    %v1724 = vunpack.c.l.b16 %v818
    %v1725 = vunpack.c.h.b16 %v818
    %v1726 = vunpack.c.l.b16 %v819
    %v1727 = vunpack.c.h.b16 %v819
    %v1728 = vunpack.c.l.b16 %v820
    %v1729 = vunpack.c.h.b16 %v820
    %v1730 = vunpack.c.l.b16 %v821
    %v1731 = vunpack.c.h.b16 %v821
    %v1732 = vunpack.c.l.b16 %v822
    %v1733 = vunpack.c.h.b16 %v822
    %v1734 = vunpack.c.l.b16 %v823
    %v1735 = vunpack.c.h.b16 %v823
    %v1736 = vunpack.c.l.b16 %v824
    %v1737 = vunpack.c.h.b16 %v824
    %v1738 = vunpack.c.l.b16 %v825
    %v1739 = vunpack.c.h.b16 %v825
    %v1740 = vunpack.c.l.b16 %v826
    %v1741 = vunpack.c.h.b16 %v826
    %v1742 = vunpack.c.l.b16 %v827
    %v1743 = vunpack.c.h.b16 %v827
    %v1744 = vunpack.c.l.b16 %v828
    %v1745 = vunpack.c.h.b16 %v828
    %v1746 = vunpack.c.l.b16 %v829
    %v1747 = vunpack.c.h.b16 %v829
    %v1748 = vunpack.c.l.b16 %v830
    %v1749 = vunpack.c.h.b16 %v830
    %v1750 = vunpack.c.l.b16 %v831
    %v1751 = vunpack.c.h.b16 %v831
    %v1752 = vunpack.c.l.b16 %v832
    %v1753 = vunpack.c.h.b16 %v832
    %v1754 = vunpack.c.l.b16 %v833
    %v1755 = vunpack.c.h.b16 %v833
    %v1756 = vunpack.c.l.b16 %v834
    %v1757 = vunpack.c.h.b16 %v834
    %v1758 = vunpack.c.l.b16 %v835
    %v1759 = vunpack.c.h.b16 %v835
    %v1760 = vunpack.c.l.b16 %v836
    %v1761 = vunpack.c.h.b16 %v836
    %v1762 = vunpack.c.l.b16 %v837
    %v1763 = vunpack.c.h.b16 %v837
    %v1764 = vunpack.c.l.b16 %v838
    %v1765 = vunpack.c.h.b16 %v838
    %v1766 = vunpack.c.l.b16 %v839
    %v1767 = vunpack.c.h.b16 %v839
    %v1768 = vunpack.c.l.b16 %v840
    %v1769 = vunpack.c.h.b16 %v840
    %v1770 = vunpack.c.l.b16 %v841
    %v1771 = vunpack.c.h.b16 %v841
    %v1772 = vunpack.c.l.b16 %v842
    %v1773 = vunpack.c.h.b16 %v842
    %v1774 = vunpack.c.l.b16 %v843
    %v1775 = vunpack.c.h.b16 %v843
    %v1776 = vunpack.c.l.b16 %v844
    %v1777 = vunpack.c.h.b16 %v844
    %v1778 = vunpack.c.l.b16 %v845
    %v1779 = vunpack.c.h.b16 %v845
    %v1780 = vunpack.c.l.b16 %v846
    %v1781 = vunpack.c.h.b16 %v846
    %v1782 = vunpack.c.l.b16 %v847
    %v1783 = vunpack.c.h.b16 %v847
    %v1784 = vunpack.c.l.b16 %v848
    %v1785 = vunpack.c.h.b16 %v848
    %v1786 = vunpack.c.l.b16 %v849
    %v1787 = vunpack.c.h.b16 %v849
    %v1788 = vunpack.c.l.b16 %v850
    %v1789 = vunpack.c.h.b16 %v850
    %v1790 = vunpack.c.l.b16 %v851
    %v1791 = vunpack.c.h.b16 %v851
    %v1792 = vunpack.c.l.b16 %v852
    %v1793 = vunpack.c.h.b16 %v852
    %v1794 = vunpack.c.l.b16 %v853
    %v1795 = vunpack.c.h.b16 %v853
    %v1796 = vunpack.c.l.b16 %v854
    %v1797 = vunpack.c.h.b16 %v854
    %v1798 = vunpack.c.l.b16 %v855
    %v1799 = vunpack.c.h.b16 %v855
    %v1800 = vunpack.c.l.b16 %v856
    %v1801 = vunpack.c.h.b16 %v856
    %v1802 = vunpack.c.l.b16 %v857
    %v1803 = vunpack.c.h.b16 %v857
    %v1804 = vunpack.c.l.b16 %v858
    %v1805 = vunpack.c.h.b16 %v858
    %v1806 = vunpack.c.l.b16 %v859
    %v1807 = vunpack.c.h.b16 %v859
    %v1808 = vunpack.c.l.b16 %v860
    %v1809 = vunpack.c.h.b16 %v860
    %v1810 = vunpack.c.l.b16 %v861
    %v1811 = vunpack.c.h.b16 %v861
    %v1812 = vunpack.c.l.b16 %v862
    %v1813 = vunpack.c.h.b16 %v862
    %v1814 = vunpack.c.l.b16 %v863
    %v1815 = vunpack.c.h.b16 %v863
    %v1816 = vunpack.c.l.b16 %v864
    %v1817 = vunpack.c.h.b16 %v864
    %v1818 = vunpack.c.l.b16 %v865
    %v1819 = vunpack.c.h.b16 %v865
    %v1820 = vunpack.c.l.b16 %v866
    %v1821 = vunpack.c.h.b16 %v866
    %v1822 = vunpack.c.l.b16 %v867
    %v1823 = vunpack.c.h.b16 %v867
    %v1824 = vunpack.c.l.b16 %v868
    %v1825 = vunpack.c.h.b16 %v868
    %v1826 = vunpack.c.l.b16 %v869
    %v1827 = vunpack.c.h.b16 %v869
    %v1828 = vunpack.c.l.b16 %v870
    %v1829 = vunpack.c.h.b16 %v870
    %v1830 = vunpack.c.l.b16 %v871
    %v1831 = vunpack.c.h.b16 %v871
    %v1832 = vunpack.c.l.b16 %v872
    %v1833 = vunpack.c.h.b16 %v872
    %v1834 = vunpack.c.l.b16 %v873
    %v1835 = vunpack.c.h.b16 %v873
    %v1836 = vunpack.c.l.b16 %v874
    %v1837 = vunpack.c.h.b16 %v874
    %v1838 = vunpack.c.l.b16 %v875
    %v1839 = vunpack.c.h.b16 %v875
    %v1840 = vunpack.c.l.b16 %v876
    %v1841 = vunpack.c.h.b16 %v876
    %v1842 = vunpack.c.l.b16 %v877
    %v1843 = vunpack.c.h.b16 %v877
    %v1844 = vunpack.c.l.b16 %v878
    %v1845 = vunpack.c.h.b16 %v878
    %v1846 = vunpack.c.l.b16 %v879
    %v1847 = vunpack.c.h.b16 %v879
    %v1848 = vunpack.c.l.b16 %v880
    %v1849 = vunpack.c.h.b16 %v880
    %v1850 = vunpack.c.l.b16 %v881
    %v1851 = vunpack.c.h.b16 %v881
    %v1852 = vunpack.c.l.b16 %v882
    %v1853 = vunpack.c.h.b16 %v882
    %v1854 = vunpack.c.l.b16 %v883
    %v1855 = vunpack.c.h.b16 %v883
    %v1856 = vunpack.c.l.b16 %v884
    %v1857 = vunpack.c.h.b16 %v884
    %v1858 = vunpack.c.l.b16 %v885
    %v1859 = vunpack.c.h.b16 %v885
    %v1860 = vunpack.c.l.b16 %v886
    %v1861 = vunpack.c.h.b16 %v886
    %v1862 = vunpack.c.l.b16 %v887
    %v1863 = vunpack.c.h.b16 %v887
    %v1864 = vunpack.c.l.b16 %v888
    %v1865 = vunpack.c.h.b16 %v888
    %v1866 = vunpack.c.l.b16 %v889
    %v1867 = vunpack.c.h.b16 %v889
    %v1868 = vunpack.c.l.b16 %v890
    %v1869 = vunpack.c.h.b16 %v890
    %v1870 = vunpack.c.l.b16 %v891
    %v1871 = vunpack.c.h.b16 %v891
    %v1872 = vunpack.c.l.b16 %v892
    %v1873 = vunpack.c.h.b16 %v892
    %v1874 = vunpack.c.l.b16 %v893
    %v1875 = vunpack.c.h.b16 %v893
    %v1876 = vunpack.c.l.b16 %v894
    %v1877 = vunpack.c.h.b16 %v894
    %v1878 = vunpack.c.l.b16 %v895
    %v1879 = vunpack.c.h.b16 %v895
    %v1880 = vunpack.c.l.b16 %v896
    %v1881 = vunpack.c.h.b16 %v896
    %v1882 = vunpack.c.l.b16 %v897
    %v1883 = vunpack.c.h.b16 %v897
    %v1884 = vunpack.c.l.b16 %v898
    %v1885 = vunpack.c.h.b16 %v898
    %v1886 = vunpack.c.l.b16 %v899
    %v1887 = vunpack.c.h.b16 %v899
    %v1888 = vunpack.c.l.b16 %v900
    %v1889 = vunpack.c.h.b16 %v900
    %v1890 = vunpack.c.l.b16 %v901
    %v1891 = vunpack.c.h.b16 %v901
    %v1892 = vunpack.c.l.b16 %v902
    %v1893 = vunpack.c.h.b16 %v902
    %v1894 = vunpack.c.l.b16 %v903
    %v1895 = vunpack.c.h.b16 %v903
    %v1896 = vunpack.c.l.b16 %v904
    %v1897 = vunpack.c.h.b16 %v904
    %v1898 = vunpack.c.l.b16 %v905
    %v1899 = vunpack.c.h.b16 %v905
    %v1900 = vunpack.c.l.b16 %v906
    %v1901 = vunpack.c.h.b16 %v906
    %v1902 = vunpack.c.l.b16 %v907
    %v1903 = vunpack.c.h.b16 %v907
    %v1904 = vunpack.c.l.b16 %v908
    %v1905 = vunpack.c.h.b16 %v908
    %v1906 = vunpack.c.l.b16 %v909
    %v1907 = vunpack.c.h.b16 %v909
    %v1908 = vunpack.c.l.b16 %v910
    %v1909 = vunpack.c.h.b16 %v910
    %v1910 = vunpack.c.l.b16 %v911
    %v1911 = vunpack.c.h.b16 %v911
    %v1912 = vunpack.c.l.b16 %v912
    %v1913 = vunpack.c.h.b16 %v912
    %v1914 = vunpack.c.l.b16 %v913
    %v1915 = vunpack.c.h.b16 %v913
    %v1916 = vunpack.c.l.b16 %v914
    %v1917 = vunpack.c.h.b16 %v914
    %v1918 = vunpack.c.l.b16 %v915
    %v1919 = vunpack.c.h.b16 %v915
    %v1920 = vunpack.c.l.b16 %v916
    %v1921 = vunpack.c.h.b16 %v916
    %v1922 = vunpack.c.l.b16 %v917
    %v1923 = vunpack.c.h.b16 %v917
    %v1924 = vunpack.c.l.b16 %v918
    %v1925 = vunpack.c.h.b16 %v918
    %v1926 = vunpack.c.l.b16 %v919
    %v1927 = vunpack.c.h.b16 %v919
    %v1928 = vunpack.c.l.b16 %v920
    %v1929 = vunpack.c.h.b16 %v920
    %v1930 = vunpack.c.l.b16 %v921
    %v1931 = vunpack.c.h.b16 %v921
    %v1932 = vunpack.c.l.b16 %v922
    %v1933 = vunpack.c.h.b16 %v922
    %v1934 = vunpack.c.l.b16 %v923
    %v1935 = vunpack.c.h.b16 %v923
    %v1936 = vunpack.c.l.b16 %v924
    %v1937 = vunpack.c.h.b16 %v924
    %v1938 = vunpack.c.l.b16 %v925
    %v1939 = vunpack.c.h.b16 %v925
    %v1940 = vunpack.c.l.b16 %v926
    %v1941 = vunpack.c.h.b16 %v926
    %v1942 = vunpack.c.l.b16 %v927
    %v1943 = vunpack.c.h.b16 %v927
    %v1944 = vunpack.c.l.b16 %v928
    %v1945 = vunpack.c.h.b16 %v928
    %v1946 = vunpack.c.l.b16 %v929
    %v1947 = vunpack.c.h.b16 %v929
    %v1948 = vunpack.c.l.b16 %v930
    %v1949 = vunpack.c.h.b16 %v930
    %v1950 = vunpack.c.l.b16 %v931
    %v1951 = vunpack.c.h.b16 %v931
    %v1952 = vunpack.c.l.b16 %v932
    %v1953 = vunpack.c.h.b16 %v932
    %v1954 = vunpack.c.l.b16 %v933
    %v1955 = vunpack.c.h.b16 %v933
    %v1956 = vunpack.c.l.b16 %v934
    %v1957 = vunpack.c.h.b16 %v934
    %v1958 = vunpack.c.l.b16 %v935
    %v1959 = vunpack.c.h.b16 %v935
    %v1960 = vunpack.c.l.b16 %v936
    %v1961 = vunpack.c.h.b16 %v936
    %v1962 = vunpack.c.l.b16 %v937
    %v1963 = vunpack.c.h.b16 %v937
    %v1964 = vunpack.c.l.b16 %v938
    %v1965 = vunpack.c.h.b16 %v938
    %v1966 = vunpack.c.l.b16 %v939
    %v1967 = vunpack.c.h.b16 %v939
    %v1968 = vunpack.c.l.b16 %v940
    %v1969 = vunpack.c.h.b16 %v940
    %v1970 = vunpack.c.l.b16 %v941
    %v1971 = vunpack.c.h.b16 %v941
    %v1972 = vunpack.c.l.b16 %v942
    %v1973 = vunpack.c.h.b16 %v942
    %v1974 = vunpack.c.l.b16 %v943
    %v1975 = vunpack.c.h.b16 %v943
    %v1976 = vunpack.c.l.b16 %v944
    %v1977 = vunpack.c.h.b16 %v944
    %v1978 = vunpack.c.l.b16 %v945
    %v1979 = vunpack.c.h.b16 %v945
    %v1980 = vunpack.c.l.b16 %v946
    %v1981 = vunpack.c.h.b16 %v946
    %v1982 = vunpack.c.l.b16 %v947
    %v1983 = vunpack.c.h.b16 %v947
    %v1984 = vunpack.c.l.b16 %v948
    %v1985 = vunpack.c.h.b16 %v948
    %v1986 = vunpack.c.l.b16 %v949
    %v1987 = vunpack.c.h.b16 %v949
    %v1988 = vunpack.c.l.b16 %v950
    %v1989 = vunpack.c.h.b16 %v950
    %v1990 = vunpack.c.l.b16 %v951
    %v1991 = vunpack.c.h.b16 %v951
    %v1992 = vunpack.c.l.b16 %v952
    %v1993 = vunpack.c.h.b16 %v952
    %v1994 = vunpack.c.l.b16 %v953
    %v1995 = vunpack.c.h.b16 %v953
    %v1996 = vunpack.c.l.b16 %v954
    %v1997 = vunpack.c.h.b16 %v954
    %v1998 = vunpack.c.l.b16 %v955
    %v1999 = vunpack.c.h.b16 %v955
    %v2000 = vunpack.c.l.b16 %v956
    %v2001 = vunpack.c.h.b16 %v956
    %v2002 = vunpack.c.l.b16 %v957
    %v2003 = vunpack.c.h.b16 %v957
    %v2004 = vunpack.c.l.b16 %v958
    %v2005 = vunpack.c.h.b16 %v958
    %v2006 = vunpack.c.l.b16 %v959
    %v2007 = vunpack.c.h.b16 %v959
    %v2008 = vunpack.c.l.b16 %v960
    %v2009 = vunpack.c.h.b16 %v960
    %v2010 = vunpack.c.l.b16 %v961
    %v2011 = vunpack.c.h.b16 %v961
    %v2012 = vunpack.c.l.b16 %v962
    %v2013 = vunpack.c.h.b16 %v962
    %v2014 = vunpack.c.l.b16 %v963
    %v2015 = vunpack.c.h.b16 %v963
    %v2016 = vunpack.c.l.b16 %v964
    %v2017 = vunpack.c.h.b16 %v964
    %v2018 = vunpack.c.l.b16 %v965
    %v2019 = vunpack.c.h.b16 %v965
    %v2020 = vunpack.c.l.b16 %v966
    %v2021 = vunpack.c.h.b16 %v966
    %v2022 = vunpack.c.l.b16 %v967
    %v2023 = vunpack.c.h.b16 %v967
    %v2024 = vunpack.c.l.b16 %v968
    %v2025 = vunpack.c.h.b16 %v968
    %v2026 = vunpack.c.l.b16 %v969
    %v2027 = vunpack.c.h.b16 %v969
    %v2028 = vunpack.c.l.b16 %v970
    %v2029 = vunpack.c.h.b16 %v970
    %v2030 = vunpack.c.l.b16 %v971
    %v2031 = vunpack.c.h.b16 %v971
    %v2032 = vunpack.c.l.b16 %v972
    %v2033 = vunpack.c.h.b16 %v972
    %v2034 = vunpack.c.l.b16 %v973
    %v2035 = vunpack.c.h.b16 %v973
    %v2036 = vunpack.c.l.b16 %v974
    %v2037 = vunpack.c.h.b16 %v974
    %v2038 = vunpack.c.l.b16 %v975
    %v2039 = vunpack.c.h.b16 %v975
    %v2040 = vunpack.c.l.b16 %v976
    %v2041 = vunpack.c.h.b16 %v976
    %v2042 = vunpack.c.l.b16 %v977
    %v2043 = vunpack.c.h.b16 %v977
    %v2044 = vunpack.c.l.b16 %v978
    %v2045 = vunpack.c.h.b16 %v978
    %v2046 = vunpack.c.l.b16 %v979
    %v2047 = vunpack.c.h.b16 %v979
    %v2048 = vunpack.c.l.b16 %v980
    %v2049 = vunpack.c.h.b16 %v980
    %v2050 = vunpack.c.l.b16 %v981
    %v2051 = vunpack.c.h.b16 %v981
    %v2052 = vunpack.c.l.b16 %v982
    %v2053 = vunpack.c.h.b16 %v982
    %v2054 = vunpack.c.l.b16 %v983
    %v2055 = vunpack.c.h.b16 %v983
    %v2056 = vunpack.c.l.b16 %v984
    %v2057 = vunpack.c.h.b16 %v984
    %v2058 = vunpack.c.l.b16 %v985
    %v2059 = vunpack.c.h.b16 %v985
    %v2060 = vunpack.c.l.b16 %v986
    %v2061 = vunpack.c.h.b16 %v986
    %v2062 = vunpack.c.l.b16 %v987
    %v2063 = vunpack.c.h.b16 %v987
    %v2064 = vunpack.c.l.b16 %v988
    %v2065 = vunpack.c.h.b16 %v988
    %v2066 = vunpack.c.l.b16 %v989
    %v2067 = vunpack.c.h.b16 %v989
    %v2068 = vunpack.c.l.b16 %v990
    %v2069 = vunpack.c.h.b16 %v990
    %v2070 = vunpack.c.l.b16 %v991
    %v2071 = vunpack.c.h.b16 %v991
    %v2072 = vunpack.c.l.b16 %v992
    %v2073 = vunpack.c.h.b16 %v992
    %v2074 = vunpack.c.l.b16 %v993
    %v2075 = vunpack.c.h.b16 %v993
    %v2076 = vunpack.c.l.b16 %v994
    %v2077 = vunpack.c.h.b16 %v994
    %v2078 = vunpack.c.l.b16 %v995
    %v2079 = vunpack.c.h.b16 %v995
    %v2080 = vunpack.c.l.b16 %v996
    %v2081 = vunpack.c.h.b16 %v996
    %v2082 = vunpack.c.l.b16 %v997
    %v2083 = vunpack.c.h.b16 %v997
    %v2084 = vunpack.c.l.b16 %v998
    %v2085 = vunpack.c.h.b16 %v998
    %v2086 = vunpack.c.l.b16 %v999
    %v2087 = vunpack.c.h.b16 %v999
    %v2088 = vunpack.c.l.b16 %v1000
    %v2089 = vunpack.c.h.b16 %v1000
    %v2090 = vunpack.c.l.b16 %v1001
    %v2091 = vunpack.c.h.b16 %v1001
    %v2092 = vunpack.c.l.b16 %v1002
    %v2093 = vunpack.c.h.b16 %v1002
    %v2094 = vunpack.c.l.b16 %v1003
    %v2095 = vunpack.c.h.b16 %v1003
    %v2096 = vunpack.c.l.b16 %v1004
    %v2097 = vunpack.c.h.b16 %v1004
    %v2098 = vunpack.c.l.b16 %v1005
    %v2099 = vunpack.c.h.b16 %v1005
    %v2100 = vunpack.c.l.b16 %v1006
    %v2101 = vunpack.c.h.b16 %v1006
    %v2102 = vunpack.c.l.b16 %v1007
    %v2103 = vunpack.c.h.b16 %v1007
    %v2104 = vunpack.c.l.b16 %v1008
    %v2105 = vunpack.c.h.b16 %v1008
    %v2106 = vunpack.c.l.b16 %v1009
    %v2107 = vunpack.c.h.b16 %v1009
    %v2108 = vunpack.c.l.b16 %v1010
    %v2109 = vunpack.c.h.b16 %v1010
    %v2110 = vunpack.c.l.b16 %v1011
    %v2111 = vunpack.c.h.b16 %v1011
    %v2112 = vunpack.c.l.b16 %v1012
    %v2113 = vunpack.c.h.b16 %v1012
    %v2114 = vunpack.c.l.b16 %v1013
    %v2115 = vunpack.c.h.b16 %v1013
    %v2116 = vunpack.c.l.b16 %v1014
    %v2117 = vunpack.c.h.b16 %v1014
    %v2118 = vunpack.c.l.b16 %v1015
    %v2119 = vunpack.c.h.b16 %v1015
    %v2120 = vunpack.c.l.b16 %v1016
    %v2121 = vunpack.c.h.b16 %v1016
    %v2122 = vunpack.c.l.b16 %v1017
    %v2123 = vunpack.c.h.b16 %v1017
    %v2124 = vunpack.c.l.b16 %v1018
    %v2125 = vunpack.c.h.b16 %v1018
    %v2126 = vunpack.c.l.b16 %v1019
    %v2127 = vunpack.c.h.b16 %v1019
    %v2128 = vunpack.c.l.b16 %v1020
    %v2129 = vunpack.c.h.b16 %v1020
    %v2130 = vunpack.c.l.b16 %v1021
    %v2131 = vunpack.c.h.b16 %v1021
    %v2132 = vunpack.c.l.b16 %v1022
    %v2133 = vunpack.c.h.b16 %v1022
    %v2134 = vunpack.c.l.b16 %v1023
    %v2135 = vunpack.c.h.b16 %v1023
    %v2136 = vunpack.c.l.b16 %v1024
    %v2137 = vunpack.c.h.b16 %v1024
    %v2138 = vunpack.c.l.b16 %v1025
    %v2139 = vunpack.c.h.b16 %v1025
    %v2140 = vunpack.c.l.b16 %v1026
    %v2141 = vunpack.c.h.b16 %v1026
    %v2142 = vunpack.c.l.b16 %v1027
    %v2143 = vunpack.c.h.b16 %v1027
    %v2144 = vunpack.c.l.b16 %v1028
    %v2145 = vunpack.c.h.b16 %v1028
    %v2146 = vunpack.c.l.b16 %v1029
    %v2147 = vunpack.c.h.b16 %v1029
    %v2148 = vunpack.c.l.b16 %v1030
    %v2149 = vunpack.c.h.b16 %v1030
    %v2150 = vunpack.c.l.b16 %v1031
    %v2151 = vunpack.c.h.b16 %v1031
    %v2152 = vunpack.c.l.b16 %v1032
    %v2153 = vunpack.c.h.b16 %v1032
    %v2154 = vunpack.c.l.b16 %v1033
    %v2155 = vunpack.c.h.b16 %v1033
    %v2156 = vunpack.c.l.b16 %v1034
    %v2157 = vunpack.c.h.b16 %v1034
    %v2158 = vunpack.c.l.b16 %v1035
    %v2159 = vunpack.c.h.b16 %v1035
    %v2160 = vunpack.c.l.b16 %v1036
    %v2161 = vunpack.c.h.b16 %v1036
    %v2162 = vunpack.c.l.b16 %v1037
    %v2163 = vunpack.c.h.b16 %v1037
    %v2164 = vunpack.c.l.b16 %v1038
    %v2165 = vunpack.c.h.b16 %v1038
    %v2166 = vunpack.c.l.b16 %v1039
    %v2167 = vunpack.c.h.b16 %v1039
    %v2168 = vunpack.c.l.b16 %v1040
    %v2169 = vunpack.c.h.b16 %v1040
    %v2170 = vunpack.c.l.b16 %v1041
    %v2171 = vunpack.c.h.b16 %v1041
    %v2172 = vunpack.c.l.b16 %v1042
    %v2173 = vunpack.c.h.b16 %v1042
    %v2174 = vunpack.c.l.b16 %v1043
    %v2175 = vunpack.c.h.b16 %v1043
    %v2176 = vunpack.c.l.b16 %v1044
    %v2177 = vunpack.c.h.b16 %v1044
    %v2178 = vunpack.c.l.b16 %v1045
    %v2179 = vunpack.c.h.b16 %v1045
    %v2180 = vunpack.c.l.b16 %v1046
    %v2181 = vunpack.c.h.b16 %v1046
    %v2182 = vunpack.c.l.b16 %v1047
    %v2183 = vunpack.c.h.b16 %v1047
    %v2184 = vunpack.c.l.b16 %v1048
    %v2185 = vunpack.c.h.b16 %v1048
    %v2186 = vunpack.c.l.b16 %v1049
    %v2187 = vunpack.c.h.b16 %v1049
    %v2188 = vunpack.c.l.b16 %v1050
    %v2189 = vunpack.c.h.b16 %v1050
    %v2190 = vunpack.c.l.b16 %v1051
    %v2191 = vunpack.c.h.b16 %v1051
    %v2192 = vunpack.c.l.b16 %v1052
    %v2193 = vunpack.c.h.b16 %v1052
    %v2194 = vunpack.c.l.b16 %v1053
    %v2195 = vunpack.c.h.b16 %v1053
    %v2196 = vunpack.c.l.b16 %v1054
    %v2197 = vunpack.c.h.b16 %v1054
    %v2198 = vunpack.c.l.b16 %v1055
    %v2199 = vunpack.c.h.b16 %v1055
    %v2200 = vunpack.c.l.b16 %v1056
    %v2201 = vunpack.c.h.b16 %v1056
    %v2202 = vunpack.c.l.b16 %v1057
    %v2203 = vunpack.c.h.b16 %v1057
    %v2204 = vunpack.c.l.b16 %v1058
    %v2205 = vunpack.c.h.b16 %v1058
    %v2206 = vunpack.c.l.b16 %v1059
    %v2207 = vunpack.c.h.b16 %v1059
    %v2208 = vunpack.c.l.b16 %v1060
    %v2209 = vunpack.c.h.b16 %v1060
    %v2210 = vunpack.c.l.b16 %v1061
    %v2211 = vunpack.c.h.b16 %v1061
    %v2212 = vunpack.c.l.b16 %v1062
    %v2213 = vunpack.c.h.b16 %v1062
    %v2214 = vunpack.c.l.b16 %v1063
    %v2215 = vunpack.c.h.b16 %v1063
    %v2216 = vunpack.c.l.b16 %v1064
    %v2217 = vunpack.c.h.b16 %v1064
    %v2218 = vunpack.c.l.b16 %v1065
    %v2219 = vunpack.c.h.b16 %v1065
    %v2220 = vunpack.c.l.b16 %v1066
    %v2221 = vunpack.c.h.b16 %v1066
    %v2222 = vunpack.c.l.b16 %v1067
    %v2223 = vunpack.c.h.b16 %v1067
    %v2224 = vunpack.c.l.b16 %v1068
    %v2225 = vunpack.c.h.b16 %v1068
    %v2226 = vunpack.c.l.b16 %v1069
    %v2227 = vunpack.c.h.b16 %v1069
    %v2228 = vunpack.c.l.b16 %v1070
    %v2229 = vunpack.c.h.b16 %v1070
    %v2230 = vunpack.c.l.b16 %v1071
    %v2231 = vunpack.c.h.b16 %v1071
    %v2232 = vunpack.c.l.b16 %v1072
    %v2233 = vunpack.c.h.b16 %v1072
    %v2234 = vunpack.c.l.b16 %v1073
    %v2235 = vunpack.c.h.b16 %v1073
    %v2236 = vunpack.c.l.b16 %v1074
    %v2237 = vunpack.c.h.b16 %v1074
    %v2238 = vunpack.c.l.b16 %v1075
    %v2239 = vunpack.c.h.b16 %v1075
    %v2240 = vunpack.c.l.b16 %v1076
    %v2241 = vunpack.c.h.b16 %v1076
    %v2242 = vunpack.c.l.b16 %v1077
    %v2243 = vunpack.c.h.b16 %v1077
    %v2244 = vunpack.c.l.b16 %v1078
    %v2245 = vunpack.c.h.b16 %v1078
    %v2246 = vunpack.c.l.b16 %v1079
    %v2247 = vunpack.c.h.b16 %v1079
    %v2248 = vunpack.c.l.b16 %v1080
    %v2249 = vunpack.c.h.b16 %v1080
    %v2250 = vunpack.c.l.b16 %v1081
    %v2251 = vunpack.c.h.b16 %v1081
    %v2252 = vunpack.c.l.b16 %v1082
    %v2253 = vunpack.c.h.b16 %v1082
    %v2254 = vunpack.c.l.b16 %v1083
    %v2255 = vunpack.c.h.b16 %v1083
    %v2256 = vunpack.c.l.b16 %v1084
    %v2257 = vunpack.c.h.b16 %v1084
    %v2258 = vunpack.c.l.b16 %v1085
    %v2259 = vunpack.c.h.b16 %v1085
    %v2260 = vunpack.c.l.b16 %v1086
    %v2261 = vunpack.c.h.b16 %v1086
    %v2262 = vunpack.c.l.b16 %v1087
    %v2263 = vunpack.c.h.b16 %v1087
    %v2264 = vunpack.c.l.b16 %v1088
    %v2265 = vunpack.c.h.b16 %v1088
    %v2266 = vunpack.c.l.b16 %v1089
    %v2267 = vunpack.c.h.b16 %v1089
    %v2268 = vunpack.c.l.b16 %v1090
    %v2269 = vunpack.c.h.b16 %v1090
    %v2270 = vunpack.c.l.b16 %v1091
    %v2271 = vunpack.c.h.b16 %v1091
    %v2272 = vunpack.c.l.b16 %v1092
    %v2273 = vunpack.c.h.b16 %v1092
    %v2274 = vunpack.c.l.b16 %v1093
    %v2275 = vunpack.c.h.b16 %v1093
    %v2276 = vunpack.c.l.b16 %v1094
    %v2277 = vunpack.c.h.b16 %v1094
    %v2278 = vunpack.c.l.b16 %v1095
    %v2279 = vunpack.c.h.b16 %v1095
    %v2280 = vunpack.c.l.b16 %v1096
    %v2281 = vunpack.c.h.b16 %v1096
    %v2282 = vunpack.c.l.b16 %v1097
    %v2283 = vunpack.c.h.b16 %v1097
    %v2284 = vunpack.c.l.b16 %v1098
    %v2285 = vunpack.c.h.b16 %v1098
    %v2286 = vunpack.c.l.b16 %v1099
    %v2287 = vunpack.c.h.b16 %v1099
    %v2288 = vunpack.c.l.b16 %v1100
    %v2289 = vunpack.c.h.b16 %v1100
    %v2290 = vunpack.c.l.b16 %v1101
    %v2291 = vunpack.c.h.b16 %v1101
    %v2292 = vunpack.c.l.b16 %v1102
    %v2293 = vunpack.c.h.b16 %v1102
    %v2294 = vunpack.c.l.b16 %v1103
    %v2295 = vunpack.c.h.b16 %v1103
    %v2296 = vunpack.c.l.b16 %v1104
    %v2297 = vunpack.c.h.b16 %v1104
    %v2298 = vunpack.c.l.b16 %v1105
    %v2299 = vunpack.c.h.b16 %v1105
    %v2300 = vpack.c.b16 %v1540, %v1532
    %v2301 = vpack.c.b16 %v1541, %v1533
    %v2302 = vpack.c.b16 %v1542, %v1534
    %v2303 = vpack.c.b16 %v1543, %v1535
    %v2304 = vpack.c.b16 %v1544, %v1536
    %v2305 = vpack.c.b16 %v1545, %v1537
    %v2306 = vpack.c.b16 %v1546, %v1538
    %v2307 = vpack.c.b16 %v1547, %v1539
    %v2308 = vpack.c.b16 %v1556, %v1548
    %v2309 = vpack.c.b16 %v1557, %v1549
    %v2310 = vpack.c.b16 %v1558, %v1550
    %v2311 = vpack.c.b16 %v1559, %v1551
    %v2312 = vpack.c.b16 %v1560, %v1552
    %v2313 = vpack.c.b16 %v1561, %v1553
    %v2314 = vpack.c.b16 %v1562, %v1554
    %v2315 = vpack.c.b16 %v1563, %v1555
    %v2316 = vpack.c.b16 %v1572, %v1564
    %v2317 = vpack.c.b16 %v1573, %v1565
    %v2318 = vpack.c.b16 %v1574, %v1566
    %v2319 = vpack.c.b16 %v1575, %v1567
    %v2320 = vpack.c.b16 %v1576, %v1568
    %v2321 = vpack.c.b16 %v1577, %v1569
    %v2322 = vpack.c.b16 %v1578, %v1570
    %v2323 = vpack.c.b16 %v1579, %v1571
    %v2324 = vpack.c.b16 %v1588, %v1580
    %v2325 = vpack.c.b16 %v1589, %v1581
    %v2326 = vpack.c.b16 %v1590, %v1582
    %v2327 = vpack.c.b16 %v1591, %v1583
    %v2328 = vpack.c.b16 %v1592, %v1584
    %v2329 = vpack.c.b16 %v1593, %v1585
    %v2330 = vpack.c.b16 %v1594, %v1586
    %v2331 = vpack.c.b16 %v1595, %v1587
    %v2332 = vpack.c.b16 %v1604, %v1596
    %v2333 = vpack.c.b16 %v1605, %v1597
    %v2334 = vpack.c.b16 %v1606, %v1598
    %v2335 = vpack.c.b16 %v1607, %v1599
    %v2336 = vpack.c.b16 %v1608, %v1600
    %v2337 = vpack.c.b16 %v1609, %v1601
    %v2338 = vpack.c.b16 %v1610, %v1602
    %v2339 = vpack.c.b16 %v1611, %v1603
    %v2340 = vpack.c.b16 %v1620, %v1612
    %v2341 = vpack.c.b16 %v1621, %v1613
    %v2342 = vpack.c.b16 %v1622, %v1614
    %v2343 = vpack.c.b16 %v1623, %v1615
    %v2344 = vpack.c.b16 %v1624, %v1616
    %v2345 = vpack.c.b16 %v1625, %v1617
    %v2346 = vpack.c.b16 %v1626, %v1618
    %v2347 = vpack.c.b16 %v1627, %v1619
    %v2348 = vpack.c.b16 %v1636, %v1628
    %v2349 = vpack.c.b16 %v1637, %v1629
    %v2350 = vpack.c.b16 %v1638, %v1630
    %v2351 = vpack.c.b16 %v1639, %v1631
    %v2352 = vpack.c.b16 %v1640, %v1632
    %v2353 = vpack.c.b16 %v1641, %v1633
    %v2354 = vpack.c.b16 %v1642, %v1634
    %v2355 = vpack.c.b16 %v1643, %v1635
    %v2356 = vpack.c.b16 %v1652, %v1644
    %v2357 = vpack.c.b16 %v1653, %v1645
    %v2358 = vpack.c.b16 %v1654, %v1646
    %v2359 = vpack.c.b16 %v1655, %v1647
    %v2360 = vpack.c.b16 %v1656, %v1648
    %v2361 = vpack.c.b16 %v1657, %v1649
    %v2362 = vpack.c.b16 %v1658, %v1650
    %v2363 = vpack.c.b16 %v1659, %v1651
    %v2364 = vpack.c.b16 %v1668, %v1660
    %v2365 = vpack.c.b16 %v1669, %v1661
    %v2366 = vpack.c.b16 %v1670, %v1662
    %v2367 = vpack.c.b16 %v1671, %v1663
    %v2368 = vpack.c.b16 %v1672, %v1664
    %v2369 = vpack.c.b16 %v1673, %v1665
    %v2370 = vpack.c.b16 %v1674, %v1666
    %v2371 = vpack.c.b16 %v1675, %v1667
    %v2372 = vpack.c.b16 %v1684, %v1676
    %v2373 = vpack.c.b16 %v1685, %v1677
    %v2374 = vpack.c.b16 %v1686, %v1678
    %v2375 = vpack.c.b16 %v1687, %v1679
    %v2376 = vpack.c.b16 %v1688, %v1680
    %v2377 = vpack.c.b16 %v1689, %v1681
    %v2378 = vpack.c.b16 %v1690, %v1682
    %v2379 = vpack.c.b16 %v1691, %v1683
    %v2380 = vpack.c.b16 %v1700, %v1692
    %v2381 = vpack.c.b16 %v1701, %v1693
    %v2382 = vpack.c.b16 %v1702, %v1694
    %v2383 = vpack.c.b16 %v1703, %v1695
    %v2384 = vpack.c.b16 %v1704, %v1696
    %v2385 = vpack.c.b16 %v1705, %v1697
    %v2386 = vpack.c.b16 %v1706, %v1698
    %v2387 = vpack.c.b16 %v1707, %v1699
    %v2388 = vpack.c.b16 %v1716, %v1708
    %v2389 = vpack.c.b16 %v1717, %v1709
    %v2390 = vpack.c.b16 %v1718, %v1710
    %v2391 = vpack.c.b16 %v1719, %v1711
    %v2392 = vpack.c.b16 %v1720, %v1712
    %v2393 = vpack.c.b16 %v1721, %v1713
    %v2394 = vpack.c.b16 %v1722, %v1714
    %v2395 = vpack.c.b16 %v1723, %v1715
    %v2396 = vpack.c.b16 %v1732, %v1724
    %v2397 = vpack.c.b16 %v1733, %v1725
    %v2398 = vpack.c.b16 %v1734, %v1726
    %v2399 = vpack.c.b16 %v1735, %v1727
    %v2400 = vpack.c.b16 %v1736, %v1728
    %v2401 = vpack.c.b16 %v1737, %v1729
    %v2402 = vpack.c.b16 %v1738, %v1730
    %v2403 = vpack.c.b16 %v1739, %v1731
    %v2404 = vpack.c.b16 %v1748, %v1740
    %v2405 = vpack.c.b16 %v1749, %v1741
    %v2406 = vpack.c.b16 %v1750, %v1742
    %v2407 = vpack.c.b16 %v1751, %v1743
    %v2408 = vpack.c.b16 %v1752, %v1744
    %v2409 = vpack.c.b16 %v1753, %v1745
    %v2410 = vpack.c.b16 %v1754, %v1746
    %v2411 = vpack.c.b16 %v1755, %v1747
    %v2412 = vpack.c.b16 %v1764, %v1756
    %v2413 = vpack.c.b16 %v1765, %v1757
    %v2414 = vpack.c.b16 %v1766, %v1758
    %v2415 = vpack.c.b16 %v1767, %v1759
    %v2416 = vpack.c.b16 %v1768, %v1760
    %v2417 = vpack.c.b16 %v1769, %v1761
    %v2418 = vpack.c.b16 %v1770, %v1762
    %v2419 = vpack.c.b16 %v1771, %v1763
    %v2420 = vpack.c.b16 %v1780, %v1772
    %v2421 = vpack.c.b16 %v1781, %v1773
    %v2422 = vpack.c.b16 %v1782, %v1774
    %v2423 = vpack.c.b16 %v1783, %v1775
    %v2424 = vpack.c.b16 %v1784, %v1776
    %v2425 = vpack.c.b16 %v1785, %v1777
    %v2426 = vpack.c.b16 %v1786, %v1778
    %v2427 = vpack.c.b16 %v1787, %v1779
    %v2428 = vpack.c.b16 %v1796, %v1788
    %v2429 = vpack.c.b16 %v1797, %v1789
    %v2430 = vpack.c.b16 %v1798, %v1790
    %v2431 = vpack.c.b16 %v1799, %v1791
    %v2432 = vpack.c.b16 %v1800, %v1792
    %v2433 = vpack.c.b16 %v1801, %v1793
    %v2434 = vpack.c.b16 %v1802, %v1794
    %v2435 = vpack.c.b16 %v1803, %v1795
    %v2436 = vpack.c.b16 %v1812, %v1804
    %v2437 = vpack.c.b16 %v1813, %v1805
    %v2438 = vpack.c.b16 %v1814, %v1806
    %v2439 = vpack.c.b16 %v1815, %v1807
    %v2440 = vpack.c.b16 %v1816, %v1808
    %v2441 = vpack.c.b16 %v1817, %v1809
    %v2442 = vpack.c.b16 %v1818, %v1810
    %v2443 = vpack.c.b16 %v1819, %v1811
    %v2444 = vpack.c.b16 %v1828, %v1820
    %v2445 = vpack.c.b16 %v1829, %v1821
    %v2446 = vpack.c.b16 %v1830, %v1822
    %v2447 = vpack.c.b16 %v1831, %v1823
    %v2448 = vpack.c.b16 %v1832, %v1824
    %v2449 = vpack.c.b16 %v1833, %v1825
    %v2450 = vpack.c.b16 %v1834, %v1826
    %v2451 = vpack.c.b16 %v1835, %v1827
    %v2452 = vpack.c.b16 %v1844, %v1836
    %v2453 = vpack.c.b16 %v1845, %v1837
    %v2454 = vpack.c.b16 %v1846, %v1838
    %v2455 = vpack.c.b16 %v1847, %v1839
    %v2456 = vpack.c.b16 %v1848, %v1840
    %v2457 = vpack.c.b16 %v1849, %v1841
    %v2458 = vpack.c.b16 %v1850, %v1842
    %v2459 = vpack.c.b16 %v1851, %v1843
    %v2460 = vpack.c.b16 %v1860, %v1852
    %v2461 = vpack.c.b16 %v1861, %v1853
    %v2462 = vpack.c.b16 %v1862, %v1854
    %v2463 = vpack.c.b16 %v1863, %v1855
    %v2464 = vpack.c.b16 %v1864, %v1856
    %v2465 = vpack.c.b16 %v1865, %v1857
    %v2466 = vpack.c.b16 %v1866, %v1858
    %v2467 = vpack.c.b16 %v1867, %v1859
    %v2468 = vpack.c.b16 %v1876, %v1868
    %v2469 = vpack.c.b16 %v1877, %v1869
    %v2470 = vpack.c.b16 %v1878, %v1870
    %v2471 = vpack.c.b16 %v1879, %v1871
    %v2472 = vpack.c.b16 %v1880, %v1872
    %v2473 = vpack.c.b16 %v1881, %v1873
    %v2474 = vpack.c.b16 %v1882, %v1874
    %v2475 = vpack.c.b16 %v1883, %v1875
    %v2476 = vpack.c.b16 %v1892, %v1884
    %v2477 = vpack.c.b16 %v1893, %v1885
    %v2478 = vpack.c.b16 %v1894, %v1886
    %v2479 = vpack.c.b16 %v1895, %v1887
    %v2480 = vpack.c.b16 %v1896, %v1888
    %v2481 = vpack.c.b16 %v1897, %v1889
    %v2482 = vpack.c.b16 %v1898, %v1890
    %v2483 = vpack.c.b16 %v1899, %v1891
    %v2484 = vpack.c.b16 %v1908, %v1900
    %v2485 = vpack.c.b16 %v1909, %v1901
    %v2486 = vpack.c.b16 %v1910, %v1902
    %v2487 = vpack.c.b16 %v1911, %v1903
    %v2488 = vpack.c.b16 %v1912, %v1904
    %v2489 = vpack.c.b16 %v1913, %v1905
    %v2490 = vpack.c.b16 %v1914, %v1906
    %v2491 = vpack.c.b16 %v1915, %v1907
    %v2492 = vpack.c.b16 %v1924, %v1916
    %v2493 = vpack.c.b16 %v1925, %v1917
    %v2494 = vpack.c.b16 %v1926, %v1918
    %v2495 = vpack.c.b16 %v1927, %v1919
    %v2496 = vpack.c.b16 %v1928, %v1920
    %v2497 = vpack.c.b16 %v1929, %v1921
    %v2498 = vpack.c.b16 %v1930, %v1922
    %v2499 = vpack.c.b16 %v1931, %v1923
    %v2500 = vpack.c.b16 %v1940, %v1932
    %v2501 = vpack.c.b16 %v1941, %v1933
    %v2502 = vpack.c.b16 %v1942, %v1934
    %v2503 = vpack.c.b16 %v1943, %v1935
    %v2504 = vpack.c.b16 %v1944, %v1936
    %v2505 = vpack.c.b16 %v1945, %v1937
    %v2506 = vpack.c.b16 %v1946, %v1938
    %v2507 = vpack.c.b16 %v1947, %v1939
    %v2508 = vpack.c.b16 %v1956, %v1948
    %v2509 = vpack.c.b16 %v1957, %v1949
    %v2510 = vpack.c.b16 %v1958, %v1950
    %v2511 = vpack.c.b16 %v1959, %v1951
    %v2512 = vpack.c.b16 %v1960, %v1952
    %v2513 = vpack.c.b16 %v1961, %v1953
    %v2514 = vpack.c.b16 %v1962, %v1954
    %v2515 = vpack.c.b16 %v1963, %v1955
    %v2516 = vpack.c.b16 %v1972, %v1964
    %v2517 = vpack.c.b16 %v1973, %v1965
    %v2518 = vpack.c.b16 %v1974, %v1966
    %v2519 = vpack.c.b16 %v1975, %v1967
    %v2520 = vpack.c.b16 %v1976, %v1968
    %v2521 = vpack.c.b16 %v1977, %v1969
    %v2522 = vpack.c.b16 %v1978, %v1970
    %v2523 = vpack.c.b16 %v1979, %v1971
    %v2524 = vpack.c.b16 %v1988, %v1980
    %v2525 = vpack.c.b16 %v1989, %v1981
    %v2526 = vpack.c.b16 %v1990, %v1982
    %v2527 = vpack.c.b16 %v1991, %v1983
    %v2528 = vpack.c.b16 %v1992, %v1984
    %v2529 = vpack.c.b16 %v1993, %v1985
    %v2530 = vpack.c.b16 %v1994, %v1986
    %v2531 = vpack.c.b16 %v1995, %v1987
    %v2532 = vpack.c.b16 %v2004, %v1996
    %v2533 = vpack.c.b16 %v2005, %v1997
    %v2534 = vpack.c.b16 %v2006, %v1998
    %v2535 = vpack.c.b16 %v2007, %v1999
    %v2536 = vpack.c.b16 %v2008, %v2000
    %v2537 = vpack.c.b16 %v2009, %v2001
    %v2538 = vpack.c.b16 %v2010, %v2002
    %v2539 = vpack.c.b16 %v2011, %v2003
    %v2540 = vpack.c.b16 %v2020, %v2012
    %v2541 = vpack.c.b16 %v2021, %v2013
    %v2542 = vpack.c.b16 %v2022, %v2014
    %v2543 = vpack.c.b16 %v2023, %v2015
    %v2544 = vpack.c.b16 %v2024, %v2016
    %v2545 = vpack.c.b16 %v2025, %v2017
    %v2546 = vpack.c.b16 %v2026, %v2018
    %v2547 = vpack.c.b16 %v2027, %v2019
    %v2548 = vpack.c.b16 %v2036, %v2028
    %v2549 = vpack.c.b16 %v2037, %v2029
    %v2550 = vpack.c.b16 %v2038, %v2030
    %v2551 = vpack.c.b16 %v2039, %v2031
    %v2552 = vpack.c.b16 %v2040, %v2032
    %v2553 = vpack.c.b16 %v2041, %v2033
    %v2554 = vpack.c.b16 %v2042, %v2034
    %v2555 = vpack.c.b16 %v2043, %v2035
    %v2556 = vpack.c.b16 %v2052, %v2044
    %v2557 = vpack.c.b16 %v2053, %v2045
    %v2558 = vpack.c.b16 %v2054, %v2046
    %v2559 = vpack.c.b16 %v2055, %v2047
    %v2560 = vpack.c.b16 %v2056, %v2048
    %v2561 = vpack.c.b16 %v2057, %v2049
    %v2562 = vpack.c.b16 %v2058, %v2050
    %v2563 = vpack.c.b16 %v2059, %v2051
    %v2564 = vpack.c.b16 %v2068, %v2060
    %v2565 = vpack.c.b16 %v2069, %v2061
    %v2566 = vpack.c.b16 %v2070, %v2062
    %v2567 = vpack.c.b16 %v2071, %v2063
    %v2568 = vpack.c.b16 %v2072, %v2064
    %v2569 = vpack.c.b16 %v2073, %v2065
    %v2570 = vpack.c.b16 %v2074, %v2066
    %v2571 = vpack.c.b16 %v2075, %v2067
    %v2572 = vpack.c.b16 %v2084, %v2076
    %v2573 = vpack.c.b16 %v2085, %v2077
    %v2574 = vpack.c.b16 %v2086, %v2078
    %v2575 = vpack.c.b16 %v2087, %v2079
    %v2576 = vpack.c.b16 %v2088, %v2080
    %v2577 = vpack.c.b16 %v2089, %v2081
    %v2578 = vpack.c.b16 %v2090, %v2082
    %v2579 = vpack.c.b16 %v2091, %v2083
    %v2580 = vpack.c.b16 %v2100, %v2092
    %v2581 = vpack.c.b16 %v2101, %v2093
    %v2582 = vpack.c.b16 %v2102, %v2094
    %v2583 = vpack.c.b16 %v2103, %v2095
    %v2584 = vpack.c.b16 %v2104, %v2096
    %v2585 = vpack.c.b16 %v2105, %v2097
    %v2586 = vpack.c.b16 %v2106, %v2098
    %v2587 = vpack.c.b16 %v2107, %v2099
    %v2588 = vpack.c.b16 %v2116, %v2108
    %v2589 = vpack.c.b16 %v2117, %v2109
    %v2590 = vpack.c.b16 %v2118, %v2110
    %v2591 = vpack.c.b16 %v2119, %v2111
    %v2592 = vpack.c.b16 %v2120, %v2112
    %v2593 = vpack.c.b16 %v2121, %v2113
    %v2594 = vpack.c.b16 %v2122, %v2114
    %v2595 = vpack.c.b16 %v2123, %v2115
    %v2596 = vpack.c.b16 %v2132, %v2124
    %v2597 = vpack.c.b16 %v2133, %v2125
    %v2598 = vpack.c.b16 %v2134, %v2126
    %v2599 = vpack.c.b16 %v2135, %v2127
    %v2600 = vpack.c.b16 %v2136, %v2128
    %v2601 = vpack.c.b16 %v2137, %v2129
    %v2602 = vpack.c.b16 %v2138, %v2130
    %v2603 = vpack.c.b16 %v2139, %v2131
    %v2604 = vpack.c.b16 %v2148, %v2140
    %v2605 = vpack.c.b16 %v2149, %v2141
    %v2606 = vpack.c.b16 %v2150, %v2142
    %v2607 = vpack.c.b16 %v2151, %v2143
    %v2608 = vpack.c.b16 %v2152, %v2144
    %v2609 = vpack.c.b16 %v2153, %v2145
    %v2610 = vpack.c.b16 %v2154, %v2146
    %v2611 = vpack.c.b16 %v2155, %v2147
    %v2612 = vpack.c.b16 %v2164, %v2156
    %v2613 = vpack.c.b16 %v2165, %v2157
    %v2614 = vpack.c.b16 %v2166, %v2158
    %v2615 = vpack.c.b16 %v2167, %v2159
    %v2616 = vpack.c.b16 %v2168, %v2160
    %v2617 = vpack.c.b16 %v2169, %v2161
    %v2618 = vpack.c.b16 %v2170, %v2162
    %v2619 = vpack.c.b16 %v2171, %v2163
    %v2620 = vpack.c.b16 %v2180, %v2172
    %v2621 = vpack.c.b16 %v2181, %v2173
    %v2622 = vpack.c.b16 %v2182, %v2174
    %v2623 = vpack.c.b16 %v2183, %v2175
    %v2624 = vpack.c.b16 %v2184, %v2176
    %v2625 = vpack.c.b16 %v2185, %v2177
    %v2626 = vpack.c.b16 %v2186, %v2178
    %v2627 = vpack.c.b16 %v2187, %v2179
    %v2628 = vpack.c.b16 %v2196, %v2188
    %v2629 = vpack.c.b16 %v2197, %v2189
    %v2630 = vpack.c.b16 %v2198, %v2190
    %v2631 = vpack.c.b16 %v2199, %v2191
    %v2632 = vpack.c.b16 %v2200, %v2192
    %v2633 = vpack.c.b16 %v2201, %v2193
    %v2634 = vpack.c.b16 %v2202, %v2194
    %v2635 = vpack.c.b16 %v2203, %v2195
    %v2636 = vpack.c.b16 %v2212, %v2204
    %v2637 = vpack.c.b16 %v2213, %v2205
    %v2638 = vpack.c.b16 %v2214, %v2206
    %v2639 = vpack.c.b16 %v2215, %v2207
    %v2640 = vpack.c.b16 %v2216, %v2208
    %v2641 = vpack.c.b16 %v2217, %v2209
    %v2642 = vpack.c.b16 %v2218, %v2210
    %v2643 = vpack.c.b16 %v2219, %v2211
    %v2644 = vpack.c.b16 %v2228, %v2220
    %v2645 = vpack.c.b16 %v2229, %v2221
    %v2646 = vpack.c.b16 %v2230, %v2222
    %v2647 = vpack.c.b16 %v2231, %v2223
    %v2648 = vpack.c.b16 %v2232, %v2224
    %v2649 = vpack.c.b16 %v2233, %v2225
    %v2650 = vpack.c.b16 %v2234, %v2226
    %v2651 = vpack.c.b16 %v2235, %v2227
    %v2652 = vpack.c.b16 %v2244, %v2236
    %v2653 = vpack.c.b16 %v2245, %v2237
    %v2654 = vpack.c.b16 %v2246, %v2238
    %v2655 = vpack.c.b16 %v2247, %v2239
    %v2656 = vpack.c.b16 %v2248, %v2240
    %v2657 = vpack.c.b16 %v2249, %v2241
    %v2658 = vpack.c.b16 %v2250, %v2242
    %v2659 = vpack.c.b16 %v2251, %v2243
    %v2660 = vpack.c.b16 %v2260, %v2252
    %v2661 = vpack.c.b16 %v2261, %v2253
    %v2662 = vpack.c.b16 %v2262, %v2254
    %v2663 = vpack.c.b16 %v2263, %v2255
    %v2664 = vpack.c.b16 %v2264, %v2256
    %v2665 = vpack.c.b16 %v2265, %v2257
    %v2666 = vpack.c.b16 %v2266, %v2258
    %v2667 = vpack.c.b16 %v2267, %v2259
    %v2668 = vpack.c.b16 %v2276, %v2268
    %v2669 = vpack.c.b16 %v2277, %v2269
    %v2670 = vpack.c.b16 %v2278, %v2270
    %v2671 = vpack.c.b16 %v2279, %v2271
    %v2672 = vpack.c.b16 %v2280, %v2272
    %v2673 = vpack.c.b16 %v2281, %v2273
    %v2674 = vpack.c.b16 %v2282, %v2274
    %v2675 = vpack.c.b16 %v2283, %v2275
    %v2676 = vpack.c.b16 %v2292, %v2284
    %v2677 = vpack.c.b16 %v2293, %v2285
    %v2678 = vpack.c.b16 %v2294, %v2286
    %v2679 = vpack.c.b16 %v2295, %v2287
    %v2680 = vpack.c.b16 %v2296, %v2288
    %v2681 = vpack.c.b16 %v2297, %v2289
    %v2682 = vpack.c.b16 %v2298, %v2290
    %v2683 = vpack.c.b16 %v2299, %v2291
    %3068 = vmatprep.subr.bf16.mxu0 %v2301
    %3069 = vmatpush1.bf16.msra.mxu0 %v2300
    %3070 = vmatprep.subr.bf16.mxu0 %v2309
    %3071 = vmatpush1.bf16.msra.mxu0 %v2308
    %3072 = vmatprep.subr.bf16.mxu0 %v2317
    %3073 = vmatpush1.bf16.msra.mxu0 %v2316
    %3074 = vmatprep.subr.bf16.mxu0 %v2325
    %3075 = vmatpush1.bf16.msra.mxu0 %v2324
    %3076 = vmatprep.subr.bf16.mxu0 %v2333
    %3077 = vmatpush1.bf16.msra.mxu0 %v2332
    %3078 = vmatprep.subr.bf16.mxu0 %v2341
    %3079 = vmatpush1.bf16.msra.mxu0 %v2340
    %3080 = vmatprep.subr.bf16.mxu0 %v2349
    %3081 = vmatpush1.bf16.msra.mxu0 %v2348
    %3082 = vmatprep.subr.bf16.mxu0 %v2357
    %3083 = vmatpush1.bf16.msra.mxu0 %v2356
    %3084 = vmatprep.subr.bf16.mxu0 %v2365
    %3085 = vmatpush1.bf16.msra.mxu0 %v2364
    %3086 = vmatprep.subr.bf16.mxu0 %v2373
    %3087 = vmatpush1.bf16.msra.mxu0 %v2372
    %3088 = vmatprep.subr.bf16.mxu0 %v2381
    %3089 = vmatpush1.bf16.msra.mxu0 %v2380
    %3090 = vmatprep.subr.bf16.mxu0 %v2389
    %3091 = vmatpush1.bf16.msra.mxu0 %v2388
    %3092 = vmatprep.subr.bf16.mxu0 %v2397
    %3093 = vmatpush1.bf16.msra.mxu0 %v2396
    %3094 = vmatprep.subr.bf16.mxu0 %v2405
    %3095 = vmatpush1.bf16.msra.mxu0 %v2404
    %3096 = vmatprep.subr.bf16.mxu0 %v2413
    %3097 = vmatpush1.bf16.msra.mxu0 %v2412
    %3098 = vmatprep.subr.bf16.mxu0 %v2421
    %3099 = vmatpush1.bf16.msra.mxu0 %v2420
    %3100 = vmatprep.mubr.bf16.mxu0 %v717
    %3101 = vmatmul.mubr.bf16.gmra.mrb[0].mxu0 %v716
    %v3102 = vpop.f32.mrb[0].mxu0
    %v3103 = vadd.f32 %v1111, %v3102
    %v3104 = vpop.f32.mrb[0].mxu0
    %v3105 = vadd.f32 %v1115, %v3104
    %v3106 = vpop.f32.mrb[0].mxu0
    %v3107 = vadd.f32 %v1111, %v3106
    %v3108 = vpop.f32.mrb[0].mxu0
    %v3109 = vadd.f32 %v1115, %v3108
    %3110 = vdwg.mxu0
    %3111 = vmatprep.subr.bf16.mxu0 %v2429
    %3112 = vmatpush1.bf16.msra.mxu0 %v2428
    %3113 = vmatprep.subr.bf16.mxu0 %v2437
    %3114 = vmatpush1.bf16.msra.mxu0 %v2436
    %3115 = vmatprep.subr.bf16.mxu0 %v2445
    %3116 = vmatpush1.bf16.msra.mxu0 %v2444
    %3117 = vmatprep.subr.bf16.mxu0 %v2453
    %3118 = vmatpush1.bf16.msra.mxu0 %v2452
    %3119 = vmatprep.subr.bf16.mxu0 %v2461
    %3120 = vmatpush1.bf16.msra.mxu0 %v2460
    %3121 = vmatprep.subr.bf16.mxu0 %v2469
    %3122 = vmatpush1.bf16.msra.mxu0 %v2468
    %3123 = vmatprep.subr.bf16.mxu0 %v2477
    %3124 = vmatpush1.bf16.msra.mxu0 %v2476
    %3125 = vmatprep.subr.bf16.mxu0 %v2485
    %3126 = vmatpush1.bf16.msra.mxu0 %v2484
    %3127 = vmatprep.subr.bf16.mxu0 %v2493
    %3128 = vmatpush1.bf16.msra.mxu0 %v2492
    %3129 = vmatprep.subr.bf16.mxu0 %v2501
    %3130 = vmatpush1.bf16.msra.mxu0 %v2500
    %3131 = vmatprep.subr.bf16.mxu0 %v2509
    %3132 = vmatpush1.bf16.msra.mxu0 %v2508
    %3133 = vmatprep.subr.bf16.mxu0 %v2517
    %3134 = vmatpush1.bf16.msra.mxu0 %v2516
    %3135 = vmatprep.subr.bf16.mxu0 %v2525
    %3136 = vmatpush1.bf16.msra.mxu0 %v2524
    %3137 = vmatprep.subr.bf16.mxu0 %v2533
    %3138 = vmatpush1.bf16.msra.mxu0 %v2532
    %3139 = vmatprep.subr.bf16.mxu0 %v2541
    %3140 = vmatpush1.bf16.msra.mxu0 %v2540
    %3141 = vmatprep.subr.bf16.mxu0 %v2549
    %3142 = vmatpush1.bf16.msra.mxu0 %v2548
    %3143 = vmatprep.mubr.bf16.mxu0 %v719
    %3144 = vmatmul.mubr.bf16.gmra.mrb[0].mxu0 %v718
    %v3145 = vpop.f32.mrb[0].mxu0
    %v3146 = vadd.f32 %v3103, %v3145
    %v3147 = vpop.f32.mrb[0].mxu0
    %v3148 = vadd.f32 %v3105, %v3147
    %v3149 = vpop.f32.mrb[0].mxu0
    %v3150 = vadd.f32 %v3107, %v3149
    %v3151 = vpop.f32.mrb[0].mxu0
    %v3152 = vadd.f32 %v3109, %v3151
    %3153 = vdwg.mxu0
    %3154 = vmatprep.subr.bf16.mxu0 %v2557
    %3155 = vmatpush1.bf16.msra.mxu0 %v2556
    %3156 = vmatprep.subr.bf16.mxu0 %v2565
    %3157 = vmatpush1.bf16.msra.mxu0 %v2564
    %3158 = vmatprep.subr.bf16.mxu0 %v2573
    %3159 = vmatpush1.bf16.msra.mxu0 %v2572
    %3160 = vmatprep.subr.bf16.mxu0 %v2581
    %3161 = vmatpush1.bf16.msra.mxu0 %v2580
    %3162 = vmatprep.subr.bf16.mxu0 %v2589
    %3163 = vmatpush1.bf16.msra.mxu0 %v2588
    %3164 = vmatprep.subr.bf16.mxu0 %v2597
    %3165 = vmatpush1.bf16.msra.mxu0 %v2596
    %3166 = vmatprep.subr.bf16.mxu0 %v2605
    %3167 = vmatpush1.bf16.msra.mxu0 %v2604
    %3168 = vmatprep.subr.bf16.mxu0 %v2613
    %3169 = vmatpush1.bf16.msra.mxu0 %v2612
    %3170 = vmatprep.subr.bf16.mxu0 %v2621
    %3171 = vmatpush1.bf16.msra.mxu0 %v2620
    %3172 = vmatprep.subr.bf16.mxu0 %v2629
    %3173 = vmatpush1.bf16.msra.mxu0 %v2628
    %3174 = vmatprep.subr.bf16.mxu0 %v2637
    %3175 = vmatpush1.bf16.msra.mxu0 %v2636
    %3176 = vmatprep.subr.bf16.mxu0 %v2645
    %3177 = vmatpush1.bf16.msra.mxu0 %v2644
    %3178 = vmatprep.subr.bf16.mxu0 %v2653
    %3179 = vmatpush1.bf16.msra.mxu0 %v2652
    %3180 = vmatprep.subr.bf16.mxu0 %v2661
    %3181 = vmatpush1.bf16.msra.mxu0 %v2660
    %3182 = vmatprep.subr.bf16.mxu0 %v2669
    %3183 = vmatpush1.bf16.msra.mxu0 %v2668
    %3184 = vmatprep.subr.bf16.mxu0 %v2677
    %3185 = vmatpush1.bf16.msra.mxu0 %v2676
    %3186 = vmatprep.mubr.bf16.mxu0 %v721
    %3187 = vmatmul.mubr.bf16.gmra.mrb[0].mxu0 %v720
    %v3188 = vpop.f32.mrb[0].mxu0
    %v3189 = vadd.f32 %v3146, %v3188
    %v3190 = vpop.f32.mrb[0].mxu0
    %v3191 = vadd.f32 %v3148, %v3190
    %v3192 = vpop.f32.mrb[0].mxu0
    %v3193 = vadd.f32 %v3150, %v3192
    %v3194 = vpop.f32.mrb[0].mxu0
    %v3195 = vadd.f32 %v3152, %v3194
    %3196 = vdwg.mxu0
    %3197 = vmatprep.subr.bf16.mxu0 %v2303
    %3198 = vmatpush1.bf16.msra.mxu0 %v2302
    %3199 = vmatprep.subr.bf16.mxu0 %v2311
    %3200 = vmatpush1.bf16.msra.mxu0 %v2310
    %3201 = vmatprep.subr.bf16.mxu0 %v2319
    %3202 = vmatpush1.bf16.msra.mxu0 %v2318
    %3203 = vmatprep.subr.bf16.mxu0 %v2327
    %3204 = vmatpush1.bf16.msra.mxu0 %v2326
    %3205 = vmatprep.subr.bf16.mxu0 %v2335
    %3206 = vmatpush1.bf16.msra.mxu0 %v2334
    %3207 = vmatprep.subr.bf16.mxu0 %v2343
    %3208 = vmatpush1.bf16.msra.mxu0 %v2342
    %3209 = vmatprep.subr.bf16.mxu0 %v2351
    %3210 = vmatpush1.bf16.msra.mxu0 %v2350
    %3211 = vmatprep.subr.bf16.mxu0 %v2359
    %3212 = vmatpush1.bf16.msra.mxu0 %v2358
    %3213 = vmatprep.subr.bf16.mxu0 %v2367
    %3214 = vmatpush1.bf16.msra.mxu0 %v2366
    %3215 = vmatprep.subr.bf16.mxu0 %v2375
    %3216 = vmatpush1.bf16.msra.mxu0 %v2374
    %3217 = vmatprep.subr.bf16.mxu0 %v2383
    %3218 = vmatpush1.bf16.msra.mxu0 %v2382
    %3219 = vmatprep.subr.bf16.mxu0 %v2391
    %3220 = vmatpush1.bf16.msra.mxu0 %v2390
    %3221 = vmatprep.subr.bf16.mxu0 %v2399
    %3222 = vmatpush1.bf16.msra.mxu0 %v2398
    %3223 = vmatprep.subr.bf16.mxu0 %v2407
    %3224 = vmatpush1.bf16.msra.mxu0 %v2406
    %3225 = vmatprep.subr.bf16.mxu0 %v2415
    %3226 = vmatpush1.bf16.msra.mxu0 %v2414
    %3227 = vmatprep.subr.bf16.mxu0 %v2423
    %3228 = vmatpush1.bf16.msra.mxu0 %v2422
    %3229 = vmatprep.mubr.bf16.mxu0 %v717
    %3230 = vmatmul.mubr.bf16.gmra.mrb[0].mxu0 %v716
    %v3231 = vpop.f32.mrb[0].mxu0
    %v3232 = vadd.f32 %v1119, %v3231
    %v3233 = vpop.f32.mrb[0].mxu0
    %v3234 = vadd.f32 %v1123, %v3233
    %v3235 = vpop.f32.mrb[0].mxu0
    %v3236 = vadd.f32 %v1119, %v3235
    %v3237 = vpop.f32.mrb[0].mxu0
    %v3238 = vadd.f32 %v1123, %v3237
    %3239 = vdwg.mxu0
    %3240 = vmatprep.subr.bf16.mxu0 %v2431
    %3241 = vmatpush1.bf16.msra.mxu0 %v2430
    %3242 = vmatprep.subr.bf16.mxu0 %v2439
    %3243 = vmatpush1.bf16.msra.mxu0 %v2438
    %3244 = vmatprep.subr.bf16.mxu0 %v2447
    %3245 = vmatpush1.bf16.msra.mxu0 %v2446
    %3246 = vmatprep.subr.bf16.mxu0 %v2455
    %3247 = vmatpush1.bf16.msra.mxu0 %v2454
    %3248 = vmatprep.subr.bf16.mxu0 %v2463
    %3249 = vmatpush1.bf16.msra.mxu0 %v2462
    %3250 = vmatprep.subr.bf16.mxu0 %v2471
    %3251 = vmatpush1.bf16.msra.mxu0 %v2470
    %3252 = vmatprep.subr.bf16.mxu0 %v2479
    %3253 = vmatpush1.bf16.msra.mxu0 %v2478
    %3254 = vmatprep.subr.bf16.mxu0 %v2487
    %3255 = vmatpush1.bf16.msra.mxu0 %v2486
    %3256 = vmatprep.subr.bf16.mxu0 %v2495
    %3257 = vmatpush1.bf16.msra.mxu0 %v2494
    %3258 = vmatprep.subr.bf16.mxu0 %v2503
    %3259 = vmatpush1.bf16.msra.mxu0 %v2502
    %3260 = vmatprep.subr.bf16.mxu0 %v2511
    %3261 = vmatpush1.bf16.msra.mxu0 %v2510
    %3262 = vmatprep.subr.bf16.mxu0 %v2519
    %3263 = vmatpush1.bf16.msra.mxu0 %v2518
    %3264 = vmatprep.subr.bf16.mxu0 %v2527
    %3265 = vmatpush1.bf16.msra.mxu0 %v2526
    %3266 = vmatprep.subr.bf16.mxu0 %v2535
    %3267 = vmatpush1.bf16.msra.mxu0 %v2534
    %3268 = vmatprep.subr.bf16.mxu0 %v2543
    %3269 = vmatpush1.bf16.msra.mxu0 %v2542
    %3270 = vmatprep.subr.bf16.mxu0 %v2551
    %3271 = vmatpush1.bf16.msra.mxu0 %v2550
    %3272 = vmatprep.mubr.bf16.mxu0 %v719
    %3273 = vmatmul.mubr.bf16.gmra.mrb[0].mxu0 %v718
    %v3274 = vpop.f32.mrb[0].mxu0
    %v3275 = vadd.f32 %v3232, %v3274
    %v3276 = vpop.f32.mrb[0].mxu0
    %v3277 = vadd.f32 %v3234, %v3276
    %v3278 = vpop.f32.mrb[0].mxu0
    %v3279 = vadd.f32 %v3236, %v3278
    %v3280 = vpop.f32.mrb[0].mxu0
    %v3281 = vadd.f32 %v3238, %v3280
    %3282 = vdwg.mxu0
    %3283 = vmatprep.subr.bf16.mxu0 %v2559
    %3284 = vmatpush1.bf16.msra.mxu0 %v2558
    %3285 = vmatprep.subr.bf16.mxu0 %v2567
    %3286 = vmatpush1.bf16.msra.mxu0 %v2566
    %3287 = vmatprep.subr.bf16.mxu0 %v2575
    %3288 = vmatpush1.bf16.msra.mxu0 %v2574
    %3289 = vmatprep.subr.bf16.mxu0 %v2583
    %3290 = vmatpush1.bf16.msra.mxu0 %v2582
    %3291 = vmatprep.subr.bf16.mxu0 %v2591
    %3292 = vmatpush1.bf16.msra.mxu0 %v2590
    %3293 = vmatprep.subr.bf16.mxu0 %v2599
    %3294 = vmatpush1.bf16.msra.mxu0 %v2598
    %3295 = vmatprep.subr.bf16.mxu0 %v2607
    %3296 = vmatpush1.bf16.msra.mxu0 %v2606
    %3297 = vmatprep.subr.bf16.mxu0 %v2615
    %3298 = vmatpush1.bf16.msra.mxu0 %v2614
    %3299 = vmatprep.subr.bf16.mxu0 %v2623
    %3300 = vmatpush1.bf16.msra.mxu0 %v2622
    %3301 = vmatprep.subr.bf16.mxu0 %v2631
    %3302 = vmatpush1.bf16.msra.mxu0 %v2630
    %3303 = vmatprep.subr.bf16.mxu0 %v2639
    %3304 = vmatpush1.bf16.msra.mxu0 %v2638
    %3305 = vmatprep.subr.bf16.mxu0 %v2647
    %3306 = vmatpush1.bf16.msra.mxu0 %v2646
    %3307 = vmatprep.subr.bf16.mxu0 %v2655
    %3308 = vmatpush1.bf16.msra.mxu0 %v2654
    %3309 = vmatprep.subr.bf16.mxu0 %v2663
    %3310 = vmatpush1.bf16.msra.mxu0 %v2662
    %3311 = vmatprep.subr.bf16.mxu0 %v2671
    %3312 = vmatpush1.bf16.msra.mxu0 %v2670
    %3313 = vmatprep.subr.bf16.mxu0 %v2679
    %3314 = vmatpush1.bf16.msra.mxu0 %v2678
    %3315 = vmatprep.mubr.bf16.mxu0 %v721
    %3316 = vmatmul.mubr.bf16.gmra.mrb[0].mxu0 %v720
    %v3317 = vpop.f32.mrb[0].mxu0
    %v3318 = vadd.f32 %v3275, %v3317
    %v3319 = vpop.f32.mrb[0].mxu0
    %v3320 = vadd.f32 %v3277, %v3319
    %v3321 = vpop.f32.mrb[0].mxu0
    %v3322 = vadd.f32 %v3279, %v3321
    %v3323 = vpop.f32.mrb[0].mxu0
    %v3324 = vadd.f32 %v3281, %v3323
    %3325 = vdwg.mxu0
    %3326 = vmatprep.subr.bf16.mxu0 %v2305
    %3327 = vmatpush1.bf16.msra.mxu0 %v2304
    %3328 = vmatprep.subr.bf16.mxu0 %v2313
    %3329 = vmatpush1.bf16.msra.mxu0 %v2312
    %3330 = vmatprep.subr.bf16.mxu0 %v2321
    %3331 = vmatpush1.bf16.msra.mxu0 %v2320
    %3332 = vmatprep.subr.bf16.mxu0 %v2329
    %3333 = vmatpush1.bf16.msra.mxu0 %v2328
    %3334 = vmatprep.subr.bf16.mxu0 %v2337
    %3335 = vmatpush1.bf16.msra.mxu0 %v2336
    %3336 = vmatprep.subr.bf16.mxu0 %v2345
    %3337 = vmatpush1.bf16.msra.mxu0 %v2344
    %3338 = vmatprep.subr.bf16.mxu0 %v2353
    %3339 = vmatpush1.bf16.msra.mxu0 %v2352
    %3340 = vmatprep.subr.bf16.mxu0 %v2361
    %3341 = vmatpush1.bf16.msra.mxu0 %v2360
    %3342 = vmatprep.subr.bf16.mxu0 %v2369
    %3343 = vmatpush1.bf16.msra.mxu0 %v2368
    %3344 = vmatprep.subr.bf16.mxu0 %v2377
    %3345 = vmatpush1.bf16.msra.mxu0 %v2376
    %3346 = vmatprep.subr.bf16.mxu0 %v2385
    %3347 = vmatpush1.bf16.msra.mxu0 %v2384
    %3348 = vmatprep.subr.bf16.mxu0 %v2393
    %3349 = vmatpush1.bf16.msra.mxu0 %v2392
    %3350 = vmatprep.subr.bf16.mxu0 %v2401
    %3351 = vmatpush1.bf16.msra.mxu0 %v2400
    %3352 = vmatprep.subr.bf16.mxu0 %v2409
    %3353 = vmatpush1.bf16.msra.mxu0 %v2408
    %3354 = vmatprep.subr.bf16.mxu0 %v2417
    %3355 = vmatpush1.bf16.msra.mxu0 %v2416
    %3356 = vmatprep.subr.bf16.mxu0 %v2425
    %3357 = vmatpush1.bf16.msra.mxu0 %v2424
    %3358 = vmatprep.mubr.bf16.mxu0 %v717
    %3359 = vmatmul.mubr.bf16.gmra.mrb[0].mxu0 %v716
    %v3360 = vpop.f32.mrb[0].mxu0
    %v3361 = vadd.f32 %v1127, %v3360
    %v3362 = vpop.f32.mrb[0].mxu0
    %v3363 = vadd.f32 %v1131, %v3362
    %v3364 = vpop.f32.mrb[0].mxu0
    %v3365 = vadd.f32 %v1127, %v3364
    %v3366 = vpop.f32.mrb[0].mxu0
    %v3367 = vadd.f32 %v1131, %v3366
    %3368 = vdwg.mxu0
    %3369 = vmatprep.subr.bf16.mxu0 %v2433
    %3370 = vmatpush1.bf16.msra.mxu0 %v2432
    %3371 = vmatprep.subr.bf16.mxu0 %v2441
    %3372 = vmatpush1.bf16.msra.mxu0 %v2440
    %3373 = vmatprep.subr.bf16.mxu0 %v2449
    %3374 = vmatpush1.bf16.msra.mxu0 %v2448
    %3375 = vmatprep.subr.bf16.mxu0 %v2457
    %3376 = vmatpush1.bf16.msra.mxu0 %v2456
    %3377 = vmatprep.subr.bf16.mxu0 %v2465
    %3378 = vmatpush1.bf16.msra.mxu0 %v2464
    %3379 = vmatprep.subr.bf16.mxu0 %v2473
    %3380 = vmatpush1.bf16.msra.mxu0 %v2472
    %3381 = vmatprep.subr.bf16.mxu0 %v2481
    %3382 = vmatpush1.bf16.msra.mxu0 %v2480
    %3383 = vmatprep.subr.bf16.mxu0 %v2489
    %3384 = vmatpush1.bf16.msra.mxu0 %v2488
    %3385 = vmatprep.subr.bf16.mxu0 %v2497
    %3386 = vmatpush1.bf16.msra.mxu0 %v2496
    %3387 = vmatprep.subr.bf16.mxu0 %v2505
    %3388 = vmatpush1.bf16.msra.mxu0 %v2504
    %3389 = vmatprep.subr.bf16.mxu0 %v2513
    %3390 = vmatpush1.bf16.msra.mxu0 %v2512
    %3391 = vmatprep.subr.bf16.mxu0 %v2521
    %3392 = vmatpush1.bf16.msra.mxu0 %v2520
    %3393 = vmatprep.subr.bf16.mxu0 %v2529
    %3394 = vmatpush1.bf16.msra.mxu0 %v2528
    %3395 = vmatprep.subr.bf16.mxu0 %v2537
    %3396 = vmatpush1.bf16.msra.mxu0 %v2536
    %3397 = vmatprep.subr.bf16.mxu0 %v2545
    %3398 = vmatpush1.bf16.msra.mxu0 %v2544
    %3399 = vmatprep.subr.bf16.mxu0 %v2553
    %3400 = vmatpush1.bf16.msra.mxu0 %v2552
    %3401 = vmatprep.mubr.bf16.mxu0 %v719
    %3402 = vmatmul.mubr.bf16.gmra.mrb[0].mxu0 %v718
    %v3403 = vpop.f32.mrb[0].mxu0
    %v3404 = vadd.f32 %v3361, %v3403
    %v3405 = vpop.f32.mrb[0].mxu0
    %v3406 = vadd.f32 %v3363, %v3405
    %v3407 = vpop.f32.mrb[0].mxu0
    %v3408 = vadd.f32 %v3365, %v3407
    %v3409 = vpop.f32.mrb[0].mxu0
    %v3410 = vadd.f32 %v3367, %v3409
    %3411 = vdwg.mxu0
    %3412 = vmatprep.subr.bf16.mxu0 %v2561
    %3413 = vmatpush1.bf16.msra.mxu0 %v2560
    %3414 = vmatprep.subr.bf16.mxu0 %v2569
    %3415 = vmatpush1.bf16.msra.mxu0 %v2568
    %3416 = vmatprep.subr.bf16.mxu0 %v2577
    %3417 = vmatpush1.bf16.msra.mxu0 %v2576
    %3418 = vmatprep.subr.bf16.mxu0 %v2585
    %3419 = vmatpush1.bf16.msra.mxu0 %v2584
    %3420 = vmatprep.subr.bf16.mxu0 %v2593
    %3421 = vmatpush1.bf16.msra.mxu0 %v2592
    %3422 = vmatprep.subr.bf16.mxu0 %v2601
    %3423 = vmatpush1.bf16.msra.mxu0 %v2600
    %3424 = vmatprep.subr.bf16.mxu0 %v2609
    %3425 = vmatpush1.bf16.msra.mxu0 %v2608
    %3426 = vmatprep.subr.bf16.mxu0 %v2617
    %3427 = vmatpush1.bf16.msra.mxu0 %v2616
    %3428 = vmatprep.subr.bf16.mxu0 %v2625
    %3429 = vmatpush1.bf16.msra.mxu0 %v2624
    %3430 = vmatprep.subr.bf16.mxu0 %v2633
    %3431 = vmatpush1.bf16.msra.mxu0 %v2632
    %3432 = vmatprep.subr.bf16.mxu0 %v2641
    %3433 = vmatpush1.bf16.msra.mxu0 %v2640
    %3434 = vmatprep.subr.bf16.mxu0 %v2649
    %3435 = vmatpush1.bf16.msra.mxu0 %v2648
    %3436 = vmatprep.subr.bf16.mxu0 %v2657
    %3437 = vmatpush1.bf16.msra.mxu0 %v2656
    %3438 = vmatprep.subr.bf16.mxu0 %v2665
    %3439 = vmatpush1.bf16.msra.mxu0 %v2664
    %3440 = vmatprep.subr.bf16.mxu0 %v2673
    %3441 = vmatpush1.bf16.msra.mxu0 %v2672
    %3442 = vmatprep.subr.bf16.mxu0 %v2681
    %3443 = vmatpush1.bf16.msra.mxu0 %v2680
    %3444 = vmatprep.mubr.bf16.mxu0 %v721
    %3445 = vmatmul.mubr.bf16.gmra.mrb[0].mxu0 %v720
    %v3446 = vpop.f32.mrb[0].mxu0
    %v3447 = vadd.f32 %v3404, %v3446
    %v3448 = vpop.f32.mrb[0].mxu0
    %v3449 = vadd.f32 %v3406, %v3448
    %v3450 = vpop.f32.mrb[0].mxu0
    %v3451 = vadd.f32 %v3408, %v3450
    %v3452 = vpop.f32.mrb[0].mxu0
    %v3453 = vadd.f32 %v3410, %v3452
    %3454 = vdwg.mxu0
    %3455 = vmatprep.subr.bf16.mxu0 %v2307
    %3456 = vmatpush1.bf16.msra.mxu0 %v2306
    %3457 = vmatprep.subr.bf16.mxu0 %v2315
    %3458 = vmatpush1.bf16.msra.mxu0 %v2314
    %3459 = vmatprep.subr.bf16.mxu0 %v2323
    %3460 = vmatpush1.bf16.msra.mxu0 %v2322
    %3461 = vmatprep.subr.bf16.mxu0 %v2331
    %3462 = vmatpush1.bf16.msra.mxu0 %v2330
    %3463 = vmatprep.subr.bf16.mxu0 %v2339
    %3464 = vmatpush1.bf16.msra.mxu0 %v2338
    %3465 = vmatprep.subr.bf16.mxu0 %v2347
    %3466 = vmatpush1.bf16.msra.mxu0 %v2346
    %3467 = vmatprep.subr.bf16.mxu0 %v2355
    %3468 = vmatpush1.bf16.msra.mxu0 %v2354
    %3469 = vmatprep.subr.bf16.mxu0 %v2363
    %3470 = vmatpush1.bf16.msra.mxu0 %v2362
    %3471 = vmatprep.subr.bf16.mxu0 %v2371
    %3472 = vmatpush1.bf16.msra.mxu0 %v2370
    %3473 = vmatprep.subr.bf16.mxu0 %v2379
    %3474 = vmatpush1.bf16.msra.mxu0 %v2378
    %3475 = vmatprep.subr.bf16.mxu0 %v2387
    %3476 = vmatpush1.bf16.msra.mxu0 %v2386
    %3477 = vmatprep.subr.bf16.mxu0 %v2395
    %3478 = vmatpush1.bf16.msra.mxu0 %v2394
    %3479 = vmatprep.subr.bf16.mxu0 %v2403
    %3480 = vmatpush1.bf16.msra.mxu0 %v2402
    %3481 = vmatprep.subr.bf16.mxu0 %v2411
    %3482 = vmatpush1.bf16.msra.mxu0 %v2410
    %3483 = vmatprep.subr.bf16.mxu0 %v2419
    %3484 = vmatpush1.bf16.msra.mxu0 %v2418
    %3485 = vmatprep.subr.bf16.mxu0 %v2427
    %3486 = vmatpush1.bf16.msra.mxu0 %v2426
    %3487 = vmatprep.mubr.bf16.mxu0 %v717
    %3488 = vmatmul.mubr.bf16.gmra.mrb[0].mxu0 %v716
    %v3489 = vpop.f32.mrb[0].mxu0
    %v3490 = vadd.f32 %v1135, %v3489
    %v3491 = vpop.f32.mrb[0].mxu0
    %v3492 = vadd.f32 %v1139, %v3491
    %v3493 = vpop.f32.mrb[0].mxu0
    %v3494 = vadd.f32 %v1135, %v3493
    %v3495 = vpop.f32.mrb[0].mxu0
    %v3496 = vadd.f32 %v1139, %v3495
    %3497 = vdwg.mxu0
    %3498 = vmatprep.subr.bf16.mxu0 %v2435
    %3499 = vmatpush1.bf16.msra.mxu0 %v2434
    %3500 = vmatprep.subr.bf16.mxu0 %v2443
    %3501 = vmatpush1.bf16.msra.mxu0 %v2442
    %3502 = vmatprep.subr.bf16.mxu0 %v2451
    %3503 = vmatpush1.bf16.msra.mxu0 %v2450
    %3504 = vmatprep.subr.bf16.mxu0 %v2459
    %3505 = vmatpush1.bf16.msra.mxu0 %v2458
    %3506 = vmatprep.subr.bf16.mxu0 %v2467
    %3507 = vmatpush1.bf16.msra.mxu0 %v2466
    %3508 = vmatprep.subr.bf16.mxu0 %v2475
    %3509 = vmatpush1.bf16.msra.mxu0 %v2474
    %3510 = vmatprep.subr.bf16.mxu0 %v2483
    %3511 = vmatpush1.bf16.msra.mxu0 %v2482
    %3512 = vmatprep.subr.bf16.mxu0 %v2491
    %3513 = vmatpush1.bf16.msra.mxu0 %v2490
    %3514 = vmatprep.subr.bf16.mxu0 %v2499
    %3515 = vmatpush1.bf16.msra.mxu0 %v2498
    %3516 = vmatprep.subr.bf16.mxu0 %v2507
    %3517 = vmatpush1.bf16.msra.mxu0 %v2506
    %3518 = vmatprep.subr.bf16.mxu0 %v2515
    %3519 = vmatpush1.bf16.msra.mxu0 %v2514
    %3520 = vmatprep.subr.bf16.mxu0 %v2523
    %3521 = vmatpush1.bf16.msra.mxu0 %v2522
    %3522 = vmatprep.subr.bf16.mxu0 %v2531
    %3523 = vmatpush1.bf16.msra.mxu0 %v2530
    %3524 = vmatprep.subr.bf16.mxu0 %v2539
    %3525 = vmatpush1.bf16.msra.mxu0 %v2538
    %3526 = vmatprep.subr.bf16.mxu0 %v2547
    %3527 = vmatpush1.bf16.msra.mxu0 %v2546
    %3528 = vmatprep.subr.bf16.mxu0 %v2555
    %3529 = vmatpush1.bf16.msra.mxu0 %v2554
    %3530 = vmatprep.mubr.bf16.mxu0 %v719
    %3531 = vmatmul.mubr.bf16.gmra.mrb[0].mxu0 %v718
    %v3532 = vpop.f32.mrb[0].mxu0
    %v3533 = vadd.f32 %v3490, %v3532
    %v3534 = vpop.f32.mrb[0].mxu0
    %v3535 = vadd.f32 %v3492, %v3534
    %v3536 = vpop.f32.mrb[0].mxu0
    %v3537 = vadd.f32 %v3494, %v3536
    %v3538 = vpop.f32.mrb[0].mxu0
    %v3539 = vadd.f32 %v3496, %v3538
    %3540 = vdwg.mxu0
    %3541 = vmatprep.subr.bf16.mxu0 %v2563
    %3542 = vmatpush1.bf16.msra.mxu0 %v2562
    %3543 = vmatprep.subr.bf16.mxu0 %v2571
    %3544 = vmatpush1.bf16.msra.mxu0 %v2570
    %3545 = vmatprep.subr.bf16.mxu0 %v2579
    %3546 = vmatpush1.bf16.msra.mxu0 %v2578
    %3547 = vmatprep.subr.bf16.mxu0 %v2587
    %3548 = vmatpush1.bf16.msra.mxu0 %v2586
    %3549 = vmatprep.subr.bf16.mxu0 %v2595
    %3550 = vmatpush1.bf16.msra.mxu0 %v2594
    %3551 = vmatprep.subr.bf16.mxu0 %v2603
    %3552 = vmatpush1.bf16.msra.mxu0 %v2602
    %3553 = vmatprep.subr.bf16.mxu0 %v2611
    %3554 = vmatpush1.bf16.msra.mxu0 %v2610
    %3555 = vmatprep.subr.bf16.mxu0 %v2619
    %3556 = vmatpush1.bf16.msra.mxu0 %v2618
    %3557 = vmatprep.subr.bf16.mxu0 %v2627
    %3558 = vmatpush1.bf16.msra.mxu0 %v2626
    %3559 = vmatprep.subr.bf16.mxu0 %v2635
    %3560 = vmatpush1.bf16.msra.mxu0 %v2634
    %3561 = vmatprep.subr.bf16.mxu0 %v2643
    %3562 = vmatpush1.bf16.msra.mxu0 %v2642
    %3563 = vmatprep.subr.bf16.mxu0 %v2651
    %3564 = vmatpush1.bf16.msra.mxu0 %v2650
    %3565 = vmatprep.subr.bf16.mxu0 %v2659
    %3566 = vmatpush1.bf16.msra.mxu0 %v2658
    %3567 = vmatprep.subr.bf16.mxu0 %v2667
    %3568 = vmatpush1.bf16.msra.mxu0 %v2666
    %3569 = vmatprep.subr.bf16.mxu0 %v2675
    %3570 = vmatpush1.bf16.msra.mxu0 %v2674
    %3571 = vmatprep.subr.bf16.mxu0 %v2683
    %3572 = vmatpush1.bf16.msra.mxu0 %v2682
    %3573 = vmatprep.mubr.bf16.mxu0 %v721
    %3574 = vmatmul.mubr.bf16.gmra.mrb[0].mxu0 %v720
    %v3575 = vpop.f32.mrb[0].mxu0
    %v3576 = vadd.f32 %v3533, %v3575
    %v3577 = vpop.f32.mrb[0].mxu0
    %v3578 = vadd.f32 %v3535, %v3577
    %v3579 = vpop.f32.mrb[0].mxu0
    %v3580 = vadd.f32 %v3537, %v3579
    %v3581 = vpop.f32.mrb[0].mxu0
    %v3582 = vadd.f32 %v3539, %v3581
    %3583 = vdwg.mxu0
    %v3585 = vsel %vm335, %v374, 0
    %v3588 = vsel %vm335, %v376, 0
    %3590 = vmatprep.subr.mxu0 %v3191
    %3591 = vmatpush1.msra.mxu0 %v3189
    %3592 = vmatprep.subr.mxu0 %v3195
    %3593 = vmatpush1.msra.mxu0 %v3193
    %3594 = vmatprep.subr.mxu0 0.0
    %3595 = vmatpush1.msra.mxu0 0.0
    %3596 = vmatprep.subr.mxu0 0.0
    %3597 = vmatpush1.msra.mxu0 0.0
    %3598 = vmatprep.subr.mxu0 0.0
    %3599 = vmatpush1.msra.mxu0 0.0
    %3600 = vmatprep.subr.mxu0 0.0
    %3601 = vmatpush1.msra.mxu0 0.0
    %3602 = vmatprep.subr.mxu0 0.0
    %3603 = vmatpush1.msra.mxu0 0.0
    %3604 = vmatprep.subr.mxu0 0.0
    %3605 = vmatpush1.msra.mxu0 0.0
    %3606 = vmatprep.subr.mxu0 0.0
    %3607 = vmatpush1.msra.mxu0 0.0
    %3608 = vmatprep.subr.mxu0 0.0
    %3609 = vmatpush1.msra.mxu0 0.0
    %3610 = vmatprep.subr.mxu0 0.0
    %3611 = vmatpush1.msra.mxu0 0.0
    %3612 = vmatprep.subr.mxu0 0.0
    %3613 = vmatpush1.msra.mxu0 0.0
    %3614 = vmatprep.subr.mxu0 0.0
    %3615 = vmatpush1.msra.mxu0 0.0
    %3616 = vmatprep.subr.mxu0 0.0
    %3617 = vmatpush1.msra.mxu0 0.0
    %3618 = vmatprep.subr.mxu0 0.0
    %3619 = vmatpush1.msra.mxu0 0.0
    %3620 = vmatprep.subr.mxu0 0.0
    %3621 = vmatpush1.msra.mxu0 0.0
    %3622 = vmatprep.subr.mxu0 0.0
    %3623 = vmatpush1.msra.mxu0 0.0
    %3624 = vmatprep.subr.mxu0 0.0
    %3625 = vmatpush1.msra.mxu0 0.0
    %3626 = vmatprep.subr.mxu0 0.0
    %3627 = vmatpush1.msra.mxu0 0.0
    %3628 = vmatprep.subr.mxu0 0.0
    %3629 = vmatpush1.msra.mxu0 0.0
    %3630 = vmatprep.subr.mxu0 0.0
    %3631 = vmatpush1.msra.mxu0 0.0
    %3632 = vmatprep.subr.mxu0 0.0
    %3633 = vmatpush1.msra.mxu0 0.0
    %3634 = vmatprep.subr.mxu0 0.0
    %3635 = vmatpush1.msra.mxu0 0.0
    %3636 = vmatprep.subr.mxu0 0.0
    %3637 = vmatpush1.msra.mxu0 0.0
    %3638 = vmatprep.subr.mxu0 0.0
    %3639 = vmatpush1.msra.mxu0 0.0
    %3640 = vmatprep.subr.mxu0 0.0
    %3641 = vmatpush1.msra.mxu0 0.0
    %3642 = vmatprep.subr.mxu0 0.0
    %3643 = vmatpush1.msra.mxu0 0.0
    %3644 = vmatprep.subr.mxu0 0.0
    %3645 = vmatpush1.msra.mxu0 0.0
    %3646 = vmatprep.subr.mxu0 0.0
    %3647 = vmatpush1.msra.mxu0 0.0
    %3648 = vmatprep.subr.mxu0 0.0
    %3649 = vmatpush1.msra.mxu0 0.0
    %3650 = vmatprep.subr.mxu0 0.0
    %3651 = vmatpush1.msra.mxu0 0.0
    %3652 = vmatprep.subr.mxu0 0.0
    %3653 = vmatpush1.msra.mxu0 0.0
    %3654 = vmatprep.mubr.f32.mxu0 0.0
    %3655 = vmatmul.mubr.f32.gmra.mrb[0].mxu0 %v3585
    %v3656 = vpop.f32.mrb[0].mxu0
    %v3657 = vadd.f32 0.0, %v3656
    %v3658 = vpop.f32.mrb[0].mxu0
    %v3659 = vadd.f32 0.0, %v3658
    %3660 = vmatprep.mubr.f32.mxu0 0.0
    %3661 = vmatmul.mubr.f32.gmra.mrb[0].mxu0 %v3588
    %v3662 = vpop.f32.mrb[0].mxu0
    %v3663 = vadd.f32 0.0, %v3662
    %v3664 = vpop.f32.mrb[0].mxu0
    %v3665 = vadd.f32 0.0, %v3664
    %3666 = vdwg.mxu0
    %3667 = vmatprep.subr.mxu0 %v3320
    %3668 = vmatpush1.msra.mxu0 %v3318
    %3669 = vmatprep.subr.mxu0 %v3324
    %3670 = vmatpush1.msra.mxu0 %v3322
    %3671 = vmatprep.subr.mxu0 0.0
    %3672 = vmatpush1.msra.mxu0 0.0
    %3673 = vmatprep.subr.mxu0 0.0
    %3674 = vmatpush1.msra.mxu0 0.0
    %3675 = vmatprep.subr.mxu0 0.0
    %3676 = vmatpush1.msra.mxu0 0.0
    %3677 = vmatprep.subr.mxu0 0.0
    %3678 = vmatpush1.msra.mxu0 0.0
    %3679 = vmatprep.subr.mxu0 0.0
    %3680 = vmatpush1.msra.mxu0 0.0
    %3681 = vmatprep.subr.mxu0 0.0
    %3682 = vmatpush1.msra.mxu0 0.0
    %3683 = vmatprep.subr.mxu0 0.0
    %3684 = vmatpush1.msra.mxu0 0.0
    %3685 = vmatprep.subr.mxu0 0.0
    %3686 = vmatpush1.msra.mxu0 0.0
    %3687 = vmatprep.subr.mxu0 0.0
    %3688 = vmatpush1.msra.mxu0 0.0
    %3689 = vmatprep.subr.mxu0 0.0
    %3690 = vmatpush1.msra.mxu0 0.0
    %3691 = vmatprep.subr.mxu0 0.0
    %3692 = vmatpush1.msra.mxu0 0.0
    %3693 = vmatprep.subr.mxu0 0.0
    %3694 = vmatpush1.msra.mxu0 0.0
    %3695 = vmatprep.subr.mxu0 0.0
    %3696 = vmatpush1.msra.mxu0 0.0
    %3697 = vmatprep.subr.mxu0 0.0
    %3698 = vmatpush1.msra.mxu0 0.0
    %3699 = vmatprep.subr.mxu0 0.0
    %3700 = vmatpush1.msra.mxu0 0.0
    %3701 = vmatprep.subr.mxu0 0.0
    %3702 = vmatpush1.msra.mxu0 0.0
    %3703 = vmatprep.subr.mxu0 0.0
    %3704 = vmatpush1.msra.mxu0 0.0
    %3705 = vmatprep.subr.mxu0 0.0
    %3706 = vmatpush1.msra.mxu0 0.0
    %3707 = vmatprep.subr.mxu0 0.0
    %3708 = vmatpush1.msra.mxu0 0.0
    %3709 = vmatprep.subr.mxu0 0.0
    %3710 = vmatpush1.msra.mxu0 0.0
    %3711 = vmatprep.subr.mxu0 0.0
    %3712 = vmatpush1.msra.mxu0 0.0
    %3713 = vmatprep.subr.mxu0 0.0
    %3714 = vmatpush1.msra.mxu0 0.0
    %3715 = vmatprep.subr.mxu0 0.0
    %3716 = vmatpush1.msra.mxu0 0.0
    %3717 = vmatprep.subr.mxu0 0.0
    %3718 = vmatpush1.msra.mxu0 0.0
    %3719 = vmatprep.subr.mxu0 0.0
    %3720 = vmatpush1.msra.mxu0 0.0
    %3721 = vmatprep.subr.mxu0 0.0
    %3722 = vmatpush1.msra.mxu0 0.0
    %3723 = vmatprep.subr.mxu0 0.0
    %3724 = vmatpush1.msra.mxu0 0.0
    %3725 = vmatprep.subr.mxu0 0.0
    %3726 = vmatpush1.msra.mxu0 0.0
    %3727 = vmatprep.subr.mxu0 0.0
    %3728 = vmatpush1.msra.mxu0 0.0
    %3729 = vmatprep.subr.mxu0 0.0
    %3730 = vmatpush1.msra.mxu0 0.0
    %3731 = vmatprep.mubr.f32.mxu0 0.0
    %3732 = vmatmul.mubr.f32.gmra.mrb[0].mxu0 %v3585
    %v3733 = vpop.f32.mrb[0].mxu0
    %v3734 = vadd.f32 0.0, %v3733
    %v3735 = vpop.f32.mrb[0].mxu0
    %v3736 = vadd.f32 0.0, %v3735
    %3737 = vmatprep.mubr.f32.mxu0 0.0
    %3738 = vmatmul.mubr.f32.gmra.mrb[0].mxu0 %v3588
    %v3739 = vpop.f32.mrb[0].mxu0
    %v3740 = vadd.f32 0.0, %v3739
    %v3741 = vpop.f32.mrb[0].mxu0
    %v3742 = vadd.f32 0.0, %v3741
    %3743 = vdwg.mxu0
    %3744 = vmatprep.subr.mxu0 %v3449
    %3745 = vmatpush1.msra.mxu0 %v3447
    %3746 = vmatprep.subr.mxu0 %v3453
    %3747 = vmatpush1.msra.mxu0 %v3451
    %3748 = vmatprep.subr.mxu0 0.0
    %3749 = vmatpush1.msra.mxu0 0.0
    %3750 = vmatprep.subr.mxu0 0.0
    %3751 = vmatpush1.msra.mxu0 0.0
    %3752 = vmatprep.subr.mxu0 0.0
    %3753 = vmatpush1.msra.mxu0 0.0
    %3754 = vmatprep.subr.mxu0 0.0
    %3755 = vmatpush1.msra.mxu0 0.0
    %3756 = vmatprep.subr.mxu0 0.0
    %3757 = vmatpush1.msra.mxu0 0.0
    %3758 = vmatprep.subr.mxu0 0.0
    %3759 = vmatpush1.msra.mxu0 0.0
    %3760 = vmatprep.subr.mxu0 0.0
    %3761 = vmatpush1.msra.mxu0 0.0
    %3762 = vmatprep.subr.mxu0 0.0
    %3763 = vmatpush1.msra.mxu0 0.0
    %3764 = vmatprep.subr.mxu0 0.0
    %3765 = vmatpush1.msra.mxu0 0.0
    %3766 = vmatprep.subr.mxu0 0.0
    %3767 = vmatpush1.msra.mxu0 0.0
    %3768 = vmatprep.subr.mxu0 0.0
    %3769 = vmatpush1.msra.mxu0 0.0
    %3770 = vmatprep.subr.mxu0 0.0
    %3771 = vmatpush1.msra.mxu0 0.0
    %3772 = vmatprep.subr.mxu0 0.0
    %3773 = vmatpush1.msra.mxu0 0.0
    %3774 = vmatprep.subr.mxu0 0.0
    %3775 = vmatpush1.msra.mxu0 0.0
    %3776 = vmatprep.subr.mxu0 0.0
    %3777 = vmatpush1.msra.mxu0 0.0
    %3778 = vmatprep.subr.mxu0 0.0
    %3779 = vmatpush1.msra.mxu0 0.0
    %3780 = vmatprep.subr.mxu0 0.0
    %3781 = vmatpush1.msra.mxu0 0.0
    %3782 = vmatprep.subr.mxu0 0.0
    %3783 = vmatpush1.msra.mxu0 0.0
    %3784 = vmatprep.subr.mxu0 0.0
    %3785 = vmatpush1.msra.mxu0 0.0
    %3786 = vmatprep.subr.mxu0 0.0
    %3787 = vmatpush1.msra.mxu0 0.0
    %3788 = vmatprep.subr.mxu0 0.0
    %3789 = vmatpush1.msra.mxu0 0.0
    %3790 = vmatprep.subr.mxu0 0.0
    %3791 = vmatpush1.msra.mxu0 0.0
    %3792 = vmatprep.subr.mxu0 0.0
    %3793 = vmatpush1.msra.mxu0 0.0
    %3794 = vmatprep.subr.mxu0 0.0
    %3795 = vmatpush1.msra.mxu0 0.0
    %3796 = vmatprep.subr.mxu0 0.0
    %3797 = vmatpush1.msra.mxu0 0.0
    %3798 = vmatprep.subr.mxu0 0.0
    %3799 = vmatpush1.msra.mxu0 0.0
    %3800 = vmatprep.subr.mxu0 0.0
    %3801 = vmatpush1.msra.mxu0 0.0
    %3802 = vmatprep.subr.mxu0 0.0
    %3803 = vmatpush1.msra.mxu0 0.0
    %3804 = vmatprep.subr.mxu0 0.0
    %3805 = vmatpush1.msra.mxu0 0.0
    %3806 = vmatprep.subr.mxu0 0.0
    %3807 = vmatpush1.msra.mxu0 0.0
    %3808 = vmatprep.mubr.f32.mxu0 0.0
    %3809 = vmatmul.mubr.f32.gmra.mrb[0].mxu0 %v3585
    %v3810 = vpop.f32.mrb[0].mxu0
    %v3811 = vadd.f32 0.0, %v3810
    %v3812 = vpop.f32.mrb[0].mxu0
    %v3813 = vadd.f32 0.0, %v3812
    %3814 = vmatprep.mubr.f32.mxu0 0.0
    %3815 = vmatmul.mubr.f32.gmra.mrb[0].mxu0 %v3588
    %v3816 = vpop.f32.mrb[0].mxu0
    %v3817 = vadd.f32 0.0, %v3816
    %v3818 = vpop.f32.mrb[0].mxu0
    %v3819 = vadd.f32 0.0, %v3818
    %3820 = vdwg.mxu0
    %3821 = vmatprep.subr.mxu0 %v3578
    %3822 = vmatpush1.msra.mxu0 %v3576
    %3823 = vmatprep.subr.mxu0 %v3582
    %3824 = vmatpush1.msra.mxu0 %v3580
    %3825 = vmatprep.subr.mxu0 0.0
    %3826 = vmatpush1.msra.mxu0 0.0
    %3827 = vmatprep.subr.mxu0 0.0
    %3828 = vmatpush1.msra.mxu0 0.0
    %3829 = vmatprep.subr.mxu0 0.0
    %3830 = vmatpush1.msra.mxu0 0.0
    %3831 = vmatprep.subr.mxu0 0.0
    %3832 = vmatpush1.msra.mxu0 0.0
    %3833 = vmatprep.subr.mxu0 0.0
    %3834 = vmatpush1.msra.mxu0 0.0
    %3835 = vmatprep.subr.mxu0 0.0
    %3836 = vmatpush1.msra.mxu0 0.0
    %3837 = vmatprep.subr.mxu0 0.0
    %3838 = vmatpush1.msra.mxu0 0.0
    %3839 = vmatprep.subr.mxu0 0.0
    %3840 = vmatpush1.msra.mxu0 0.0
    %3841 = vmatprep.subr.mxu0 0.0
    %3842 = vmatpush1.msra.mxu0 0.0
    %3843 = vmatprep.subr.mxu0 0.0
    %3844 = vmatpush1.msra.mxu0 0.0
    %3845 = vmatprep.subr.mxu0 0.0
    %3846 = vmatpush1.msra.mxu0 0.0
    %3847 = vmatprep.subr.mxu0 0.0
    %3848 = vmatpush1.msra.mxu0 0.0
    %3849 = vmatprep.subr.mxu0 0.0
    %3850 = vmatpush1.msra.mxu0 0.0
    %3851 = vmatprep.subr.mxu0 0.0
    %3852 = vmatpush1.msra.mxu0 0.0
    %3853 = vmatprep.subr.mxu0 0.0
    %3854 = vmatpush1.msra.mxu0 0.0
    %3855 = vmatprep.subr.mxu0 0.0
    %3856 = vmatpush1.msra.mxu0 0.0
    %3857 = vmatprep.subr.mxu0 0.0
    %3858 = vmatpush1.msra.mxu0 0.0
    %3859 = vmatprep.subr.mxu0 0.0
    %3860 = vmatpush1.msra.mxu0 0.0
    %3861 = vmatprep.subr.mxu0 0.0
    %3862 = vmatpush1.msra.mxu0 0.0
    %3863 = vmatprep.subr.mxu0 0.0
    %3864 = vmatpush1.msra.mxu0 0.0
    %3865 = vmatprep.subr.mxu0 0.0
    %3866 = vmatpush1.msra.mxu0 0.0
    %3867 = vmatprep.subr.mxu0 0.0
    %3868 = vmatpush1.msra.mxu0 0.0
    %3869 = vmatprep.subr.mxu0 0.0
    %3870 = vmatpush1.msra.mxu0 0.0
    %3871 = vmatprep.subr.mxu0 0.0
    %3872 = vmatpush1.msra.mxu0 0.0
    %3873 = vmatprep.subr.mxu0 0.0
    %3874 = vmatpush1.msra.mxu0 0.0
    %3875 = vmatprep.subr.mxu0 0.0
    %3876 = vmatpush1.msra.mxu0 0.0
    %3877 = vmatprep.subr.mxu0 0.0
    %3878 = vmatpush1.msra.mxu0 0.0
    %3879 = vmatprep.subr.mxu0 0.0
    %3880 = vmatpush1.msra.mxu0 0.0
    %3881 = vmatprep.subr.mxu0 0.0
    %3882 = vmatpush1.msra.mxu0 0.0
    %3883 = vmatprep.subr.mxu0 0.0
    %3884 = vmatpush1.msra.mxu0 0.0
    %3885 = vmatprep.mubr.f32.mxu0 0.0
    %3886 = vmatmul.mubr.f32.gmra.mrb[0].mxu0 %v3585
    %v3887 = vpop.f32.mrb[0].mxu0
    %v3888 = vadd.f32 0.0, %v3887
    %v3889 = vpop.f32.mrb[0].mxu0
    %v3890 = vadd.f32 0.0, %v3889
    %3891 = vmatprep.mubr.f32.mxu0 0.0
    %3892 = vmatmul.mubr.f32.gmra.mrb[0].mxu0 %v3588
    %v3893 = vpop.f32.mrb[0].mxu0
    %v3894 = vadd.f32 0.0, %v3893
    %v3895 = vpop.f32.mrb[0].mxu0
    %v3896 = vadd.f32 0.0, %v3895
    %3897 = vdwg.mxu0
    %v3898 = vmax.f32 %v3657, 0.0
    %v3899 = vmax.f32 %v3659, 0.0
    %v3900 = vmax.f32 %v3734, 0.0
    %v3901 = vmax.f32 %v3736, 0.0
    %v3902 = vmax.f32 %v3811, 0.0
    %v3903 = vmax.f32 %v3813, 0.0
    %v3904 = vmax.f32 %v3888, 0.0
    %v3905 = vmax.f32 %v3890, 0.0
    %v3906 = vmax.f32 %v3663, 0.0
    %v3907 = vmax.f32 %v3665, 0.0
    %v3908 = vmax.f32 %v3740, 0.0
    %v3909 = vmax.f32 %v3742, 0.0
    %v3910 = vmax.f32 %v3817, 0.0
    %v3911 = vmax.f32 %v3819, 0.0
    %v3912 = vmax.f32 %v3894, 0.0
    %v3913 = vmax.f32 %v3896, 0.0
    %v3914 = vpack.c.bf16 %v3906, %v3898
    %v3915 = vpack.c.bf16 %v3907, %v3899
    %v3916 = vpack.c.bf16 %v3908, %v3900
    %v3917 = vpack.c.bf16 %v3909, %v3901
    %v3918 = vpack.c.bf16 %v3910, %v3902
    %v3919 = vpack.c.bf16 %v3911, %v3903
    %v3920 = vpack.c.bf16 %v3912, %v3904
    %v3921 = vpack.c.bf16 %v3913, %v3905
    %v3922 = vld [vmem:[#allocation8] sm:$0xf]
    %v3923 = vld [vmem:[#allocation8 + $0x4] sm:$0xf]
    %v3924 = vld [vmem:[#allocation8 + $0x8] sm:$0xf]
    %v3925 = vld [vmem:[#allocation8 + $0xc] sm:$0xf]
    %v3926 = vld [vmem:[#allocation8 + $0x10] sm:$0xf]
    %v3927 = vld [vmem:[#allocation8 + $0x14] sm:$0xf]
    %v3928 = vld [vmem:[#allocation8 + $0x18] sm:$0xf]
    %v3929 = vld [vmem:[#allocation8 + $0x1c] sm:$0xf]
    %v3930 = vld [vmem:[#allocation8 + $0x20] sm:$0xf]
    %v3931 = vld [vmem:[#allocation8 + $0x24] sm:$0xf]
    %v3932 = vld [vmem:[#allocation8 + $0x28] sm:$0xf]
    %v3933 = vld [vmem:[#allocation8 + $0x2c] sm:$0xf]
    %v3934 = vld [vmem:[#allocation8 + $0x30] sm:$0xf]
    %v3935 = vld [vmem:[#allocation8 + $0x34] sm:$0xf]
    %v3936 = vld [vmem:[#allocation8 + $0x38] sm:$0xf]
    %v3937 = vld [vmem:[#allocation8 + $0x3c] sm:$0xf]
    %v3938 = vld [vmem:[#allocation8 + $0x40] sm:$0xf]
    %v3939 = vld [vmem:[#allocation8 + $0x44] sm:$0xf]
    %v3940 = vld [vmem:[#allocation8 + $0x48] sm:$0xf]
    %v3941 = vld [vmem:[#allocation8 + $0x4c] sm:$0xf]
    %v3942 = vld [vmem:[#allocation8 + $0x50] sm:$0xf]
    %v3943 = vld [vmem:[#allocation8 + $0x54] sm:$0xf]
    %v3944 = vld [vmem:[#allocation8 + $0x58] sm:$0xf]
    %v3945 = vld [vmem:[#allocation8 + $0x5c] sm:$0xf]
    %v3946 = vld [vmem:[#allocation8 + $0x60] sm:$0xf]
    %v3947 = vld [vmem:[#allocation8 + $0x64] sm:$0xf]
    %v3948 = vld [vmem:[#allocation8 + $0x68] sm:$0xf]
    %v3949 = vld [vmem:[#allocation8 + $0x6c] sm:$0xf]
    %v3950 = vld [vmem:[#allocation8 + $0x70] sm:$0xf]
    %v3951 = vld [vmem:[#allocation8 + $0x74] sm:$0xf]
    %v3952 = vld [vmem:[#allocation8 + $0x78] sm:$0xf]
    %v3953 = vld [vmem:[#allocation8 + $0x7c] sm:$0xf]
    %v3954 = vld [vmem:[#allocation8 + $0x80] sm:$0xf]
    %v3955 = vld [vmem:[#allocation8 + $0x84] sm:$0xf]
    %v3956 = vld [vmem:[#allocation8 + $0x88] sm:$0xf]
    %v3957 = vld [vmem:[#allocation8 + $0x8c] sm:$0xf]
    %v3958 = vld [vmem:[#allocation8 + $0x90] sm:$0xf]
    %v3959 = vld [vmem:[#allocation8 + $0x94] sm:$0xf]
    %v3960 = vld [vmem:[#allocation8 + $0x98] sm:$0xf]
    %v3961 = vld [vmem:[#allocation8 + $0x9c] sm:$0xf]
    %v3962 = vld [vmem:[#allocation8 + $0xa0] sm:$0xf]
    %v3963 = vld [vmem:[#allocation8 + $0xa4] sm:$0xf]
    %v3964 = vld [vmem:[#allocation8 + $0xa8] sm:$0xf]
    %v3965 = vld [vmem:[#allocation8 + $0xac] sm:$0xf]
    %v3966 = vld [vmem:[#allocation8 + $0xb0] sm:$0xf]
    %v3967 = vld [vmem:[#allocation8 + $0xb4] sm:$0xf]
    %v3968 = vld [vmem:[#allocation8 + $0xb8] sm:$0xf]
    %v3969 = vld [vmem:[#allocation8 + $0xbc] sm:$0xf]
    %v3970 = vld [vmem:[#allocation8 + $0xc0] sm:$0xf]
    %v3971 = vld [vmem:[#allocation8 + $0xc4] sm:$0xf]
    %v3972 = vld [vmem:[#allocation8 + $0xc8] sm:$0xf]
    %v3973 = vld [vmem:[#allocation8 + $0xcc] sm:$0xf]
    %v3974 = vld [vmem:[#allocation8 + $0xd0] sm:$0xf]
    %v3975 = vld [vmem:[#allocation8 + $0xd4] sm:$0xf]
    %v3976 = vld [vmem:[#allocation8 + $0xd8] sm:$0xf]
    %v3977 = vld [vmem:[#allocation8 + $0xdc] sm:$0xf]
    %v3978 = vld [vmem:[#allocation8 + $0xe0] sm:$0xf]
    %v3979 = vld [vmem:[#allocation8 + $0xe4] sm:$0xf]
    %v3980 = vld [vmem:[#allocation8 + $0xe8] sm:$0xf]
    %v3981 = vld [vmem:[#allocation8 + $0xec] sm:$0xf]
    %v3982 = vld [vmem:[#allocation8 + $0xf0] sm:$0xf]
    %v3983 = vld [vmem:[#allocation8 + $0xf4] sm:$0xf]
    %v3984 = vld [vmem:[#allocation8 + $0xf8] sm:$0xf]
    %v3985 = vld [vmem:[#allocation8 + $0xfc] sm:$0xf]
    %v3986 = vld [vmem:[#allocation8 + $0x100] sm:$0xf]
    %v3987 = vld [vmem:[#allocation8 + $0x104] sm:$0xf]
    %v3988 = vld [vmem:[#allocation8 + $0x108] sm:$0xf]
    %v3989 = vld [vmem:[#allocation8 + $0x10c] sm:$0xf]
    %v3990 = vld [vmem:[#allocation8 + $0x110] sm:$0xf]
    %v3991 = vld [vmem:[#allocation8 + $0x114] sm:$0xf]
    %v3992 = vld [vmem:[#allocation8 + $0x118] sm:$0xf]
    %v3993 = vld [vmem:[#allocation8 + $0x11c] sm:$0xf]
    %v3994 = vld [vmem:[#allocation8 + $0x120] sm:$0xf]
    %v3995 = vld [vmem:[#allocation8 + $0x124] sm:$0xf]
    %v3996 = vld [vmem:[#allocation8 + $0x128] sm:$0xf]
    %v3997 = vld [vmem:[#allocation8 + $0x12c] sm:$0xf]
    %v3998 = vld [vmem:[#allocation8 + $0x130] sm:$0xf]
    %v3999 = vld [vmem:[#allocation8 + $0x134] sm:$0xf]
    %v4000 = vld [vmem:[#allocation8 + $0x138] sm:$0xf]
    %v4001 = vld [vmem:[#allocation8 + $0x13c] sm:$0xf]
    %v4002 = vld [vmem:[#allocation8 + $0x140] sm:$0xf]
    %v4003 = vld [vmem:[#allocation8 + $0x144] sm:$0xf]
    %v4004 = vld [vmem:[#allocation8 + $0x148] sm:$0xf]
    %v4005 = vld [vmem:[#allocation8 + $0x14c] sm:$0xf]
    %v4006 = vld [vmem:[#allocation8 + $0x150] sm:$0xf]
    %v4007 = vld [vmem:[#allocation8 + $0x154] sm:$0xf]
    %v4008 = vld [vmem:[#allocation8 + $0x158] sm:$0xf]
    %v4009 = vld [vmem:[#allocation8 + $0x15c] sm:$0xf]
    %v4010 = vld [vmem:[#allocation8 + $0x160] sm:$0xf]
    %v4011 = vld [vmem:[#allocation8 + $0x164] sm:$0xf]
    %v4012 = vld [vmem:[#allocation8 + $0x168] sm:$0xf]
    %v4013 = vld [vmem:[#allocation8 + $0x16c] sm:$0xf]
    %v4014 = vld [vmem:[#allocation8 + $0x170] sm:$0xf]
    %v4015 = vld [vmem:[#allocation8 + $0x174] sm:$0xf]
    %v4016 = vld [vmem:[#allocation8 + $0x178] sm:$0xf]
    %v4017 = vld [vmem:[#allocation8 + $0x17c] sm:$0xf]
    %v4018 = vld [vmem:[#allocation8 + $0x180] sm:$0xf]
    %v4019 = vld [vmem:[#allocation8 + $0x184] sm:$0xf]
    %v4020 = vld [vmem:[#allocation8 + $0x188] sm:$0xf]
    %v4021 = vld [vmem:[#allocation8 + $0x18c] sm:$0xf]
    %v4022 = vld [vmem:[#allocation8 + $0x190] sm:$0xf]
    %v4023 = vld [vmem:[#allocation8 + $0x194] sm:$0xf]
    %v4024 = vld [vmem:[#allocation8 + $0x198] sm:$0xf]
    %v4025 = vld [vmem:[#allocation8 + $0x19c] sm:$0xf]
    %v4026 = vld [vmem:[#allocation8 + $0x1a0] sm:$0xf]
    %v4027 = vld [vmem:[#allocation8 + $0x1a4] sm:$0xf]
    %v4028 = vld [vmem:[#allocation8 + $0x1a8] sm:$0xf]
    %v4029 = vld [vmem:[#allocation8 + $0x1ac] sm:$0xf]
    %v4030 = vld [vmem:[#allocation8 + $0x1b0] sm:$0xf]
    %v4031 = vld [vmem:[#allocation8 + $0x1b4] sm:$0xf]
    %v4032 = vld [vmem:[#allocation8 + $0x1b8] sm:$0xf]
    %v4033 = vld [vmem:[#allocation8 + $0x1bc] sm:$0xf]
    %v4034 = vld [vmem:[#allocation8 + $0x1c0] sm:$0xf]
    %v4035 = vld [vmem:[#allocation8 + $0x1c4] sm:$0xf]
    %v4036 = vld [vmem:[#allocation8 + $0x1c8] sm:$0xf]
    %v4037 = vld [vmem:[#allocation8 + $0x1cc] sm:$0xf]
    %v4038 = vld [vmem:[#allocation8 + $0x1d0] sm:$0xf]
    %v4039 = vld [vmem:[#allocation8 + $0x1d4] sm:$0xf]
    %v4040 = vld [vmem:[#allocation8 + $0x1d8] sm:$0xf]
    %v4041 = vld [vmem:[#allocation8 + $0x1dc] sm:$0xf]
    %v4042 = vld [vmem:[#allocation8 + $0x1e0] sm:$0xf]
    %v4043 = vld [vmem:[#allocation8 + $0x1e4] sm:$0xf]
    %v4044 = vld [vmem:[#allocation8 + $0x1e8] sm:$0xf]
    %v4045 = vld [vmem:[#allocation8 + $0x1ec] sm:$0xf]
    %v4046 = vld [vmem:[#allocation8 + $0x1f0] sm:$0xf]
    %v4047 = vld [vmem:[#allocation8 + $0x1f4] sm:$0xf]
    %v4048 = vld [vmem:[#allocation8 + $0x1f8] sm:$0xf]
    %v4049 = vld [vmem:[#allocation8 + $0x1fc] sm:$0xf]
    %v4050 = vld [vmem:[#allocation10] sm:$0x1]
    %v4052 = vlaneseq
    %v4053 = vshrl.u32 %v4052, 7
    %v4054 = vsub.s32 0, %v4053
    %v4055 = vrot.slane %v4050, %v4054
    %v4185 = vunpack.c.l.b16 %v3922
    %v4186 = vunpack.c.l.b16 %v3923
    %v4187 = vunpack.c.l.b16 %v3924
    %v4188 = vunpack.c.l.b16 %v3925
    %v4189 = vunpack.c.l.b16 %v3926
    %v4190 = vunpack.c.l.b16 %v3927
    %v4191 = vunpack.c.l.b16 %v3928
    %v4192 = vunpack.c.l.b16 %v3929
    %v4193 = vunpack.c.l.b16 %v3930
    %v4194 = vunpack.c.l.b16 %v3931
    %v4195 = vunpack.c.l.b16 %v3932
    %v4196 = vunpack.c.l.b16 %v3933
    %v4197 = vunpack.c.l.b16 %v3934
    %v4198 = vunpack.c.l.b16 %v3935
    %v4199 = vunpack.c.l.b16 %v3936
    %v4200 = vunpack.c.l.b16 %v3937
    %v4201 = vunpack.c.l.b16 %v3938
    %v4202 = vunpack.c.l.b16 %v3939
    %v4203 = vunpack.c.l.b16 %v3940
    %v4204 = vunpack.c.l.b16 %v3941
    %v4205 = vunpack.c.l.b16 %v3942
    %v4206 = vunpack.c.l.b16 %v3943
    %v4207 = vunpack.c.l.b16 %v3944
    %v4208 = vunpack.c.l.b16 %v3945
    %v4209 = vunpack.c.l.b16 %v3946
    %v4210 = vunpack.c.l.b16 %v3947
    %v4211 = vunpack.c.l.b16 %v3948
    %v4212 = vunpack.c.l.b16 %v3949
    %v4213 = vunpack.c.l.b16 %v3950
    %v4214 = vunpack.c.l.b16 %v3951
    %v4215 = vunpack.c.l.b16 %v3952
    %v4216 = vunpack.c.l.b16 %v3953
    %v4217 = vunpack.c.l.b16 %v3954
    %v4218 = vunpack.c.l.b16 %v3955
    %v4219 = vunpack.c.l.b16 %v3956
    %v4220 = vunpack.c.l.b16 %v3957
    %v4221 = vunpack.c.l.b16 %v3958
    %v4222 = vunpack.c.l.b16 %v3959
    %v4223 = vunpack.c.l.b16 %v3960
    %v4224 = vunpack.c.l.b16 %v3961
    %v4225 = vunpack.c.l.b16 %v3962
    %v4226 = vunpack.c.l.b16 %v3963
    %v4227 = vunpack.c.l.b16 %v3964
    %v4228 = vunpack.c.l.b16 %v3965
    %v4229 = vunpack.c.l.b16 %v3966
    %v4230 = vunpack.c.l.b16 %v3967
    %v4231 = vunpack.c.l.b16 %v3968
    %v4232 = vunpack.c.l.b16 %v3969
    %v4233 = vunpack.c.l.b16 %v3970
    %v4234 = vunpack.c.l.b16 %v3971
    %v4235 = vunpack.c.l.b16 %v3972
    %v4236 = vunpack.c.l.b16 %v3973
    %v4237 = vunpack.c.l.b16 %v3974
    %v4238 = vunpack.c.l.b16 %v3975
    %v4239 = vunpack.c.l.b16 %v3976
    %v4240 = vunpack.c.l.b16 %v3977
    %v4241 = vunpack.c.l.b16 %v3978
    %v4242 = vunpack.c.l.b16 %v3979
    %v4243 = vunpack.c.l.b16 %v3980
    %v4244 = vunpack.c.l.b16 %v3981
    %v4245 = vunpack.c.l.b16 %v3982
    %v4246 = vunpack.c.l.b16 %v3983
    %v4247 = vunpack.c.l.b16 %v3984
    %v4248 = vunpack.c.l.b16 %v3985
    %v4249 = vunpack.c.l.b16 %v3986
    %v4250 = vunpack.c.l.b16 %v3987
    %v4251 = vunpack.c.l.b16 %v3988
    %v4252 = vunpack.c.l.b16 %v3989
    %v4253 = vunpack.c.l.b16 %v3990
    %v4254 = vunpack.c.l.b16 %v3991
    %v4255 = vunpack.c.l.b16 %v3992
    %v4256 = vunpack.c.l.b16 %v3993
    %v4257 = vunpack.c.l.b16 %v3994
    %v4258 = vunpack.c.l.b16 %v3995
    %v4259 = vunpack.c.l.b16 %v3996
    %v4260 = vunpack.c.l.b16 %v3997
    %v4261 = vunpack.c.l.b16 %v3998
    %v4262 = vunpack.c.l.b16 %v3999
    %v4263 = vunpack.c.l.b16 %v4000
    %v4264 = vunpack.c.l.b16 %v4001
    %v4265 = vunpack.c.l.b16 %v4002
    %v4266 = vunpack.c.l.b16 %v4003
    %v4267 = vunpack.c.l.b16 %v4004
    %v4268 = vunpack.c.l.b16 %v4005
    %v4269 = vunpack.c.l.b16 %v4006
    %v4270 = vunpack.c.l.b16 %v4007
    %v4271 = vunpack.c.l.b16 %v4008
    %v4272 = vunpack.c.l.b16 %v4009
    %v4273 = vunpack.c.l.b16 %v4010
    %v4274 = vunpack.c.l.b16 %v4011
    %v4275 = vunpack.c.l.b16 %v4012
    %v4276 = vunpack.c.l.b16 %v4013
    %v4277 = vunpack.c.l.b16 %v4014
    %v4278 = vunpack.c.l.b16 %v4015
    %v4279 = vunpack.c.l.b16 %v4016
    %v4280 = vunpack.c.l.b16 %v4017
    %v4281 = vunpack.c.l.b16 %v4018
    %v4282 = vunpack.c.l.b16 %v4019
    %v4283 = vunpack.c.l.b16 %v4020
    %v4284 = vunpack.c.l.b16 %v4021
    %v4285 = vunpack.c.l.b16 %v4022
    %v4286 = vunpack.c.l.b16 %v4023
    %v4287 = vunpack.c.l.b16 %v4024
    %v4288 = vunpack.c.l.b16 %v4025
    %v4289 = vunpack.c.l.b16 %v4026
    %v4290 = vunpack.c.l.b16 %v4027
    %v4291 = vunpack.c.l.b16 %v4028
    %v4292 = vunpack.c.l.b16 %v4029
    %v4293 = vunpack.c.l.b16 %v4030
    %v4294 = vunpack.c.l.b16 %v4031
    %v4295 = vunpack.c.l.b16 %v4032
    %v4296 = vunpack.c.l.b16 %v4033
    %v4297 = vunpack.c.l.b16 %v4034
    %v4298 = vunpack.c.l.b16 %v4035
    %v4299 = vunpack.c.l.b16 %v4036
    %v4300 = vunpack.c.l.b16 %v4037
    %v4301 = vunpack.c.l.b16 %v4038
    %v4302 = vunpack.c.l.b16 %v4039
    %v4303 = vunpack.c.l.b16 %v4040
    %v4304 = vunpack.c.l.b16 %v4041
    %v4305 = vunpack.c.l.b16 %v4042
    %v4306 = vunpack.c.l.b16 %v4043
    %v4307 = vunpack.c.l.b16 %v4044
    %v4308 = vunpack.c.l.b16 %v4045
    %v4309 = vunpack.c.l.b16 %v4046
    %v4310 = vunpack.c.l.b16 %v4047
    %v4311 = vunpack.c.l.b16 %v4048
    %v4312 = vunpack.c.l.b16 %v4049
    %v4313 = vpack.c.b16 %v4186, %v4185
    %v4314 = vpack.c.b16 %v4188, %v4187
    %v4315 = vpack.c.b16 %v4190, %v4189
    %v4316 = vpack.c.b16 %v4192, %v4191
    %v4317 = vpack.c.b16 %v4194, %v4193
    %v4318 = vpack.c.b16 %v4196, %v4195
    %v4319 = vpack.c.b16 %v4198, %v4197
    %v4320 = vpack.c.b16 %v4200, %v4199
    %v4321 = vpack.c.b16 %v4202, %v4201
    %v4322 = vpack.c.b16 %v4204, %v4203
    %v4323 = vpack.c.b16 %v4206, %v4205
    %v4324 = vpack.c.b16 %v4208, %v4207
    %v4325 = vpack.c.b16 %v4210, %v4209
    %v4326 = vpack.c.b16 %v4212, %v4211
    %v4327 = vpack.c.b16 %v4214, %v4213
    %v4328 = vpack.c.b16 %v4216, %v4215
    %v4329 = vpack.c.b16 %v4218, %v4217
    %v4330 = vpack.c.b16 %v4220, %v4219
    %v4331 = vpack.c.b16 %v4222, %v4221
    %v4332 = vpack.c.b16 %v4224, %v4223
    %v4333 = vpack.c.b16 %v4226, %v4225
    %v4334 = vpack.c.b16 %v4228, %v4227
    %v4335 = vpack.c.b16 %v4230, %v4229
    %v4336 = vpack.c.b16 %v4232, %v4231
    %v4337 = vpack.c.b16 %v4234, %v4233
    %v4338 = vpack.c.b16 %v4236, %v4235
    %v4339 = vpack.c.b16 %v4238, %v4237
    %v4340 = vpack.c.b16 %v4240, %v4239
    %v4341 = vpack.c.b16 %v4242, %v4241
    %v4342 = vpack.c.b16 %v4244, %v4243
    %v4343 = vpack.c.b16 %v4246, %v4245
    %v4344 = vpack.c.b16 %v4248, %v4247
    %v4345 = vpack.c.b16 %v4250, %v4249
    %v4346 = vpack.c.b16 %v4252, %v4251
    %v4347 = vpack.c.b16 %v4254, %v4253
    %v4348 = vpack.c.b16 %v4256, %v4255
    %v4349 = vpack.c.b16 %v4258, %v4257
    %v4350 = vpack.c.b16 %v4260, %v4259
    %v4351 = vpack.c.b16 %v4262, %v4261
    %v4352 = vpack.c.b16 %v4264, %v4263
    %v4353 = vpack.c.b16 %v4266, %v4265
    %v4354 = vpack.c.b16 %v4268, %v4267
    %v4355 = vpack.c.b16 %v4270, %v4269
    %v4356 = vpack.c.b16 %v4272, %v4271
    %v4357 = vpack.c.b16 %v4274, %v4273
    %v4358 = vpack.c.b16 %v4276, %v4275
    %v4359 = vpack.c.b16 %v4278, %v4277
    %v4360 = vpack.c.b16 %v4280, %v4279
    %v4361 = vpack.c.b16 %v4282, %v4281
    %v4362 = vpack.c.b16 %v4284, %v4283
    %v4363 = vpack.c.b16 %v4286, %v4285
    %v4364 = vpack.c.b16 %v4288, %v4287
    %v4365 = vpack.c.b16 %v4290, %v4289
    %v4366 = vpack.c.b16 %v4292, %v4291
    %v4367 = vpack.c.b16 %v4294, %v4293
    %v4368 = vpack.c.b16 %v4296, %v4295
    %v4369 = vpack.c.b16 %v4298, %v4297
    %v4370 = vpack.c.b16 %v4300, %v4299
    %v4371 = vpack.c.b16 %v4302, %v4301
    %v4372 = vpack.c.b16 %v4304, %v4303
    %v4373 = vpack.c.b16 %v4306, %v4305
    %v4374 = vpack.c.b16 %v4308, %v4307
    %v4375 = vpack.c.b16 %v4310, %v4309
    %v4376 = vpack.c.b16 %v4312, %v4311
    %4441 = vmatprep.subr.bf16.mxu0 0
    %4442 = vmatpush1.bf16.msra.mxu0 %v4313
    %4443 = vmatprep.subr.bf16.mxu0 0
    %4444 = vmatpush1.bf16.msra.mxu0 %v4314
    %4445 = vmatprep.subr.bf16.mxu0 0
    %4446 = vmatpush1.bf16.msra.mxu0 %v4315
    %4447 = vmatprep.subr.bf16.mxu0 0
    %4448 = vmatpush1.bf16.msra.mxu0 %v4316
    %4449 = vmatprep.subr.bf16.mxu0 0
    %4450 = vmatpush1.bf16.msra.mxu0 %v4317
    %4451 = vmatprep.subr.bf16.mxu0 0
    %4452 = vmatpush1.bf16.msra.mxu0 %v4318
    %4453 = vmatprep.subr.bf16.mxu0 0
    %4454 = vmatpush1.bf16.msra.mxu0 %v4319
    %4455 = vmatprep.subr.bf16.mxu0 0
    %4456 = vmatpush1.bf16.msra.mxu0 %v4320
    %4457 = vmatprep.subr.bf16.mxu0 0
    %4458 = vmatpush1.bf16.msra.mxu0 %v4321
    %4459 = vmatprep.subr.bf16.mxu0 0
    %4460 = vmatpush1.bf16.msra.mxu0 %v4322
    %4461 = vmatprep.subr.bf16.mxu0 0
    %4462 = vmatpush1.bf16.msra.mxu0 %v4323
    %4463 = vmatprep.subr.bf16.mxu0 0
    %4464 = vmatpush1.bf16.msra.mxu0 %v4324
    %4465 = vmatprep.subr.bf16.mxu0 0
    %4466 = vmatpush1.bf16.msra.mxu0 %v4325
    %4467 = vmatprep.subr.bf16.mxu0 0
    %4468 = vmatpush1.bf16.msra.mxu0 %v4326
    %4469 = vmatprep.subr.bf16.mxu0 0
    %4470 = vmatpush1.bf16.msra.mxu0 %v4327
    %4471 = vmatprep.subr.bf16.mxu0 0
    %4472 = vmatpush1.bf16.msra.mxu0 %v4328
    %4473 = vmatprep.mubr.bf16.mxu0 %v3915
    %4474 = vmatmul.mubr.bf16.gmra.mrb[0].mxu0 %v3914
    %v4475 = vpop.f32.mrb[0].mxu0
    %v4476 = vadd.f32 %v4055, %v4475
    %v4477 = vpop.f32.mrb[0].mxu0
    %v4478 = vpop.f32.mrb[0].mxu0
    %v4479 = vadd.f32 %v4055, %v4478
    %v4480 = vpop.f32.mrb[0].mxu0
    %4481 = vdwg.mxu0
    %4482 = vmatprep.subr.bf16.mxu0 0
    %4483 = vmatpush1.bf16.msra.mxu0 %v4329
    %4484 = vmatprep.subr.bf16.mxu0 0
    %4485 = vmatpush1.bf16.msra.mxu0 %v4330
    %4486 = vmatprep.subr.bf16.mxu0 0
    %4487 = vmatpush1.bf16.msra.mxu0 %v4331
    %4488 = vmatprep.subr.bf16.mxu0 0
    %4489 = vmatpush1.bf16.msra.mxu0 %v4332
    %4490 = vmatprep.subr.bf16.mxu0 0
    %4491 = vmatpush1.bf16.msra.mxu0 %v4333
    %4492 = vmatprep.subr.bf16.mxu0 0
    %4493 = vmatpush1.bf16.msra.mxu0 %v4334
    %4494 = vmatprep.subr.bf16.mxu0 0
    %4495 = vmatpush1.bf16.msra.mxu0 %v4335
    %4496 = vmatprep.subr.bf16.mxu0 0
    %4497 = vmatpush1.bf16.msra.mxu0 %v4336
    %4498 = vmatprep.subr.bf16.mxu0 0
    %4499 = vmatpush1.bf16.msra.mxu0 %v4337
    %4500 = vmatprep.subr.bf16.mxu0 0
    %4501 = vmatpush1.bf16.msra.mxu0 %v4338
    %4502 = vmatprep.subr.bf16.mxu0 0
    %4503 = vmatpush1.bf16.msra.mxu0 %v4339
    %4504 = vmatprep.subr.bf16.mxu0 0
    %4505 = vmatpush1.bf16.msra.mxu0 %v4340
    %4506 = vmatprep.subr.bf16.mxu0 0
    %4507 = vmatpush1.bf16.msra.mxu0 %v4341
    %4508 = vmatprep.subr.bf16.mxu0 0
    %4509 = vmatpush1.bf16.msra.mxu0 %v4342
    %4510 = vmatprep.subr.bf16.mxu0 0
    %4511 = vmatpush1.bf16.msra.mxu0 %v4343
    %4512 = vmatprep.subr.bf16.mxu0 0
    %4513 = vmatpush1.bf16.msra.mxu0 %v4344
    %4514 = vmatprep.mubr.bf16.mxu0 %v3917
    %4515 = vmatmul.mubr.bf16.gmra.mrb[0].mxu0 %v3916
    %v4516 = vpop.f32.mrb[0].mxu0
    %v4517 = vadd.f32 %v4476, %v4516
    %v4518 = vpop.f32.mrb[0].mxu0
    %v4519 = vpop.f32.mrb[0].mxu0
    %v4520 = vadd.f32 %v4479, %v4519
    %v4521 = vpop.f32.mrb[0].mxu0
    %4522 = vdwg.mxu0
    %4523 = vmatprep.subr.bf16.mxu0 0
    %4524 = vmatpush1.bf16.msra.mxu0 %v4345
    %4525 = vmatprep.subr.bf16.mxu0 0
    %4526 = vmatpush1.bf16.msra.mxu0 %v4346
    %4527 = vmatprep.subr.bf16.mxu0 0
    %4528 = vmatpush1.bf16.msra.mxu0 %v4347
    %4529 = vmatprep.subr.bf16.mxu0 0
    %4530 = vmatpush1.bf16.msra.mxu0 %v4348
    %4531 = vmatprep.subr.bf16.mxu0 0
    %4532 = vmatpush1.bf16.msra.mxu0 %v4349
    %4533 = vmatprep.subr.bf16.mxu0 0
    %4534 = vmatpush1.bf16.msra.mxu0 %v4350
    %4535 = vmatprep.subr.bf16.mxu0 0
    %4536 = vmatpush1.bf16.msra.mxu0 %v4351
    %4537 = vmatprep.subr.bf16.mxu0 0
    %4538 = vmatpush1.bf16.msra.mxu0 %v4352
    %4539 = vmatprep.subr.bf16.mxu0 0
    %4540 = vmatpush1.bf16.msra.mxu0 %v4353
    %4541 = vmatprep.subr.bf16.mxu0 0
    %4542 = vmatpush1.bf16.msra.mxu0 %v4354
    %4543 = vmatprep.subr.bf16.mxu0 0
    %4544 = vmatpush1.bf16.msra.mxu0 %v4355
    %4545 = vmatprep.subr.bf16.mxu0 0
    %4546 = vmatpush1.bf16.msra.mxu0 %v4356
    %4547 = vmatprep.subr.bf16.mxu0 0
    %4548 = vmatpush1.bf16.msra.mxu0 %v4357
    %4549 = vmatprep.subr.bf16.mxu0 0
    %4550 = vmatpush1.bf16.msra.mxu0 %v4358
    %4551 = vmatprep.subr.bf16.mxu0 0
    %4552 = vmatpush1.bf16.msra.mxu0 %v4359
    %4553 = vmatprep.subr.bf16.mxu0 0
    %4554 = vmatpush1.bf16.msra.mxu0 %v4360
    %4555 = vmatprep.mubr.bf16.mxu0 %v3919
    %4556 = vmatmul.mubr.bf16.gmra.mrb[0].mxu0 %v3918
    %v4557 = vpop.f32.mrb[0].mxu0
    %v4558 = vadd.f32 %v4517, %v4557
    %v4559 = vpop.f32.mrb[0].mxu0
    %v4560 = vpop.f32.mrb[0].mxu0
    %v4561 = vadd.f32 %v4520, %v4560
    %v4562 = vpop.f32.mrb[0].mxu0
    %4563 = vdwg.mxu0
    %4564 = vmatprep.subr.bf16.mxu0 0
    %4565 = vmatpush1.bf16.msra.mxu0 %v4361
    %4566 = vmatprep.subr.bf16.mxu0 0
    %4567 = vmatpush1.bf16.msra.mxu0 %v4362
    %4568 = vmatprep.subr.bf16.mxu0 0
    %4569 = vmatpush1.bf16.msra.mxu0 %v4363
    %4570 = vmatprep.subr.bf16.mxu0 0
    %4571 = vmatpush1.bf16.msra.mxu0 %v4364
    %4572 = vmatprep.subr.bf16.mxu0 0
    %4573 = vmatpush1.bf16.msra.mxu0 %v4365
    %4574 = vmatprep.subr.bf16.mxu0 0
    %4575 = vmatpush1.bf16.msra.mxu0 %v4366
    %4576 = vmatprep.subr.bf16.mxu0 0
    %4577 = vmatpush1.bf16.msra.mxu0 %v4367
    %4578 = vmatprep.subr.bf16.mxu0 0
    %4579 = vmatpush1.bf16.msra.mxu0 %v4368
    %4580 = vmatprep.subr.bf16.mxu0 0
    %4581 = vmatpush1.bf16.msra.mxu0 %v4369
    %4582 = vmatprep.subr.bf16.mxu0 0
    %4583 = vmatpush1.bf16.msra.mxu0 %v4370
    %4584 = vmatprep.subr.bf16.mxu0 0
    %4585 = vmatpush1.bf16.msra.mxu0 %v4371
    %4586 = vmatprep.subr.bf16.mxu0 0
    %4587 = vmatpush1.bf16.msra.mxu0 %v4372
    %4588 = vmatprep.subr.bf16.mxu0 0
    %4589 = vmatpush1.bf16.msra.mxu0 %v4373
    %4590 = vmatprep.subr.bf16.mxu0 0
    %4591 = vmatpush1.bf16.msra.mxu0 %v4374
    %4592 = vmatprep.subr.bf16.mxu0 0
    %4593 = vmatpush1.bf16.msra.mxu0 %v4375
    %4594 = vmatprep.subr.bf16.mxu0 0
    %4595 = vmatpush1.bf16.msra.mxu0 %v4376
    %4596 = vmatprep.mubr.bf16.mxu0 %v3921
    %4597 = vmatmul.mubr.bf16.gmra.mrb[0].mxu0 %v3920
    %v4598 = vpop.f32.mrb[0].mxu0
    %v4599 = vadd.f32 %v4558, %v4598
    %v4600 = vpop.f32.mrb[0].mxu0
    %v4601 = vpop.f32.mrb[0].mxu0
    %v4602 = vadd.f32 %v4561, %v4601
    %v4603 = vpop.f32.mrb[0].mxu0
    %4604 = vdwg.mxu0
    %4605 = vmatprep.subr.mxu0 0.0
    %4606 = vmatpush1.msra.mxu0 %v4599
    %4607 = vmatprep.subr.mxu0 0.0
    %4608 = vmatpush1.msra.mxu0 %v4602
    %4609 = vmatprep.subr.mxu0 0.0
    %4610 = vmatpush1.msra.mxu0 0.0
    %4611 = vmatprep.subr.mxu0 0.0
    %4612 = vmatpush1.msra.mxu0 0.0
    %4613 = vmatprep.subr.mxu0 0.0
    %4614 = vmatpush1.msra.mxu0 0.0
    %4615 = vmatprep.subr.mxu0 0.0
    %4616 = vmatpush1.msra.mxu0 0.0
    %4617 = vmatprep.subr.mxu0 0.0
    %4618 = vmatpush1.msra.mxu0 0.0
    %4619 = vmatprep.subr.mxu0 0.0
    %4620 = vmatpush1.msra.mxu0 0.0
    %4621 = vmatprep.subr.mxu0 0.0
    %4622 = vmatpush1.msra.mxu0 0.0
    %4623 = vmatprep.subr.mxu0 0.0
    %4624 = vmatpush1.msra.mxu0 0.0
    %4625 = vmatprep.subr.mxu0 0.0
    %4626 = vmatpush1.msra.mxu0 0.0
    %4627 = vmatprep.subr.mxu0 0.0
    %4628 = vmatpush1.msra.mxu0 0.0
    %4629 = vmatprep.subr.mxu0 0.0
    %4630 = vmatpush1.msra.mxu0 0.0
    %4631 = vmatprep.subr.mxu0 0.0
    %4632 = vmatpush1.msra.mxu0 0.0
    %4633 = vmatprep.subr.mxu0 0.0
    %4634 = vmatpush1.msra.mxu0 0.0
    %4635 = vmatprep.subr.mxu0 0.0
    %4636 = vmatpush1.msra.mxu0 0.0
    %4637 = vmatprep.subr.mxu0 0.0
    %4638 = vmatpush1.msra.mxu0 0.0
    %4639 = vmatprep.subr.mxu0 0.0
    %4640 = vmatpush1.msra.mxu0 0.0
    %4641 = vmatprep.subr.mxu0 0.0
    %4642 = vmatpush1.msra.mxu0 0.0
    %4643 = vmatprep.subr.mxu0 0.0
    %4644 = vmatpush1.msra.mxu0 0.0
    %4645 = vmatprep.subr.mxu0 0.0
    %4646 = vmatpush1.msra.mxu0 0.0
    %4647 = vmatprep.subr.mxu0 0.0
    %4648 = vmatpush1.msra.mxu0 0.0
    %4649 = vmatprep.subr.mxu0 0.0
    %4650 = vmatpush1.msra.mxu0 0.0
    %4651 = vmatprep.subr.mxu0 0.0
    %4652 = vmatpush1.msra.mxu0 0.0
    %4653 = vmatprep.subr.mxu0 0.0
    %4654 = vmatpush1.msra.mxu0 0.0
    %4655 = vmatprep.subr.mxu0 0.0
    %4656 = vmatpush1.msra.mxu0 0.0
    %4657 = vmatprep.subr.mxu0 0.0
    %4658 = vmatpush1.msra.mxu0 0.0
    %4659 = vmatprep.subr.mxu0 0.0
    %4660 = vmatpush1.msra.mxu0 0.0
    %4661 = vmatprep.subr.mxu0 0.0
    %4662 = vmatpush1.msra.mxu0 0.0
    %4663 = vmatprep.subr.mxu0 0.0
    %4664 = vmatpush1.msra.mxu0 0.0
    %4665 = vmatprep.subr.mxu0 0.0
    %4666 = vmatpush1.msra.mxu0 0.0
    %4667 = vmatprep.subr.mxu0 0.0
    %4668 = vmatpush1.msra.mxu0 0.0
    %4669 = vmatprep.mubr.f32.mxu0 0.0
    %4670 = vmatmul.mubr.f32.gmra.mrb[0].mxu0 %v3585
    %v4671 = vpop.f32.mrb[0].mxu0
    %v4672 = vadd.f32 0.0, %v4671
    %v4673 = vpop.f32.mrb[0].mxu0
    %4674 = vmatprep.mubr.f32.mxu0 0.0
    %4675 = vmatmul.mubr.f32.gmra.mrb[0].mxu0 %v3588
    %v4676 = vpop.f32.mrb[0].mxu0
    %v4677 = vadd.f32 0.0, %v4676
    %v4678 = vpop.f32.mrb[0].mxu0
    %4679 = vdwg.mxu0
    %4680 = vst [vmem:[#allocation11] sm:$0xff] %v4672
    %4681 = vst [vmem:[#allocation11 + $0x8] sm:$0xff] %v4677
    // Predicated region
    $region42: #{tpu_custom_call.1} parent=1 // pred_check
      _
    $region43: #{tpu_custom_call.1} parent=1 // pred_check_branch
      %4683 = sbr.rel (0) target = $region45
    $region44: #{tpu_custom_call.1} parent=1 // pred_region
      %s4685 = ssub.s32 256, 256
      %4686 = vsyncadd [#allocation4], %s4685
      %s4687 = sshll.u32 [#allocation11], 4
      %s4688 = int_to_ptr.vmem [resolvable:$true] %s4687
      %4693 = dma.vmem_to_hbm [thread:$0]  %s4688, 256, %s5, [#allocation4], 128, 128, 8
    $region45: #{tpu_custom_call.1} parent=1 // pred_fallthru
      _
    // Predicated region
    $region46: #{tpu_custom_call.1} parent=1 // pred_check
      _
    $region47: #{tpu_custom_call.1} parent=1 // pred_check_branch
      %4695 = sbr.rel (0) target = $region49
    $region48: #{tpu_custom_call.1} parent=1 // pred_region
      %s4697 = ssub.s32 1536, 1536
      %4698 = vsyncadd [#allocation13], %s4697
      %s4699 = sshll.u32 [#allocation12], 4
      %s4700 = int_to_ptr.vmem [resolvable:$true] %s4699
      %4705 = dma.vmem_to_hbm [thread:$0]  %s4700, 1536, %s6, [#allocation13], 768, 768, 48
    $region49: #{tpu_custom_call.1} parent=1 // pred_fallthru
      _
    // Predicated region
    $region50: #{tpu_custom_call.1} parent=1 // pred_check
      _
    $region51: #{tpu_custom_call.1} parent=1 // pred_check_branch
      %4707 = sbr.rel (0) target = $region53
    $region52: #{tpu_custom_call.1} parent=1 // pred_region
      %4708 = dma.done [#allocation4], 256
    $region53: #{tpu_custom_call.1} parent=1 // pred_fallthru
      _
    // Predicated region
    $region54: #{tpu_custom_call.1} parent=1 // pred_check
      _
    $region55: #{tpu_custom_call.1} parent=1 // pred_check_branch
      %4710 = sbr.rel (0) target = $region57
    $region56: #{tpu_custom_call.1} parent=1 // pred_region
      %4711 = dma.done [#allocation13], 1536
    $region57: #{tpu_custom_call.1} parent=1 // pred_fallthru
      _
    %4712 = vsyncpa [#allocation3], 1
    %4713 = vsyncpa [#allocation6], 1
    %4714 = vsyncpa [#allocation9], 1
    %4715 = vsyncpa [#allocation4], 1
    %4716 = vsyncpa [#allocation13], 1

</llo_original>
